<compile_context>
chip_gen: v6e
topology: v6e:2x2x1
jax: 0.10.0
libtpu: 0.0.40
codegen_flags: <defaults>
</compile_context>

<pallas_src>
import functools
import math

import jax
import jax.numpy as jnp
from jax import lax
from jax.experimental import pallas as pl
from jax.experimental.pallas import tpu as pltpu


def _attention_kernel(x_ref, wqkv_ref, wo_ref, bo_ref, o_ref, qkv_sc, out_sc,
                      *, heads, dim_head, exp_bf16):
    hidden = heads * dim_head
    n = qkv_sc.shape[-1]

    # Fused QKV projection for all heads in one bf16 MXU pass (f32 acc):
    #   (3*hidden, C) @ (C, N) -> (3*hidden, N), stored once as bf16 so every
    # downstream MXU pass is native bf16.  (scale * log2(e) pre-folded into Q.)
    qkv = jnp.dot(wqkv_ref[...], x_ref[0], preferred_element_type=jnp.float32)
    qkv_sc[...] = qkv.astype(jnp.bfloat16)

    # Hoisted constant for the key-sum matmul (don't recreate per head).
    ones_row = jnp.ones((1, n), jnp.bfloat16)

    def head_body(h, carry):
        q0 = pl.multiple_of(h * dim_head, dim_head)
        k0 = pl.multiple_of(h * dim_head + hidden, dim_head)
        v0 = pl.multiple_of(h * dim_head + 2 * hidden, dim_head)
        q = qkv_sc[pl.ds(q0, dim_head), :]           # (Dh, N) bf16, scale folded
        k = qkv_sc[pl.ds(k0, dim_head), :]           # (Dh, N) bf16
        v = qkv_sc[pl.ds(v0, dim_head), :]           # (Dh, N) bf16

        # sim_T[j, i] = sum_d k[d, j] * q[d, i]  ->  (N_keys, N_queries).
        # Both operands contract on dim 0: MXU consumes the transposed LHS
        # natively, no materialized transpose; reductions go over sublanes.
        sim_t = lax.dot_general(
            k, q, dimension_numbers=(((0,), (0,)), ((), ())),
            preferred_element_type=jnp.float32)       # (N, N) f32

        m = jnp.max(sim_t, axis=0, keepdims=True)     # (1, N) f32
        z = sim_t - m
        if exp_bf16:                                  # bf16 EUP/VPU (v6e / v7x)
            z = z.astype(jnp.bfloat16)
        p = jnp.exp2(z).astype(jnp.bfloat16)          # exp2: ln2 folded into Q

        # Softmax denominator as a tiny bf16 MXU pass with f32 accumulation
        # (same rounded p as the numerator -> self-consistent normalization).
        l = jnp.dot(ones_row, p, preferred_element_type=jnp.float32)  # (1, N)

        # Unnormalized AV, then deferred normalization on the small (Dh, N)
        # result instead of the (N, N) matrix; exact reciprocal (off hot path).
        out_h = jnp.dot(v, p, preferred_element_type=jnp.float32)     # (Dh, N)
        out_h = out_h * pl.reciprocal(l)
        out_sc[pl.ds(q0, dim_head), :] = out_h.astype(jnp.bfloat16)
        return carry

    # Fully-unrolled fori_loop: bounds each head's (N, N) temporaries' live
    # range while keeping LLO scheduler visibility.
    lax.fori_loop(0, heads, head_body, 0, unroll=True)

    # Fused output projection + bias, one full-K=hidden bf16 MXU pass; single
    # lane-dense store of the (C, N) block.
    out_cn = jnp.dot(wo_ref[...], out_sc[...], preferred_element_type=jnp.float32)
    o_ref[0] = (out_cn + bo_ref[...]).astype(o_ref.dtype)


def attention_pallas(x_nchw, w_qkv, w_out, b_out, *, heads, dim_head):
    """x_nchw: (B, C, H, W); w_qkv: (3*hidden, C); w_out: (C, hidden); b_out: (C,)."""
    b, c, h, w = x_nchw.shape
    hidden = heads * dim_head
    n = h * w
    # Lane-dense layout assumption (no padded-lane masking in the kernel).
    assert n % 128 == 0, f"H*W={n} must be a multiple of 128"

    # Fold the softmax scale AND log2(e) (for exp2) into the Q rows of the
    # fused QKV weight, then cast all matmul operands to bf16 (accumulation
    # stays f32 inside the kernel).
    scale = dim_head ** (-0.5) * 1.4426950408889634   # 1/sqrt(Dh) * log2(e)
    wqkv_scaled = jnp.concatenate([w_qkv[:hidden] * scale, w_qkv[hidden:]],
                                  axis=0).astype(jnp.bfloat16)      # (3*hidden, C)
    wo_bf16 = w_out.astype(jnp.bfloat16)                             # (C, hidden)
    bo = b_out.reshape(c, 1)                                         # f32 bias

    # NCHW is already channel-major over tokens: (B, C, H, W) -> (B, C, N).
    x_cn = x_nchw.reshape(b, c, n).astype(jnp.bfloat16)

    # bf16 exp/subtract only where VPU/EUP have a bf16 path (v6e / v7x); keep
    # the softmax elementwise path f32 on <= v5.
    kind = jax.devices()[0].device_kind.lower()
    exp_bf16 = not any(g in kind for g in ("v2", "v3", "v4", "v5"))

    kernel = functools.partial(_attention_kernel, heads=heads, dim_head=dim_head,
                               exp_bf16=exp_bf16)

    out_cn = pl.pallas_call(
        kernel,
        out_shape=jax.ShapeDtypeStruct((b, c, n), jnp.float32),
        grid_spec=pltpu.PrefetchScalarGridSpec(
            num_scalar_prefetch=0,
            grid=(b,),
            in_specs=[
                pl.BlockSpec((1, c, n), lambda bi: (bi, 0, 0)),        # x tokens (C, N)
                pl.BlockSpec((3 * hidden, c), lambda bi: (0, 0)),      # fused QKV weight
                pl.BlockSpec((c, hidden), lambda bi: (0, 0)),          # output-proj weight
                pl.BlockSpec((c, 1), lambda bi: (0, 0)),               # output-proj bias
            ],
            out_specs=pl.BlockSpec((1, c, n), lambda bi: (bi, 0, 0)),  # (C, N) written once
            scratch_shapes=[
                pltpu.VMEM((3 * hidden, n), jnp.bfloat16),             # fused qkv rows
                pltpu.VMEM((hidden, n), jnp.bfloat16),                 # per-head out rows
            ],
        ),
        compiler_params=pltpu.CompilerParams(
            dimension_semantics=("parallel",),
            vmem_limit_bytes=32 * 1024 * 1024),
    )(x_cn, wqkv_scaled, wo_bf16, bo)

    return out_cn.reshape(b, c, h, w)


def attention_reference(x, w_qkv, w_out, b_out, *, heads, dim_head):
    """Pure-JAX f32 reference mirroring the PyTorch forward."""
    b, c, h, w = x.shape
    hidden = heads * dim_head
    qkv = jnp.einsum('bchw,oc->bohw', x, w_qkv)
    q, k, v = jnp.split(qkv, 3, axis=1)
    rearr = lambda t: t.reshape(b, heads, dim_head, h * w)
    q, k, v = map(rearr, (q, k, v))
    q = q * dim_head ** (-0.5)
    sim = jnp.einsum('bhdi,bhdj->bhij', q, k)
    attn = jax.nn.softmax(sim, axis=-1)
    out = jnp.einsum('bhij,bhdj->bhid', attn, v)
    out = jnp.transpose(out, (0, 1, 3, 2)).reshape(b, hidden, h, w)
    return jnp.einsum('bchw,oc->bohw', out, w_out) + b_out[None, :, None, None]


if __name__ == "__main__":
    # Module config
    dim = 4
    heads = 4
    dim_head = 32
    hidden = heads * dim_head

    # Small input: (batch, channels, H, W) NCHW, as in PyTorch
    B, H, W = 2, 16, 16

    key = jax.random.PRNGKey(0)
    kx, kqkv, kwo, kbo = jax.random.split(key, 4)

    x = jax.random.normal(kx, (B, dim, H, W), dtype=jnp.float32)

    # Deterministic synthetic parameters (Conv2d 1x1 weights squeezed to 2D).
    fan_qkv = dim
    fan_out = hidden
    w_qkv = jax.random.uniform(kqkv, (3 * hidden, dim), jnp.float32,
                               -1.0 / math.sqrt(fan_qkv), 1.0 / math.sqrt(fan_qkv))
    w_out = jax.random.uniform(kwo, (dim, hidden), jnp.float32,
                               -1.0 / math.sqrt(fan_out), 1.0 / math.sqrt(fan_out))
    b_out = jax.random.uniform(kbo, (dim,), jnp.float32,
                               -1.0 / math.sqrt(fan_out), 1.0 / math.sqrt(fan_out))

    out = attention_pallas(x, w_qkv, w_out, b_out, heads=heads, dim_head=dim_head)
    out = jax.block_until_ready(out)

    ref = attention_reference(x, w_qkv, w_out, b_out, heads=heads, dim_head=dim_head)
    assert out.shape == (B, dim, H, W)
    # Tolerance reflects end-to-end bf16 MXU passes (f32 accumulation) and the
    # bf16 exp path on v6e/v7x.
    assert jnp.allclose(out, ref, atol=5e-3, rtol=3e-2), (
        f"max abs err = {jnp.max(jnp.abs(out - ref))}")

    print("KERNEL_OK")
</pallas_src>

<mosaic_0001>
module attributes {stable_mosaic.version = 11 : i64} {
  func.func @_attention_kernel(%arg0: i32, %arg1: memref<1x4x256xbf16, #tpu.memory_space<vmem>>, %arg2: memref<384x4xbf16, #tpu.memory_space<vmem>>, %arg3: memref<4x128xbf16, #tpu.memory_space<vmem>>, %arg4: memref<4x1xf32, #tpu.memory_space<vmem>>, %arg5: memref<1x4x256xf32, #tpu.memory_space<vmem>>, %arg6: memref<384x256xbf16, #tpu.memory_space<vmem>>, %arg7: memref<128x256xbf16, #tpu.memory_space<vmem>>) attributes {dimension_semantics = [#tpu.dimension_semantics<parallel>], iteration_bounds = array<i64: 2>, scalar_prefetch = 0 : i64, scratch_operands = 2 : i64, tpu.core_type = #tpu.core_type<tc>, window_params = [{transform_indices = @transform_0, window_bounds = array<i64: 1, 4, 256>}, {pipeline_mode = #tpu.pipeline_mode<synchronous>, transform_indices = @transform_1, window_bounds = array<i64: 384, 4>}, {pipeline_mode = #tpu.pipeline_mode<synchronous>, transform_indices = @transform_2, window_bounds = array<i64: 4, 128>}, {pipeline_mode = #tpu.pipeline_mode<synchronous>, transform_indices = @transform_3, window_bounds = array<i64: 4, 1>}, {transform_indices = @transform_4, window_bounds = array<i64: 1, 4, 256>}]} {
    %c0 = arith.constant 0 : index
    %c0_0 = arith.constant 0 : index
    %0 = vector.load %arg2[%c0, %c0_0] : memref<384x4xbf16, #tpu.memory_space<vmem>>, vector<384x4xbf16>
    %c0_1 = arith.constant 0 : index
    %c0_2 = arith.constant 0 : index
    %c0_3 = arith.constant 0 : index
    %1 = vector.load %arg1[%c0_1, %c0_2, %c0_3] : memref<1x4x256xbf16, #tpu.memory_space<vmem>>, vector<1x4x256xbf16>
    %2 = vector.shape_cast %1 : vector<1x4x256xbf16> to vector<4x256xbf16>
    %cst = arith.constant dense<0.000000e+00> : vector<384x256xf32>
    %3 = tpu.matmul %0, %2, %cst {dimension_numbers = #tpu.dot_dimension_numbers<[1], [0], [0], [1], [0, 0, 1, 1], [], []>} : vector<384x4xbf16>, vector<4x256xbf16>, vector<384x256xf32> -> vector<384x256xf32>
    %4 = arith.truncf %3 : vector<384x256xf32> to vector<384x256xbf16>
    %c0_4 = arith.constant 0 : index
    %c0_5 = arith.constant 0 : index
    %5 = vector.load %arg6[%c0_4, %c0_5] : memref<384x256xbf16, #tpu.memory_space<vmem>>, vector<384x256xbf16>
    tpu.vector_store %arg6[%c0_4, %c0_5], %4 {strides = array<i32>} : memref<384x256xbf16, #tpu.memory_space<vmem>>, vector<384x256xbf16>,
    %cst_6 = arith.constant 1.000000e+00 : bf16
    %6 = vector.broadcast %cst_6 : bf16 to vector<1x256xbf16>
    %c0_i32 = arith.constant 0 : i32
    %c32_i32 = arith.constant 32 : i32
    %7 = arith.muli %c0_i32, %c32_i32 : i32
    %8 = tpu.assume_multiple %7, 32 : i32
    %c32_i32_7 = arith.constant 32 : i32
    %9 = arith.muli %c0_i32, %c32_i32_7 : i32
    %c128_i32 = arith.constant 128 : i32
    %10 = arith.addi %9, %c128_i32 : i32
    %11 = tpu.assume_multiple %10, 32 : i32
    %c32_i32_8 = arith.constant 32 : i32
    %12 = arith.muli %c0_i32, %c32_i32_8 : i32
    %c256_i32 = arith.constant 256 : i32
    %13 = arith.addi %12, %c256_i32 : i32
    %14 = tpu.assume_multiple %13, 32 : i32
    %15 = arith.index_cast %8 : i32 to index
    %c0_9 = arith.constant 0 : index
    %16 = vector.load %arg6[%15, %c0_9] : memref<384x256xbf16, #tpu.memory_space<vmem>>, vector<32x256xbf16>
    %17 = arith.index_cast %11 : i32 to index
    %c0_10 = arith.constant 0 : index
    %18 = vector.load %arg6[%17, %c0_10] : memref<384x256xbf16, #tpu.memory_space<vmem>>, vector<32x256xbf16>
    %19 = arith.index_cast %14 : i32 to index
    %c0_11 = arith.constant 0 : index
    %20 = vector.load %arg6[%19, %c0_11] : memref<384x256xbf16, #tpu.memory_space<vmem>>, vector<32x256xbf16>
    %cst_12 = arith.constant dense<0.000000e+00> : vector<256x256xf32>
    %21 = tpu.matmul %18, %16, %cst_12 {dimension_numbers = #tpu.dot_dimension_numbers<[0], [0], [1], [1], [0, 1, 1, 1], [], []>} : vector<32x256xbf16>, vector<32x256xbf16>, vector<256x256xf32> -> vector<256x256xf32>
    %cst_13 = arith.constant dense<0xFF800000> : vector<256xf32>
    %22 = vector.multi_reduction <maximumf>, %21, %cst_13 [0] : vector<256x256xf32> to vector<256xf32>
    %23 = vector.shape_cast %22 : vector<256xf32> to vector<1x256xf32>
    %24 = vector.broadcast %23 : vector<1x256xf32> to vector<256x256xf32>
    %25 = arith.subf %21, %24 : vector<256x256xf32>
    %26 = arith.truncf %25 : vector<256x256xf32> to vector<256x256xbf16>
    %27 = math.exp2 %26 : vector<256x256xbf16>
    %cst_14 = arith.constant dense<0.000000e+00> : vector<1x256xf32>
    %28 = tpu.matmul %6, %27, %cst_14 {dimension_numbers = #tpu.dot_dimension_numbers<[1], [0], [0], [1], [0, 0, 1, 1], [], []>} : vector<1x256xbf16>, vector<256x256xbf16>, vector<1x256xf32> -> vector<1x256xf32>
    %cst_15 = arith.constant dense<0.000000e+00> : vector<32x256xf32>
    %29 = tpu.matmul %20, %27, %cst_15 {dimension_numbers = #tpu.dot_dimension_numbers<[1], [0], [0], [1], [0, 0, 1, 1], [], []>} : vector<32x256xbf16>, vector<256x256xbf16>, vector<32x256xf32> -> vector<32x256xf32>
    %30 = tpu.reciprocal %28 : vector<1x256xf32> -> vector<1x256xf32>
    %31 = vector.broadcast %30 : vector<1x256xf32> to vector<32x256xf32>
    %32 = arith.mulf %29, %31 : vector<32x256xf32>
    %33 = arith.truncf %32 : vector<32x256xf32> to vector<32x256xbf16>
    %34 = arith.index_cast %8 : i32 to index
    %c0_16 = arith.constant 0 : index
    %35 = vector.load %arg7[%34, %c0_16] : memref<128x256xbf16, #tpu.memory_space<vmem>>, vector<32x256xbf16>
    tpu.vector_store %arg7[%34, %c0_16], %33 {strides = array<i32>} : memref<128x256xbf16, #tpu.memory_space<vmem>>, vector<32x256xbf16>,
    %c1_i32 = arith.constant 1 : i32
    %c32_i32_17 = arith.constant 32 : i32
    %36 = arith.muli %c1_i32, %c32_i32_17 : i32
    %37 = tpu.assume_multiple %36, 32 : i32
    %c32_i32_18 = arith.constant 32 : i32
    %38 = arith.muli %c1_i32, %c32_i32_18 : i32
    %c128_i32_19 = arith.constant 128 : i32
    %39 = arith.addi %38, %c128_i32_19 : i32
    %40 = tpu.assume_multiple %39, 32 : i32
    %c32_i32_20 = arith.constant 32 : i32
    %41 = arith.muli %c1_i32, %c32_i32_20 : i32
    %c256_i32_21 = arith.constant 256 : i32
    %42 = arith.addi %41, %c256_i32_21 : i32
    %43 = tpu.assume_multiple %42, 32 : i32
    %44 = arith.index_cast %37 : i32 to index
    %c0_22 = arith.constant 0 : index
    %45 = vector.load %arg6[%44, %c0_22] : memref<384x256xbf16, #tpu.memory_space<vmem>>, vector<32x256xbf16>
    %46 = arith.index_cast %40 : i32 to index
    %c0_23 = arith.constant 0 : index
    %47 = vector.load %arg6[%46, %c0_23] : memref<384x256xbf16, #tpu.memory_space<vmem>>, vector<32x256xbf16>
    %48 = arith.index_cast %43 : i32 to index
    %c0_24 = arith.constant 0 : index
    %49 = vector.load %arg6[%48, %c0_24] : memref<384x256xbf16, #tpu.memory_space<vmem>>, vector<32x256xbf16>
    %cst_25 = arith.constant dense<0.000000e+00> : vector<256x256xf32>
    %50 = tpu.matmul %47, %45, %cst_25 {dimension_numbers = #tpu.dot_dimension_numbers<[0], [0], [1], [1], [0, 1, 1, 1], [], []>} : vector<32x256xbf16>, vector<32x256xbf16>, vector<256x256xf32> -> vector<256x256xf32>
    %cst_26 = arith.constant dense<0xFF800000> : vector<256xf32>
    %51 = vector.multi_reduction <maximumf>, %50, %cst_26 [0] : vector<256x256xf32> to vector<256xf32>
    %52 = vector.shape_cast %51 : vector<256xf32> to vector<1x256xf32>
    %53 = vector.broadcast %52 : vector<1x256xf32> to vector<256x256xf32>
    %54 = arith.subf %50, %53 : vector<256x256xf32>
    %55 = arith.truncf %54 : vector<256x256xf32> to vector<256x256xbf16>
    %56 = math.exp2 %55 : vector<256x256xbf16>
    %cst_27 = arith.constant dense<0.000000e+00> : vector<1x256xf32>
    %57 = tpu.matmul %6, %56, %cst_27 {dimension_numbers = #tpu.dot_dimension_numbers<[1], [0], [0], [1], [0, 0, 1, 1], [], []>} : vector<1x256xbf16>, vector<256x256xbf16>, vector<1x256xf32> -> vector<1x256xf32>
    %cst_28 = arith.constant dense<0.000000e+00> : vector<32x256xf32>
    %58 = tpu.matmul %49, %56, %cst_28 {dimension_numbers = #tpu.dot_dimension_numbers<[1], [0], [0], [1], [0, 0, 1, 1], [], []>} : vector<32x256xbf16>, vector<256x256xbf16>, vector<32x256xf32> -> vector<32x256xf32>
    %59 = tpu.reciprocal %57 : vector<1x256xf32> -> vector<1x256xf32>
    %60 = vector.broadcast %59 : vector<1x256xf32> to vector<32x256xf32>
    %61 = arith.mulf %58, %60 : vector<32x256xf32>
    %62 = arith.truncf %61 : vector<32x256xf32> to vector<32x256xbf16>
    %63 = arith.index_cast %37 : i32 to index
    %c0_29 = arith.constant 0 : index
    %64 = vector.load %arg7[%63, %c0_29] : memref<128x256xbf16, #tpu.memory_space<vmem>>, vector<32x256xbf16>
    tpu.vector_store %arg7[%63, %c0_29], %62 {strides = array<i32>} : memref<128x256xbf16, #tpu.memory_space<vmem>>, vector<32x256xbf16>,
    %c2_i32 = arith.constant 2 : i32
    %c32_i32_30 = arith.constant 32 : i32
    %65 = arith.muli %c2_i32, %c32_i32_30 : i32
    %66 = tpu.assume_multiple %65, 32 : i32
    %c32_i32_31 = arith.constant 32 : i32
    %67 = arith.muli %c2_i32, %c32_i32_31 : i32
    %c128_i32_32 = arith.constant 128 : i32
    %68 = arith.addi %67, %c128_i32_32 : i32
    %69 = tpu.assume_multiple %68, 32 : i32
    %c32_i32_33 = arith.constant 32 : i32
    %70 = arith.muli %c2_i32, %c32_i32_33 : i32
    %c256_i32_34 = arith.constant 256 : i32
    %71 = arith.addi %70, %c256_i32_34 : i32
    %72 = tpu.assume_multiple %71, 32 : i32
    %73 = arith.index_cast %66 : i32 to index
    %c0_35 = arith.constant 0 : index
    %74 = vector.load %arg6[%73, %c0_35] : memref<384x256xbf16, #tpu.memory_space<vmem>>, vector<32x256xbf16>
    %75 = arith.index_cast %69 : i32 to index
    %c0_36 = arith.constant 0 : index
    %76 = vector.load %arg6[%75, %c0_36] : memref<384x256xbf16, #tpu.memory_space<vmem>>, vector<32x256xbf16>
    %77 = arith.index_cast %72 : i32 to index
    %c0_37 = arith.constant 0 : index
    %78 = vector.load %arg6[%77, %c0_37] : memref<384x256xbf16, #tpu.memory_space<vmem>>, vector<32x256xbf16>
    %cst_38 = arith.constant dense<0.000000e+00> : vector<256x256xf32>
    %79 = tpu.matmul %76, %74, %cst_38 {dimension_numbers = #tpu.dot_dimension_numbers<[0], [0], [1], [1], [0, 1, 1, 1], [], []>} : vector<32x256xbf16>, vector<32x256xbf16>, vector<256x256xf32> -> vector<256x256xf32>
    %cst_39 = arith.constant dense<0xFF800000> : vector<256xf32>
    %80 = vector.multi_reduction <maximumf>, %79, %cst_39 [0] : vector<256x256xf32> to vector<256xf32>
    %81 = vector.shape_cast %80 : vector<256xf32> to vector<1x256xf32>
    %82 = vector.broadcast %81 : vector<1x256xf32> to vector<256x256xf32>
    %83 = arith.subf %79, %82 : vector<256x256xf32>
    %84 = arith.truncf %83 : vector<256x256xf32> to vector<256x256xbf16>
    %85 = math.exp2 %84 : vector<256x256xbf16>
    %cst_40 = arith.constant dense<0.000000e+00> : vector<1x256xf32>
    %86 = tpu.matmul %6, %85, %cst_40 {dimension_numbers = #tpu.dot_dimension_numbers<[1], [0], [0], [1], [0, 0, 1, 1], [], []>} : vector<1x256xbf16>, vector<256x256xbf16>, vector<1x256xf32> -> vector<1x256xf32>
    %cst_41 = arith.constant dense<0.000000e+00> : vector<32x256xf32>
    %87 = tpu.matmul %78, %85, %cst_41 {dimension_numbers = #tpu.dot_dimension_numbers<[1], [0], [0], [1], [0, 0, 1, 1], [], []>} : vector<32x256xbf16>, vector<256x256xbf16>, vector<32x256xf32> -> vector<32x256xf32>
    %88 = tpu.reciprocal %86 : vector<1x256xf32> -> vector<1x256xf32>
    %89 = vector.broadcast %88 : vector<1x256xf32> to vector<32x256xf32>
    %90 = arith.mulf %87, %89 : vector<32x256xf32>
    %91 = arith.truncf %90 : vector<32x256xf32> to vector<32x256xbf16>
    %92 = arith.index_cast %66 : i32 to index
    %c0_42 = arith.constant 0 : index
    %93 = vector.load %arg7[%92, %c0_42] : memref<128x256xbf16, #tpu.memory_space<vmem>>, vector<32x256xbf16>
    tpu.vector_store %arg7[%92, %c0_42], %91 {strides = array<i32>} : memref<128x256xbf16, #tpu.memory_space<vmem>>, vector<32x256xbf16>,
    %c3_i32 = arith.constant 3 : i32
    %c32_i32_43 = arith.constant 32 : i32
    %94 = arith.muli %c3_i32, %c32_i32_43 : i32
    %95 = tpu.assume_multiple %94, 32 : i32
    %c32_i32_44 = arith.constant 32 : i32
    %96 = arith.muli %c3_i32, %c32_i32_44 : i32
    %c128_i32_45 = arith.constant 128 : i32
    %97 = arith.addi %96, %c128_i32_45 : i32
    %98 = tpu.assume_multiple %97, 32 : i32
    %c32_i32_46 = arith.constant 32 : i32
    %99 = arith.muli %c3_i32, %c32_i32_46 : i32
    %c256_i32_47 = arith.constant 256 : i32
    %100 = arith.addi %99, %c256_i32_47 : i32
    %101 = tpu.assume_multiple %100, 32 : i32
    %102 = arith.index_cast %95 : i32 to index
    %c0_48 = arith.constant 0 : index
    %103 = vector.load %arg6[%102, %c0_48] : memref<384x256xbf16, #tpu.memory_space<vmem>>, vector<32x256xbf16>
    %104 = arith.index_cast %98 : i32 to index
    %c0_49 = arith.constant 0 : index
    %105 = vector.load %arg6[%104, %c0_49] : memref<384x256xbf16, #tpu.memory_space<vmem>>, vector<32x256xbf16>
    %106 = arith.index_cast %101 : i32 to index
    %c0_50 = arith.constant 0 : index
    %107 = vector.load %arg6[%106, %c0_50] : memref<384x256xbf16, #tpu.memory_space<vmem>>, vector<32x256xbf16>
    %cst_51 = arith.constant dense<0.000000e+00> : vector<256x256xf32>
    %108 = tpu.matmul %105, %103, %cst_51 {dimension_numbers = #tpu.dot_dimension_numbers<[0], [0], [1], [1], [0, 1, 1, 1], [], []>} : vector<32x256xbf16>, vector<32x256xbf16>, vector<256x256xf32> -> vector<256x256xf32>
    %cst_52 = arith.constant dense<0xFF800000> : vector<256xf32>
    %109 = vector.multi_reduction <maximumf>, %108, %cst_52 [0] : vector<256x256xf32> to vector<256xf32>
    %110 = vector.shape_cast %109 : vector<256xf32> to vector<1x256xf32>
    %111 = vector.broadcast %110 : vector<1x256xf32> to vector<256x256xf32>
    %112 = arith.subf %108, %111 : vector<256x256xf32>
    %113 = arith.truncf %112 : vector<256x256xf32> to vector<256x256xbf16>
    %114 = math.exp2 %113 : vector<256x256xbf16>
    %cst_53 = arith.constant dense<0.000000e+00> : vector<1x256xf32>
    %115 = tpu.matmul %6, %114, %cst_53 {dimension_numbers = #tpu.dot_dimension_numbers<[1], [0], [0], [1], [0, 0, 1, 1], [], []>} : vector<1x256xbf16>, vector<256x256xbf16>, vector<1x256xf32> -> vector<1x256xf32>
    %cst_54 = arith.constant dense<0.000000e+00> : vector<32x256xf32>
    %116 = tpu.matmul %107, %114, %cst_54 {dimension_numbers = #tpu.dot_dimension_numbers<[1], [0], [0], [1], [0, 0, 1, 1], [], []>} : vector<32x256xbf16>, vector<256x256xbf16>, vector<32x256xf32> -> vector<32x256xf32>
    %117 = tpu.reciprocal %115 : vector<1x256xf32> -> vector<1x256xf32>
    %118 = vector.broadcast %117 : vector<1x256xf32> to vector<32x256xf32>
    %119 = arith.mulf %116, %118 : vector<32x256xf32>
    %120 = arith.truncf %119 : vector<32x256xf32> to vector<32x256xbf16>
    %121 = arith.index_cast %95 : i32 to index
    %c0_55 = arith.constant 0 : index
    %122 = vector.load %arg7[%121, %c0_55] : memref<128x256xbf16, #tpu.memory_space<vmem>>, vector<32x256xbf16>
    tpu.vector_store %arg7[%121, %c0_55], %120 {strides = array<i32>} : memref<128x256xbf16, #tpu.memory_space<vmem>>, vector<32x256xbf16>,
    %c4_i32 = arith.constant 4 : i32
    %c0_56 = arith.constant 0 : index
    %c0_57 = arith.constant 0 : index
    %123 = vector.load %arg3[%c0_56, %c0_57] : memref<4x128xbf16, #tpu.memory_space<vmem>>, vector<4x128xbf16>
    %c0_58 = arith.constant 0 : index
    %c0_59 = arith.constant 0 : index
    %124 = vector.load %arg7[%c0_58, %c0_59] : memref<128x256xbf16, #tpu.memory_space<vmem>>, vector<128x256xbf16>
    %cst_60 = arith.constant dense<0.000000e+00> : vector<4x256xf32>
    %125 = tpu.matmul %123, %124, %cst_60 {dimension_numbers = #tpu.dot_dimension_numbers<[1], [0], [0], [1], [0, 0, 1, 1], [], []>} : vector<4x128xbf16>, vector<128x256xbf16>, vector<4x256xf32> -> vector<4x256xf32>
    %c0_61 = arith.constant 0 : index
    %c0_62 = arith.constant 0 : index
    %126 = vector.load %arg4[%c0_61, %c0_62] : memref<4x1xf32, #tpu.memory_space<vmem>>, vector<4x1xf32>
    %127 = vector.broadcast %126 : vector<4x1xf32> to vector<4x256xf32>
    %128 = arith.addf %125, %127 : vector<4x256xf32>
    %c0_63 = arith.constant 0 : index
    %c0_64 = arith.constant 0 : index
    %c0_65 = arith.constant 0 : index
    %129 = vector.load %arg5[%c0_63, %c0_64, %c0_65] : memref<1x4x256xf32, #tpu.memory_space<vmem>>, vector<1x4x256xf32>
    %130 = vector.shape_cast %129 : vector<1x4x256xf32> to vector<4x256xf32>
    %131 = vector.shape_cast %128 : vector<4x256xf32> to vector<1x4x256xf32>
    tpu.vector_store %arg5[%c0_63, %c0_64, %c0_65], %131 {strides = array<i32>} : memref<1x4x256xf32, #tpu.memory_space<vmem>>, vector<1x4x256xf32>,
    return
  }
  func.func @transform_0(%arg0: i32) -> (i32, i32, i32) {
    %c0_i32 = arith.constant 0 : i32
    %c0_i32_0 = arith.constant 0 : i32
    %c0_i32_1 = arith.constant 0 : i32
    return %arg0, %c0_i32, %c0_i32_0 : i32, i32, i32
  }
  func.func @transform_1(%arg0: i32) -> (i32, i32) {
    %c0_i32 = arith.constant 0 : i32
    %c0_i32_0 = arith.constant 0 : i32
    %c0_i32_1 = arith.constant 0 : i32
    return %c0_i32, %c0_i32_0 : i32, i32
  }
  func.func @transform_2(%arg0: i32) -> (i32, i32) {
    %c0_i32 = arith.constant 0 : i32
    %c0_i32_0 = arith.constant 0 : i32
    %c0_i32_1 = arith.constant 0 : i32
    return %c0_i32, %c0_i32_0 : i32, i32
  }
  func.func @transform_3(%arg0: i32) -> (i32, i32) {
    %c0_i32 = arith.constant 0 : i32
    %c0_i32_0 = arith.constant 0 : i32
    %c0_i32_1 = arith.constant 0 : i32
    return %c0_i32, %c0_i32_0 : i32, i32
  }
  func.func @transform_4(%arg0: i32) -> (i32, i32, i32) {
    %c0_i32 = arith.constant 0 : i32
    %c0_i32_0 = arith.constant 0 : i32
    %c0_i32_1 = arith.constant 0 : i32
    return %arg0, %c0_i32, %c0_i32_0 : i32, i32, i32
  }
}

</mosaic_0001>

<llo_original>
// kernel: tpu_custom_call.1
$region0: #{tpu_custom_call.1}
  #allocation0 [shape = 'u32[]', space=smem, size = 0x4, offset = 0x4, fixed_abs, tag = 'smem constant byte address 0x4 - core index']
  #allocation1 [shape = 'u32[144,128]{1,0:T(1,128)}', space=vmem, size = 0x12000, scoped, tag = 'internal scratch']
  #allocation2 [shape = 'bf16[384,256]{1,0:T(8,128)(2,1)}', space=vmem, size = 0x30000, scoped, tag = 'scratch operand']
  #allocation3 [shape = 'bf16[128,256]{1,0:T(8,128)(2,1)}', space=vmem, size = 0x10000, scoped, tag = 'scratch operand']
  %s0 = inlined_call_operand.vmem [shape: bf16[2,4,256], index: 0, kind: input, shape index: {}]
  %s1 = inlined_call_operand.vmem [shape: bf16[384,4], index: 1, kind: input, shape index: {}]
  %s2 = inlined_call_operand.vmem [shape: bf16[4,128], index: 2, kind: input, shape index: {}]
  %s3 = inlined_call_operand.vmem [shape: f32[4,1], index: 3, kind: input, shape index: {}]
  %s4 = inlined_call_operand.hbm [shape: f32[2,4,256], index: 4, kind: output, shape index: {}]
  %s5 = sld [smem:[#allocation0]]
  $region49: #{tpu_custom_call.1} parent=0
    _
  %s7 = ssub.s32 1, %s5
  %s8 = scalar_select 0, %s7, %s5
  $region1: #{tpu_custom_call.1} parent=0
    #allocation4 [shape = 'u8[8192]{0}', space=vmem, size = 0x2000, scoped, tag = 'output window, operand 0']
    #allocation5 [shape = 's32[2]{0}', space=sflag, size = 0x8, scoped, tag = 'scoped memory for tpu_custom_call.1']
    %9 = vsyncpa [#allocation5], 0
    %s10 = scalar_lea.sflag [#allocation5], 1
    %11 = vsyncpa %s10, 0
    loop: start=0, step=1, limit=4
    $region2: #{tpu_custom_call.1} parent=1 // loop_pre_header
      _
    $region3: #{tpu_custom_call.1} parent=1 // loop_header
      %s13 = sphi 0, %s17
      %p14 = scmp.ge.s32.totalorder %s13, 4
      %s23 = sphi 0, %s25
      %s26 = sphi 0, %s23
      %s27 = sphi 0, %s26
      %s43 = sphi 0, %s27
      %s47 = sphi 0, %s47
      %s49 = sphi 0, %s47
      %s50 = sphi 0, %s49
      %s64 = sphi 0, %s50
      %s68 = sphi 0, %s68
      %s70 = sphi 0, %s68
      %s71 = sphi 0, %s70
      %s85 = sphi 0, %s71
      %s89 = sphi 0, %s89
      %s91 = sphi 0, %s89
      %s92 = sphi 0, %s91
      %s106 = sphi 0, %s92
      %s112 = sphi 0, %s114
      %s115 = sphi 0, %s112
      %s116 = sphi 0, %s115
      %s132 = sphi 0, %s116
    $region4: #{tpu_custom_call.1} parent=1 // loop_header_branch
      %16 = sbr.rel (%p14) target = $region8
    $region5: #{tpu_custom_call.1} parent=1 // loop_body
      %s18 = ssub.s32 %s13, 1
      %s19 = ssub.s32 %s13, 2
      %s20 = sadd.s32 %s13, 1
      %s21 = ssub.s32 %s13, %s20
      %p22 = scmp.eq.s32.totalorder %s21, 0
      %s24 = sadd.s32 %s23, 1
      %s25 = scalar_select %p22, %s23, %s24
      %p28 = pneg %p22
      %p29 = scmp.eq.s32.totalorder %s13, 1
      %p30 = por %p28, %p29
      %p31 = scmp.ne.s32.totalorder %s23, %s26
      %p32 = scmp.eq.s32.totalorder %s13, 0
      %p33 = por %p31, %p32
      %p34 = scmp.ne.s32.totalorder %s23, %s26
      %p35 = scmp.eq.s32.totalorder %s18, 1
      %p36 = por %p34, %p35
      %p37 = scmp.ne.s32.totalorder %s26, %s27
      %p38 = scmp.eq.s32.totalorder %s18, 0
      %p39 = por %p37, %p38
      %p40 = scmp.ne.s32.totalorder %s26, %s27
      %p41 = scmp.eq.s32.totalorder %s19, 1
      %p42 = por %p40, %p41
      %p44 = scmp.ne.s32.totalorder %s27, %s43
      %p45 = scmp.eq.s32.totalorder %s19, 0
      %p46 = por %p44, %p45
      %s48 = sadd.s32 %s47, 1
      %p51 = scmp.eq.s32.totalorder %s13, 1
      %p52 = scmp.ne.s32.totalorder %s47, %s49
      %p53 = scmp.eq.s32.totalorder %s13, 0
      %p54 = por %p52, %p53
      %p55 = scmp.ne.s32.totalorder %s47, %s49
      %p56 = scmp.eq.s32.totalorder %s18, 1
      %p57 = por %p55, %p56
      %p58 = scmp.ne.s32.totalorder %s49, %s50
      %p59 = scmp.eq.s32.totalorder %s18, 0
      %p60 = por %p58, %p59
      %p61 = scmp.ne.s32.totalorder %s49, %s50
      %p62 = scmp.eq.s32.totalorder %s19, 1
      %p63 = por %p61, %p62
      %p65 = scmp.ne.s32.totalorder %s50, %s64
      %p66 = scmp.eq.s32.totalorder %s19, 0
      %p67 = por %p65, %p66
      %s69 = sadd.s32 %s68, 1
      %p72 = scmp.eq.s32.totalorder %s13, 1
      %p73 = scmp.ne.s32.totalorder %s68, %s70
      %p74 = scmp.eq.s32.totalorder %s13, 0
      %p75 = por %p73, %p74
      %p76 = scmp.ne.s32.totalorder %s68, %s70
      %p77 = scmp.eq.s32.totalorder %s18, 1
      %p78 = por %p76, %p77
      %p79 = scmp.ne.s32.totalorder %s70, %s71
      %p80 = scmp.eq.s32.totalorder %s18, 0
      %p81 = por %p79, %p80
      %p82 = scmp.ne.s32.totalorder %s70, %s71
      %p83 = scmp.eq.s32.totalorder %s19, 1
      %p84 = por %p82, %p83
      %p86 = scmp.ne.s32.totalorder %s71, %s85
      %p87 = scmp.eq.s32.totalorder %s19, 0
      %p88 = por %p86, %p87
      %s90 = sadd.s32 %s89, 1
      %p93 = scmp.eq.s32.totalorder %s13, 1
      %p94 = scmp.ne.s32.totalorder %s89, %s91
      %p95 = scmp.eq.s32.totalorder %s13, 0
      %p96 = por %p94, %p95
      %p97 = scmp.ne.s32.totalorder %s89, %s91
      %p98 = scmp.eq.s32.totalorder %s18, 1
      %p99 = por %p97, %p98
      %p100 = scmp.ne.s32.totalorder %s91, %s92
      %p101 = scmp.eq.s32.totalorder %s18, 0
      %p102 = por %p100, %p101
      %p103 = scmp.ne.s32.totalorder %s91, %s92
      %p104 = scmp.eq.s32.totalorder %s19, 1
      %p105 = por %p103, %p104
      %p107 = scmp.ne.s32.totalorder %s92, %s106
      %p108 = scmp.eq.s32.totalorder %s19, 0
      %p109 = por %p107, %p108
      %s110 = ssub.s32 %s13, %s20
      %p111 = scmp.eq.s32.totalorder %s110, 0
      %s113 = sadd.s32 %s112, 1
      %s114 = scalar_select %p111, %s112, %s113
      %p117 = pneg %p111
      %p118 = scmp.eq.s32.totalorder %s13, 1
      %p119 = por %p117, %p118
      %p120 = scmp.ne.s32.totalorder %s112, %s115
      %p121 = scmp.eq.s32.totalorder %s13, 0
      %p122 = por %p120, %p121
      %p123 = scmp.ne.s32.totalorder %s112, %s115
      %p124 = scmp.eq.s32.totalorder %s18, 1
      %p125 = por %p123, %p124
      %p126 = scmp.ne.s32.totalorder %s115, %s116
      %p127 = scmp.eq.s32.totalorder %s18, 0
      %p128 = por %p126, %p127
      %p129 = scmp.ne.s32.totalorder %s115, %s116
      %p130 = scmp.eq.s32.totalorder %s19, 1
      %p131 = por %p129, %p130
      %p133 = scmp.ne.s32.totalorder %s116, %s132
      %p134 = scmp.eq.s32.totalorder %s19, 0
      %p135 = por %p133, %p134
      %p136 = scmp.le.s32.totalorder 1, %s13
      %p137 = scmp.lt.s32.totalorder %s13, 3
      %p138 = pnand %p136, %p137
      %p139 = pneg %p138
      // Predicated region
      $region9: #{tpu_custom_call.1} parent=5 // pred_check
        _
      $region10: #{tpu_custom_call.1} parent=5 // pred_check_branch
        %141 = sbr.rel (%p138) target = $region12
      $region11: #{tpu_custom_call.1} parent=5 // pred_region
        %s142 = ssub.s32 %s13, 1
        // Predicated region
        $region13: #{tpu_custom_call.1} parent=11 // pred_check
          %p143 = pneg %p60
        $region14: #{tpu_custom_call.1} parent=11 // pred_check_branch
          %145 = sbr.rel (%p143) target = $region16
        $region15: #{tpu_custom_call.1} parent=11 // pred_region
          _
        $region16: #{tpu_custom_call.1} parent=11 // pred_fallthru
          _
        // Predicated region
        $region17: #{tpu_custom_call.1} parent=11 // pred_check
          %p146 = pneg %p81
        $region18: #{tpu_custom_call.1} parent=11 // pred_check_branch
          %148 = sbr.rel (%p146) target = $region20
        $region19: #{tpu_custom_call.1} parent=11 // pred_region
          _
        $region20: #{tpu_custom_call.1} parent=11 // pred_fallthru
          _
        // Predicated region
        $region21: #{tpu_custom_call.1} parent=11 // pred_check
          %p149 = pneg %p102
        $region22: #{tpu_custom_call.1} parent=11 // pred_check_branch
          %151 = sbr.rel (%p149) target = $region24
        $region23: #{tpu_custom_call.1} parent=11 // pred_region
          _
        $region24: #{tpu_custom_call.1} parent=11 // pred_fallthru
          _
      $region12: #{tpu_custom_call.1} parent=5 // pred_fallthru
        _
      %p152 = scmp.lt.s32.totalorder %s13, 2
      // Predicated region
      $region25: #{tpu_custom_call.1} parent=5 // pred_check
        %p153 = pneg %p152
      $region26: #{tpu_custom_call.1} parent=5 // pred_check_branch
        %155 = sbr.rel (%p153) target = $region28
      $region27: #{tpu_custom_call.1} parent=5 // pred_region
        // Predicated region
        $region29: #{tpu_custom_call.1} parent=27 // pred_check
          %p156 = pneg %p33
        $region30: #{tpu_custom_call.1} parent=27 // pred_check_branch
          %158 = sbr.rel (%p156) target = $region32
        $region31: #{tpu_custom_call.1} parent=27 // pred_region
          %p159 = scmp.lt.s32.totalorder %s13, 1
          %s160 = scalar_select %p159, %s13, 1
          %s161 = smul.addr %s160, 2
          %s162 = smul.addr %s161, 2
          %s163 = scalar_lea.vmem %s0, %s162
        $region32: #{tpu_custom_call.1} parent=27 // pred_fallthru
          _
      $region28: #{tpu_custom_call.1} parent=5 // pred_fallthru
        _
      %p164 = scmp.le.s32.totalorder 1, %s13
      %p165 = scmp.lt.s32.totalorder %s13, 3
      %p166 = pnand %p164, %p165
      %p167 = pneg %p166
      // Predicated region
      $region33: #{tpu_custom_call.1} parent=5 // pred_check
        _
      $region34: #{tpu_custom_call.1} parent=5 // pred_check_branch
        %169 = sbr.rel (%p166) target = $region36
      $region35: #{tpu_custom_call.1} parent=5 // pred_region
        %s170 = ssub.s32 %s13, 1
        %p171 = scmp.lt.s32.totalorder %s18, 1
        %s172 = scalar_select %p171, %s18, 1
        %s173 = smul.addr %s172, 2
        %s174 = smul.addr %s173, 2
        %s175 = scalar_lea.vmem %s0, %s174
        %p176 = pneg %p39
        %p177 = pneg %p36
        %p178 = pneg %p60
        %p179 = pneg %p57
        %p180 = pneg %p81
        %p181 = pneg %p78
        %p182 = pneg %p102
        %p183 = pneg %p99
        %p184 = pneg %p128
        %p185 = pneg %p125
        %s186 = sand.u32 %s115, 1
        %s187 = scalar_lea.sflag [#allocation5], %s186
        %s188 = sand.u32 %s115, 1
        %s189 = smul.addr %s188, 8
        %s190 = scalar_lea.vmem [#allocation4], %s189
        %p191 = scmp.lt.s32.totalorder %s18, 1
        %s192 = scalar_select %p191, %s18, 1
        %s193 = smul.addr %s192, 2
        %s194 = smul.addr %s193, 2
        %s195 = scalar_lea.vmem %s0, %s194
        %v198 = vld [vmem:[%s1] sm:$0xf]
        %v199 = vld [vmem:[%s1 + $0x4] sm:$0xf]
        %v200 = vld [vmem:[%s1 + $0x8] sm:$0xf]
        %v201 = vld [vmem:[%s1 + $0xc] sm:$0xf]
        %v202 = vld [vmem:[%s1 + $0x10] sm:$0xf]
        %v203 = vld [vmem:[%s1 + $0x14] sm:$0xf]
        %v204 = vld [vmem:[%s1 + $0x18] sm:$0xf]
        %v205 = vld [vmem:[%s1 + $0x1c] sm:$0xf]
        %v206 = vld [vmem:[%s1 + $0x20] sm:$0xf]
        %v207 = vld [vmem:[%s1 + $0x24] sm:$0xf]
        %v208 = vld [vmem:[%s1 + $0x28] sm:$0xf]
        %v209 = vld [vmem:[%s1 + $0x2c] sm:$0xf]
        %v210 = vld [vmem:[%s1 + $0x30] sm:$0xf]
        %v211 = vld [vmem:[%s1 + $0x34] sm:$0xf]
        %v212 = vld [vmem:[%s1 + $0x38] sm:$0xf]
        %v213 = vld [vmem:[%s1 + $0x3c] sm:$0xf]
        %v214 = vld [vmem:[%s1 + $0x40] sm:$0xf]
        %v215 = vld [vmem:[%s1 + $0x44] sm:$0xf]
        %v216 = vld [vmem:[%s1 + $0x48] sm:$0xf]
        %v217 = vld [vmem:[%s1 + $0x4c] sm:$0xf]
        %v218 = vld [vmem:[%s1 + $0x50] sm:$0xf]
        %v219 = vld [vmem:[%s1 + $0x54] sm:$0xf]
        %v220 = vld [vmem:[%s1 + $0x58] sm:$0xf]
        %v221 = vld [vmem:[%s1 + $0x5c] sm:$0xf]
        %v222 = vld [vmem:[%s1 + $0x60] sm:$0xf]
        %v223 = vld [vmem:[%s1 + $0x64] sm:$0xf]
        %v224 = vld [vmem:[%s1 + $0x68] sm:$0xf]
        %v225 = vld [vmem:[%s1 + $0x6c] sm:$0xf]
        %v226 = vld [vmem:[%s1 + $0x70] sm:$0xf]
        %v227 = vld [vmem:[%s1 + $0x74] sm:$0xf]
        %v228 = vld [vmem:[%s1 + $0x78] sm:$0xf]
        %v229 = vld [vmem:[%s1 + $0x7c] sm:$0xf]
        %v230 = vld [vmem:[%s1 + $0x80] sm:$0xf]
        %v231 = vld [vmem:[%s1 + $0x84] sm:$0xf]
        %v232 = vld [vmem:[%s1 + $0x88] sm:$0xf]
        %v233 = vld [vmem:[%s1 + $0x8c] sm:$0xf]
        %v234 = vld [vmem:[%s1 + $0x90] sm:$0xf]
        %v235 = vld [vmem:[%s1 + $0x94] sm:$0xf]
        %v236 = vld [vmem:[%s1 + $0x98] sm:$0xf]
        %v237 = vld [vmem:[%s1 + $0x9c] sm:$0xf]
        %v238 = vld [vmem:[%s1 + $0xa0] sm:$0xf]
        %v239 = vld [vmem:[%s1 + $0xa4] sm:$0xf]
        %v240 = vld [vmem:[%s1 + $0xa8] sm:$0xf]
        %v241 = vld [vmem:[%s1 + $0xac] sm:$0xf]
        %v242 = vld [vmem:[%s1 + $0xb0] sm:$0xf]
        %v243 = vld [vmem:[%s1 + $0xb4] sm:$0xf]
        %v244 = vld [vmem:[%s1 + $0xb8] sm:$0xf]
        %v245 = vld [vmem:[%s1 + $0xbc] sm:$0xf]
        %v246 = vld [vmem:[%s195] sm:$0xf]
        %v295 = vunpack.c.l.b16 %v198
        %v296 = vunpack.c.l.b16 %v199
        %v297 = vunpack.c.l.b16 %v200
        %v298 = vunpack.c.l.b16 %v201
        %v299 = vunpack.c.l.b16 %v202
        %v300 = vunpack.c.l.b16 %v203
        %v301 = vunpack.c.l.b16 %v204
        %v302 = vunpack.c.l.b16 %v205
        %v303 = vunpack.c.l.b16 %v206
        %v304 = vunpack.c.l.b16 %v207
        %v305 = vunpack.c.l.b16 %v208
        %v306 = vunpack.c.l.b16 %v209
        %v307 = vunpack.c.l.b16 %v210
        %v308 = vunpack.c.l.b16 %v211
        %v309 = vunpack.c.l.b16 %v212
        %v310 = vunpack.c.l.b16 %v213
        %v311 = vunpack.c.l.b16 %v214
        %v312 = vunpack.c.l.b16 %v215
        %v313 = vunpack.c.l.b16 %v216
        %v314 = vunpack.c.l.b16 %v217
        %v315 = vunpack.c.l.b16 %v218
        %v316 = vunpack.c.l.b16 %v219
        %v317 = vunpack.c.l.b16 %v220
        %v318 = vunpack.c.l.b16 %v221
        %v319 = vunpack.c.l.b16 %v222
        %v320 = vunpack.c.l.b16 %v223
        %v321 = vunpack.c.l.b16 %v224
        %v322 = vunpack.c.l.b16 %v225
        %v323 = vunpack.c.l.b16 %v226
        %v324 = vunpack.c.l.b16 %v227
        %v325 = vunpack.c.l.b16 %v228
        %v326 = vunpack.c.l.b16 %v229
        %v327 = vunpack.c.l.b16 %v230
        %v328 = vunpack.c.l.b16 %v231
        %v329 = vunpack.c.l.b16 %v232
        %v330 = vunpack.c.l.b16 %v233
        %v331 = vunpack.c.l.b16 %v234
        %v332 = vunpack.c.l.b16 %v235
        %v333 = vunpack.c.l.b16 %v236
        %v334 = vunpack.c.l.b16 %v237
        %v335 = vunpack.c.l.b16 %v238
        %v336 = vunpack.c.l.b16 %v239
        %v337 = vunpack.c.l.b16 %v240
        %v338 = vunpack.c.l.b16 %v241
        %v339 = vunpack.c.l.b16 %v242
        %v340 = vunpack.c.l.b16 %v243
        %v341 = vunpack.c.l.b16 %v244
        %v342 = vunpack.c.l.b16 %v245
        %v343 = vpack.c.b16 %v296, %v295
        %v344 = vpack.c.b16 %v298, %v297
        %v345 = vpack.c.b16 %v300, %v299
        %v346 = vpack.c.b16 %v302, %v301
        %v347 = vpack.c.b16 %v304, %v303
        %v348 = vpack.c.b16 %v306, %v305
        %v349 = vpack.c.b16 %v308, %v307
        %v350 = vpack.c.b16 %v310, %v309
        %v351 = vpack.c.b16 %v312, %v311
        %v352 = vpack.c.b16 %v314, %v313
        %v353 = vpack.c.b16 %v316, %v315
        %v354 = vpack.c.b16 %v318, %v317
        %v355 = vpack.c.b16 %v320, %v319
        %v356 = vpack.c.b16 %v322, %v321
        %v357 = vpack.c.b16 %v324, %v323
        %v358 = vpack.c.b16 %v326, %v325
        %v359 = vpack.c.b16 %v328, %v327
        %v360 = vpack.c.b16 %v330, %v329
        %v361 = vpack.c.b16 %v332, %v331
        %v362 = vpack.c.b16 %v334, %v333
        %v363 = vpack.c.b16 %v336, %v335
        %v364 = vpack.c.b16 %v338, %v337
        %v365 = vpack.c.b16 %v340, %v339
        %v366 = vpack.c.b16 %v342, %v341
        %v369 = vunpack.c.l.s4 1983009808
        %v370 = vunpack.c.0.s8 %v369
        %v371 = vlaneseq
        %v372 = vshrl.u32 %v371, 7
        %v373 = vsub.s32 %v370, %v372
        %v374 = vrot.slane %v246, %v373
        %v375 = vcombine.high %v374, %v374
        %vm376 = vcmask 31744
        %v378 = vsel %vm376, %v343, 0
        %v381 = vsel %vm376, %v344, 0
        %v384 = vsel %vm376, %v345, 0
        %v387 = vsel %vm376, %v346, 0
        %v390 = vsel %vm376, %v347, 0
        %v393 = vsel %vm376, %v348, 0
        %v396 = vsel %vm376, %v349, 0
        %v399 = vsel %vm376, %v350, 0
        %v402 = vsel %vm376, %v351, 0
        %v405 = vsel %vm376, %v352, 0
        %v408 = vsel %vm376, %v353, 0
        %v411 = vsel %vm376, %v354, 0
        %v414 = vsel %vm376, %v355, 0
        %v417 = vsel %vm376, %v356, 0
        %v420 = vsel %vm376, %v357, 0
        %v423 = vsel %vm376, %v358, 0
        %v426 = vsel %vm376, %v359, 0
        %v429 = vsel %vm376, %v360, 0
        %v432 = vsel %vm376, %v361, 0
        %v435 = vsel %vm376, %v362, 0
        %v438 = vsel %vm376, %v363, 0
        %v441 = vsel %vm376, %v364, 0
        %v444 = vsel %vm376, %v365, 0
        %v447 = vsel %vm376, %v366, 0
        %vm449 = vcmask 1041408
        %v451 = vsel %vm449, %v374, 0
        %v454 = vsel %vm449, %v375, 0
        %456 = vmatprep.subr.bf16.mxu0 0
        %457 = vmatpush1.bf16.msra.mxu0 0
        %458 = vmatprep.subr.bf16.mxu0 0
        %459 = vmatpush1.bf16.msra.mxu0 0
        %460 = vmatprep.subr.bf16.mxu0 0
        %461 = vmatpush1.bf16.msra.mxu0 0
        %462 = vmatprep.subr.bf16.mxu0 0
        %463 = vmatpush1.bf16.msra.mxu0 0
        %464 = vmatprep.subr.bf16.mxu0 0
        %465 = vmatpush1.bf16.msra.mxu0 0
        %466 = vmatprep.subr.bf16.mxu0 0
        %467 = vmatpush1.bf16.msra.mxu0 0
        %468 = vmatprep.subr.bf16.mxu0 0
        %469 = vmatpush1.bf16.msra.mxu0 0
        %470 = vmatprep.subr.bf16.mxu0 %v454
        %471 = vmatpush1.bf16.msra.mxu0 %v451
        %472 = vmatprep.subr.bf16.mxu0 0
        %473 = vmatpush2.bf16.msra.mxu0 0
        %474 = vmatprep.subr.bf16.mxu0 0
        %475 = vmatpush2.bf16.msra.mxu0 0
        %476 = vmatprep.subr.bf16.mxu0 0
        %477 = vmatpush2.bf16.msra.mxu0 0
        %478 = vmatprep.subr.bf16.mxu0 0
        %479 = vmatpush2.bf16.msra.mxu0 0
        %480 = vmatprep.subr.bf16.mxu0 0
        %481 = vmatpush2.bf16.msra.mxu0 0
        %482 = vmatprep.subr.bf16.mxu0 0
        %483 = vmatpush2.bf16.msra.mxu0 0
        %484 = vmatprep.subr.bf16.mxu0 0
        %485 = vmatpush2.bf16.msra.mxu0 0
        %486 = vmatprep.subr.bf16.mxu0 0
        %487 = vmatpush2.bf16.msra.mxu0 0
        %488 = vmatprep.mubr.bf16.mxu0 0
        %489 = vmatmul.mubr.bf16.gmra.mxu0 %v378
        %v490 = vpop.f32.mrf.mxu0
        %v491 = vadd.f32 0.0, %v490
        %v492 = vpop.f32.mrf.mxu0
        %v493 = vadd.f32 0.0, %v492
        %v494 = vpop.f32.mrf.mxu0
        %v495 = vadd.f32 0.0, %v494
        %v496 = vpop.f32.mrf.mxu0
        %v497 = vadd.f32 0.0, %v496
        %498 = vmatprep.mubr.bf16.mxu0 0
        %499 = vmatmul.mubr.bf16.gmra.mxu0 %v381
        %v500 = vpop.f32.mrf.mxu0
        %v501 = vadd.f32 0.0, %v500
        %v502 = vpop.f32.mrf.mxu0
        %v503 = vadd.f32 0.0, %v502
        %v504 = vpop.f32.mrf.mxu0
        %v505 = vadd.f32 0.0, %v504
        %v506 = vpop.f32.mrf.mxu0
        %v507 = vadd.f32 0.0, %v506
        %508 = vmatprep.mubr.bf16.mxu0 0
        %509 = vmatmul.mubr.bf16.gmra.mxu0 %v384
        %v510 = vpop.f32.mrf.mxu0
        %v511 = vadd.f32 0.0, %v510
        %v512 = vpop.f32.mrf.mxu0
        %v513 = vadd.f32 0.0, %v512
        %v514 = vpop.f32.mrf.mxu0
        %v515 = vadd.f32 0.0, %v514
        %v516 = vpop.f32.mrf.mxu0
        %v517 = vadd.f32 0.0, %v516
        %518 = vmatprep.mubr.bf16.mxu0 0
        %519 = vmatmul.mubr.bf16.gmra.mxu0 %v387
        %v520 = vpop.f32.mrf.mxu0
        %v521 = vadd.f32 0.0, %v520
        %v522 = vpop.f32.mrf.mxu0
        %v523 = vadd.f32 0.0, %v522
        %v524 = vpop.f32.mrf.mxu0
        %v525 = vadd.f32 0.0, %v524
        %v526 = vpop.f32.mrf.mxu0
        %v527 = vadd.f32 0.0, %v526
        %528 = vmatprep.mubr.bf16.mxu0 0
        %529 = vmatmul.mubr.bf16.gmra.mxu0 %v390
        %v530 = vpop.f32.mrf.mxu0
        %v531 = vadd.f32 0.0, %v530
        %v532 = vpop.f32.mrf.mxu0
        %v533 = vadd.f32 0.0, %v532
        %v534 = vpop.f32.mrf.mxu0
        %v535 = vadd.f32 0.0, %v534
        %v536 = vpop.f32.mrf.mxu0
        %v537 = vadd.f32 0.0, %v536
        %538 = vmatprep.mubr.bf16.mxu0 0
        %539 = vmatmul.mubr.bf16.gmra.mxu0 %v393
        %v540 = vpop.f32.mrf.mxu0
        %v541 = vadd.f32 0.0, %v540
        %v542 = vpop.f32.mrf.mxu0
        %v543 = vadd.f32 0.0, %v542
        %v544 = vpop.f32.mrf.mxu0
        %v545 = vadd.f32 0.0, %v544
        %v546 = vpop.f32.mrf.mxu0
        %v547 = vadd.f32 0.0, %v546
        %548 = vmatprep.mubr.bf16.mxu0 0
        %549 = vmatmul.mubr.bf16.gmra.mxu0 %v396
        %v550 = vpop.f32.mrf.mxu0
        %v551 = vadd.f32 0.0, %v550
        %v552 = vpop.f32.mrf.mxu0
        %v553 = vadd.f32 0.0, %v552
        %v554 = vpop.f32.mrf.mxu0
        %v555 = vadd.f32 0.0, %v554
        %v556 = vpop.f32.mrf.mxu0
        %v557 = vadd.f32 0.0, %v556
        %558 = vmatprep.mubr.bf16.mxu0 0
        %559 = vmatmul.mubr.bf16.gmra.mxu0 %v399
        %v560 = vpop.f32.mrf.mxu0
        %v561 = vadd.f32 0.0, %v560
        %v562 = vpop.f32.mrf.mxu0
        %v563 = vadd.f32 0.0, %v562
        %v564 = vpop.f32.mrf.mxu0
        %v565 = vadd.f32 0.0, %v564
        %v566 = vpop.f32.mrf.mxu0
        %v567 = vadd.f32 0.0, %v566
        %568 = vmatprep.mubr.bf16.mxu0 0
        %569 = vmatmul.mubr.bf16.gmra.mxu0 %v402
        %v570 = vpop.f32.mrf.mxu0
        %v571 = vadd.f32 0.0, %v570
        %v572 = vpop.f32.mrf.mxu0
        %v573 = vadd.f32 0.0, %v572
        %v574 = vpop.f32.mrf.mxu0
        %v575 = vadd.f32 0.0, %v574
        %v576 = vpop.f32.mrf.mxu0
        %v577 = vadd.f32 0.0, %v576
        %578 = vmatprep.mubr.bf16.mxu0 0
        %579 = vmatmul.mubr.bf16.gmra.mxu0 %v405
        %v580 = vpop.f32.mrf.mxu0
        %v581 = vadd.f32 0.0, %v580
        %v582 = vpop.f32.mrf.mxu0
        %v583 = vadd.f32 0.0, %v582
        %v584 = vpop.f32.mrf.mxu0
        %v585 = vadd.f32 0.0, %v584
        %v586 = vpop.f32.mrf.mxu0
        %v587 = vadd.f32 0.0, %v586
        %588 = vmatprep.mubr.bf16.mxu0 0
        %589 = vmatmul.mubr.bf16.gmra.mxu0 %v408
        %v590 = vpop.f32.mrf.mxu0
        %v591 = vadd.f32 0.0, %v590
        %v592 = vpop.f32.mrf.mxu0
        %v593 = vadd.f32 0.0, %v592
        %v594 = vpop.f32.mrf.mxu0
        %v595 = vadd.f32 0.0, %v594
        %v596 = vpop.f32.mrf.mxu0
        %v597 = vadd.f32 0.0, %v596
        %598 = vmatprep.mubr.bf16.mxu0 0
        %599 = vmatmul.mubr.bf16.gmra.mxu0 %v411
        %v600 = vpop.f32.mrf.mxu0
        %v601 = vadd.f32 0.0, %v600
        %v602 = vpop.f32.mrf.mxu0
        %v603 = vadd.f32 0.0, %v602
        %v604 = vpop.f32.mrf.mxu0
        %v605 = vadd.f32 0.0, %v604
        %v606 = vpop.f32.mrf.mxu0
        %v607 = vadd.f32 0.0, %v606
        %608 = vmatprep.mubr.bf16.mxu0 0
        %609 = vmatmul.mubr.bf16.gmra.mxu0 %v414
        %v610 = vpop.f32.mrf.mxu0
        %v611 = vadd.f32 0.0, %v610
        %v612 = vpop.f32.mrf.mxu0
        %v613 = vadd.f32 0.0, %v612
        %v614 = vpop.f32.mrf.mxu0
        %v615 = vadd.f32 0.0, %v614
        %v616 = vpop.f32.mrf.mxu0
        %v617 = vadd.f32 0.0, %v616
        %618 = vmatprep.mubr.bf16.mxu0 0
        %619 = vmatmul.mubr.bf16.gmra.mxu0 %v417
        %v620 = vpop.f32.mrf.mxu0
        %v621 = vadd.f32 0.0, %v620
        %v622 = vpop.f32.mrf.mxu0
        %v623 = vadd.f32 0.0, %v622
        %v624 = vpop.f32.mrf.mxu0
        %v625 = vadd.f32 0.0, %v624
        %v626 = vpop.f32.mrf.mxu0
        %v627 = vadd.f32 0.0, %v626
        %628 = vmatprep.mubr.bf16.mxu0 0
        %629 = vmatmul.mubr.bf16.gmra.mxu0 %v420
        %v630 = vpop.f32.mrf.mxu0
        %v631 = vadd.f32 0.0, %v630
        %v632 = vpop.f32.mrf.mxu0
        %v633 = vadd.f32 0.0, %v632
        %v634 = vpop.f32.mrf.mxu0
        %v635 = vadd.f32 0.0, %v634
        %v636 = vpop.f32.mrf.mxu0
        %v637 = vadd.f32 0.0, %v636
        %638 = vmatprep.mubr.bf16.mxu0 0
        %639 = vmatmul.mubr.bf16.gmra.mxu0 %v423
        %v640 = vpop.f32.mrf.mxu0
        %v641 = vadd.f32 0.0, %v640
        %v642 = vpop.f32.mrf.mxu0
        %v643 = vadd.f32 0.0, %v642
        %v644 = vpop.f32.mrf.mxu0
        %v645 = vadd.f32 0.0, %v644
        %v646 = vpop.f32.mrf.mxu0
        %v647 = vadd.f32 0.0, %v646
        %648 = vmatprep.mubr.bf16.mxu0 0
        %649 = vmatmul.mubr.bf16.gmra.mxu0 %v426
        %v650 = vpop.f32.mrf.mxu0
        %v651 = vadd.f32 0.0, %v650
        %v652 = vpop.f32.mrf.mxu0
        %v653 = vadd.f32 0.0, %v652
        %v654 = vpop.f32.mrf.mxu0
        %v655 = vadd.f32 0.0, %v654
        %v656 = vpop.f32.mrf.mxu0
        %v657 = vadd.f32 0.0, %v656
        %658 = vmatprep.mubr.bf16.mxu0 0
        %659 = vmatmul.mubr.bf16.gmra.mxu0 %v429
        %v660 = vpop.f32.mrf.mxu0
        %v661 = vadd.f32 0.0, %v660
        %v662 = vpop.f32.mrf.mxu0
        %v663 = vadd.f32 0.0, %v662
        %v664 = vpop.f32.mrf.mxu0
        %v665 = vadd.f32 0.0, %v664
        %v666 = vpop.f32.mrf.mxu0
        %v667 = vadd.f32 0.0, %v666
        %668 = vmatprep.mubr.bf16.mxu0 0
        %669 = vmatmul.mubr.bf16.gmra.mxu0 %v432
        %v670 = vpop.f32.mrf.mxu0
        %v671 = vadd.f32 0.0, %v670
        %v672 = vpop.f32.mrf.mxu0
        %v673 = vadd.f32 0.0, %v672
        %v674 = vpop.f32.mrf.mxu0
        %v675 = vadd.f32 0.0, %v674
        %v676 = vpop.f32.mrf.mxu0
        %v677 = vadd.f32 0.0, %v676
        %678 = vmatprep.mubr.bf16.mxu0 0
        %679 = vmatmul.mubr.bf16.gmra.mxu0 %v435
        %v680 = vpop.f32.mrf.mxu0
        %v681 = vadd.f32 0.0, %v680
        %v682 = vpop.f32.mrf.mxu0
        %v683 = vadd.f32 0.0, %v682
        %v684 = vpop.f32.mrf.mxu0
        %v685 = vadd.f32 0.0, %v684
        %v686 = vpop.f32.mrf.mxu0
        %v687 = vadd.f32 0.0, %v686
        %688 = vmatprep.mubr.bf16.mxu0 0
        %689 = vmatmul.mubr.bf16.gmra.mxu0 %v438
        %v690 = vpop.f32.mrf.mxu0
        %v691 = vadd.f32 0.0, %v690
        %v692 = vpop.f32.mrf.mxu0
        %v693 = vadd.f32 0.0, %v692
        %v694 = vpop.f32.mrf.mxu0
        %v695 = vadd.f32 0.0, %v694
        %v696 = vpop.f32.mrf.mxu0
        %v697 = vadd.f32 0.0, %v696
        %698 = vmatprep.mubr.bf16.mxu0 0
        %699 = vmatmul.mubr.bf16.gmra.mxu0 %v441
        %v700 = vpop.f32.mrf.mxu0
        %v701 = vadd.f32 0.0, %v700
        %v702 = vpop.f32.mrf.mxu0
        %v703 = vadd.f32 0.0, %v702
        %v704 = vpop.f32.mrf.mxu0
        %v705 = vadd.f32 0.0, %v704
        %v706 = vpop.f32.mrf.mxu0
        %v707 = vadd.f32 0.0, %v706
        %708 = vmatprep.mubr.bf16.mxu0 0
        %709 = vmatmul.mubr.bf16.gmra.mxu0 %v444
        %v710 = vpop.f32.mrf.mxu0
        %v711 = vadd.f32 0.0, %v710
        %v712 = vpop.f32.mrf.mxu0
        %v713 = vadd.f32 0.0, %v712
        %v714 = vpop.f32.mrf.mxu0
        %v715 = vadd.f32 0.0, %v714
        %v716 = vpop.f32.mrf.mxu0
        %v717 = vadd.f32 0.0, %v716
        %718 = vmatprep.mubr.bf16.mxu0 0
        %719 = vmatmul.mubr.bf16.gmra.mxu0 %v447
        %v720 = vpop.f32.mrf.mxu0
        %v721 = vadd.f32 0.0, %v720
        %v722 = vpop.f32.mrf.mxu0
        %v723 = vadd.f32 0.0, %v722
        %v724 = vpop.f32.mrf.mxu0
        %v725 = vadd.f32 0.0, %v724
        %v726 = vpop.f32.mrf.mxu0
        %v727 = vadd.f32 0.0, %v726
        %728 = vdwg.mxu0
        %v729 = vpack.c.bf16 %v495, %v491
        %v730 = vpack.c.bf16 %v497, %v493
        %v731 = vpack.c.bf16 %v505, %v501
        %v732 = vpack.c.bf16 %v507, %v503
        %v733 = vpack.c.bf16 %v515, %v511
        %v734 = vpack.c.bf16 %v517, %v513
        %v735 = vpack.c.bf16 %v525, %v521
        %v736 = vpack.c.bf16 %v527, %v523
        %v737 = vpack.c.bf16 %v535, %v531
        %v738 = vpack.c.bf16 %v537, %v533
        %v739 = vpack.c.bf16 %v545, %v541
        %v740 = vpack.c.bf16 %v547, %v543
        %v741 = vpack.c.bf16 %v555, %v551
        %v742 = vpack.c.bf16 %v557, %v553
        %v743 = vpack.c.bf16 %v565, %v561
        %v744 = vpack.c.bf16 %v567, %v563
        %v745 = vpack.c.bf16 %v575, %v571
        %v746 = vpack.c.bf16 %v577, %v573
        %v747 = vpack.c.bf16 %v585, %v581
        %v748 = vpack.c.bf16 %v587, %v583
        %v749 = vpack.c.bf16 %v595, %v591
        %v750 = vpack.c.bf16 %v597, %v593
        %v751 = vpack.c.bf16 %v605, %v601
        %v752 = vpack.c.bf16 %v607, %v603
        %v753 = vpack.c.bf16 %v615, %v611
        %v754 = vpack.c.bf16 %v617, %v613
        %v755 = vpack.c.bf16 %v625, %v621
        %v756 = vpack.c.bf16 %v627, %v623
        %v757 = vpack.c.bf16 %v635, %v631
        %v758 = vpack.c.bf16 %v637, %v633
        %v759 = vpack.c.bf16 %v645, %v641
        %v760 = vpack.c.bf16 %v647, %v643
        %v761 = vpack.c.bf16 %v655, %v651
        %v762 = vpack.c.bf16 %v657, %v653
        %v763 = vpack.c.bf16 %v665, %v661
        %v764 = vpack.c.bf16 %v667, %v663
        %v765 = vpack.c.bf16 %v675, %v671
        %v766 = vpack.c.bf16 %v677, %v673
        %v767 = vpack.c.bf16 %v685, %v681
        %v768 = vpack.c.bf16 %v687, %v683
        %v769 = vpack.c.bf16 %v695, %v691
        %v770 = vpack.c.bf16 %v697, %v693
        %v771 = vpack.c.bf16 %v705, %v701
        %v772 = vpack.c.bf16 %v707, %v703
        %v773 = vpack.c.bf16 %v715, %v711
        %v774 = vpack.c.bf16 %v717, %v713
        %v775 = vpack.c.bf16 %v725, %v721
        %v776 = vpack.c.bf16 %v727, %v723
        %v825 = vunpack.c.l.b16 %v729
        %v826 = vunpack.c.l.b16 %v730
        %v827 = vunpack.c.h.b16 %v729
        %v828 = vunpack.c.h.b16 %v730
        %v829 = vunpack.c.l.b16 %v731
        %v830 = vunpack.c.l.b16 %v732
        %v831 = vunpack.c.h.b16 %v731
        %v832 = vunpack.c.h.b16 %v732
        %v833 = vunpack.c.l.b16 %v733
        %v834 = vunpack.c.l.b16 %v734
        %v835 = vunpack.c.h.b16 %v733
        %v836 = vunpack.c.h.b16 %v734
        %v837 = vunpack.c.l.b16 %v735
        %v838 = vunpack.c.l.b16 %v736
        %v839 = vunpack.c.h.b16 %v735
        %v840 = vunpack.c.h.b16 %v736
        %v841 = vunpack.c.l.b16 %v737
        %v842 = vunpack.c.l.b16 %v738
        %v843 = vunpack.c.h.b16 %v737
        %v844 = vunpack.c.h.b16 %v738
        %v845 = vunpack.c.l.b16 %v739
        %v846 = vunpack.c.l.b16 %v740
        %v847 = vunpack.c.h.b16 %v739
        %v848 = vunpack.c.h.b16 %v740
        %v849 = vunpack.c.l.b16 %v741
        %v850 = vunpack.c.l.b16 %v742
        %v851 = vunpack.c.h.b16 %v741
        %v852 = vunpack.c.h.b16 %v742
        %v853 = vunpack.c.l.b16 %v743
        %v854 = vunpack.c.l.b16 %v744
        %v855 = vunpack.c.h.b16 %v743
        %v856 = vunpack.c.h.b16 %v744
        %v857 = vunpack.c.l.b16 %v745
        %v858 = vunpack.c.l.b16 %v746
        %v859 = vunpack.c.h.b16 %v745
        %v860 = vunpack.c.h.b16 %v746
        %v861 = vunpack.c.l.b16 %v747
        %v862 = vunpack.c.l.b16 %v748
        %v863 = vunpack.c.h.b16 %v747
        %v864 = vunpack.c.h.b16 %v748
        %v865 = vunpack.c.l.b16 %v749
        %v866 = vunpack.c.l.b16 %v750
        %v867 = vunpack.c.h.b16 %v749
        %v868 = vunpack.c.h.b16 %v750
        %v869 = vunpack.c.l.b16 %v751
        %v870 = vunpack.c.l.b16 %v752
        %v871 = vunpack.c.h.b16 %v751
        %v872 = vunpack.c.h.b16 %v752
        %v873 = vunpack.c.l.b16 %v753
        %v874 = vunpack.c.l.b16 %v754
        %v875 = vunpack.c.h.b16 %v753
        %v876 = vunpack.c.h.b16 %v754
        %v877 = vunpack.c.l.b16 %v755
        %v878 = vunpack.c.l.b16 %v756
        %v879 = vunpack.c.h.b16 %v755
        %v880 = vunpack.c.h.b16 %v756
        %v881 = vunpack.c.l.b16 %v757
        %v882 = vunpack.c.l.b16 %v758
        %v883 = vunpack.c.h.b16 %v757
        %v884 = vunpack.c.h.b16 %v758
        %v885 = vunpack.c.l.b16 %v759
        %v886 = vunpack.c.l.b16 %v760
        %v887 = vunpack.c.h.b16 %v759
        %v888 = vunpack.c.h.b16 %v760
        %v889 = vunpack.c.l.b16 %v761
        %v890 = vunpack.c.l.b16 %v762
        %v891 = vunpack.c.h.b16 %v761
        %v892 = vunpack.c.h.b16 %v762
        %v893 = vunpack.c.l.b16 %v763
        %v894 = vunpack.c.l.b16 %v764
        %v895 = vunpack.c.h.b16 %v763
        %v896 = vunpack.c.h.b16 %v764
        %v897 = vunpack.c.l.b16 %v765
        %v898 = vunpack.c.l.b16 %v766
        %v899 = vunpack.c.h.b16 %v765
        %v900 = vunpack.c.h.b16 %v766
        %v901 = vunpack.c.l.b16 %v767
        %v902 = vunpack.c.l.b16 %v768
        %v903 = vunpack.c.h.b16 %v767
        %v904 = vunpack.c.h.b16 %v768
        %v905 = vunpack.c.l.b16 %v769
        %v906 = vunpack.c.l.b16 %v770
        %v907 = vunpack.c.h.b16 %v769
        %v908 = vunpack.c.h.b16 %v770
        %v909 = vunpack.c.l.b16 %v771
        %v910 = vunpack.c.l.b16 %v772
        %v911 = vunpack.c.h.b16 %v771
        %v912 = vunpack.c.h.b16 %v772
        %v913 = vunpack.c.l.b16 %v773
        %v914 = vunpack.c.l.b16 %v774
        %v915 = vunpack.c.h.b16 %v773
        %v916 = vunpack.c.h.b16 %v774
        %v917 = vunpack.c.l.b16 %v775
        %v918 = vunpack.c.l.b16 %v776
        %v919 = vunpack.c.h.b16 %v775
        %v920 = vunpack.c.h.b16 %v776
        %v921 = vpack.c.b16 %v826, %v825
        %v922 = vpack.c.b16 %v828, %v827
        %v923 = vpack.c.b16 %v830, %v829
        %v924 = vpack.c.b16 %v832, %v831
        %v925 = vpack.c.b16 %v834, %v833
        %v926 = vpack.c.b16 %v836, %v835
        %v927 = vpack.c.b16 %v838, %v837
        %v928 = vpack.c.b16 %v840, %v839
        %v929 = vpack.c.b16 %v842, %v841
        %v930 = vpack.c.b16 %v844, %v843
        %v931 = vpack.c.b16 %v846, %v845
        %v932 = vpack.c.b16 %v848, %v847
        %v933 = vpack.c.b16 %v850, %v849
        %v934 = vpack.c.b16 %v852, %v851
        %v935 = vpack.c.b16 %v854, %v853
        %v936 = vpack.c.b16 %v856, %v855
        %v937 = vpack.c.b16 %v858, %v857
        %v938 = vpack.c.b16 %v860, %v859
        %v939 = vpack.c.b16 %v862, %v861
        %v940 = vpack.c.b16 %v864, %v863
        %v941 = vpack.c.b16 %v866, %v865
        %v942 = vpack.c.b16 %v868, %v867
        %v943 = vpack.c.b16 %v870, %v869
        %v944 = vpack.c.b16 %v872, %v871
        %v945 = vpack.c.b16 %v874, %v873
        %v946 = vpack.c.b16 %v876, %v875
        %v947 = vpack.c.b16 %v878, %v877
        %v948 = vpack.c.b16 %v880, %v879
        %v949 = vpack.c.b16 %v882, %v881
        %v950 = vpack.c.b16 %v884, %v883
        %v951 = vpack.c.b16 %v886, %v885
        %v952 = vpack.c.b16 %v888, %v887
        %v953 = vpack.c.b16 %v890, %v889
        %v954 = vpack.c.b16 %v892, %v891
        %v955 = vpack.c.b16 %v894, %v893
        %v956 = vpack.c.b16 %v896, %v895
        %v957 = vpack.c.b16 %v898, %v897
        %v958 = vpack.c.b16 %v900, %v899
        %v959 = vpack.c.b16 %v902, %v901
        %v960 = vpack.c.b16 %v904, %v903
        %v961 = vpack.c.b16 %v906, %v905
        %v962 = vpack.c.b16 %v908, %v907
        %v963 = vpack.c.b16 %v910, %v909
        %v964 = vpack.c.b16 %v912, %v911
        %v965 = vpack.c.b16 %v914, %v913
        %v966 = vpack.c.b16 %v916, %v915
        %v967 = vpack.c.b16 %v918, %v917
        %v968 = vpack.c.b16 %v920, %v919
        %1017 = vst [vmem:[#allocation2] sm:$0xff] %v921
        %1018 = vst [vmem:[#allocation2 + $0x8] sm:$0xff] %v922
        %1019 = vst [vmem:[#allocation2 + $0x10] sm:$0xff] %v923
        %1020 = vst [vmem:[#allocation2 + $0x18] sm:$0xff] %v924
        %1021 = vst [vmem:[#allocation2 + $0x20] sm:$0xff] %v925
        %1022 = vst [vmem:[#allocation2 + $0x28] sm:$0xff] %v926
        %1023 = vst [vmem:[#allocation2 + $0x30] sm:$0xff] %v927
        %1024 = vst [vmem:[#allocation2 + $0x38] sm:$0xff] %v928
        %1025 = vst [vmem:[#allocation2 + $0x40] sm:$0xff] %v929
        %1026 = vst [vmem:[#allocation2 + $0x48] sm:$0xff] %v930
        %1027 = vst [vmem:[#allocation2 + $0x50] sm:$0xff] %v931
        %1028 = vst [vmem:[#allocation2 + $0x58] sm:$0xff] %v932
        %1029 = vst [vmem:[#allocation2 + $0x60] sm:$0xff] %v933
        %1030 = vst [vmem:[#allocation2 + $0x68] sm:$0xff] %v934
        %1031 = vst [vmem:[#allocation2 + $0x70] sm:$0xff] %v935
        %1032 = vst [vmem:[#allocation2 + $0x78] sm:$0xff] %v936
        %1033 = vst [vmem:[#allocation2 + $0x80] sm:$0xff] %v937
        %1034 = vst [vmem:[#allocation2 + $0x88] sm:$0xff] %v938
        %1035 = vst [vmem:[#allocation2 + $0x90] sm:$0xff] %v939
        %1036 = vst [vmem:[#allocation2 + $0x98] sm:$0xff] %v940
        %1037 = vst [vmem:[#allocation2 + $0xa0] sm:$0xff] %v941
        %1038 = vst [vmem:[#allocation2 + $0xa8] sm:$0xff] %v942
        %1039 = vst [vmem:[#allocation2 + $0xb0] sm:$0xff] %v943
        %1040 = vst [vmem:[#allocation2 + $0xb8] sm:$0xff] %v944
        %1041 = vst [vmem:[#allocation2 + $0xc0] sm:$0xff] %v945
        %1042 = vst [vmem:[#allocation2 + $0xc8] sm:$0xff] %v946
        %1043 = vst [vmem:[#allocation2 + $0xd0] sm:$0xff] %v947
        %1044 = vst [vmem:[#allocation2 + $0xd8] sm:$0xff] %v948
        %1045 = vst [vmem:[#allocation2 + $0xe0] sm:$0xff] %v949
        %1046 = vst [vmem:[#allocation2 + $0xe8] sm:$0xff] %v950
        %1047 = vst [vmem:[#allocation2 + $0xf0] sm:$0xff] %v951
        %1048 = vst [vmem:[#allocation2 + $0xf8] sm:$0xff] %v952
        %1049 = vst [vmem:[#allocation2 + $0x100] sm:$0xff] %v953
        %1050 = vst [vmem:[#allocation2 + $0x108] sm:$0xff] %v954
        %1051 = vst [vmem:[#allocation2 + $0x110] sm:$0xff] %v955
        %1052 = vst [vmem:[#allocation2 + $0x118] sm:$0xff] %v956
        %1053 = vst [vmem:[#allocation2 + $0x120] sm:$0xff] %v957
        %1054 = vst [vmem:[#allocation2 + $0x128] sm:$0xff] %v958
        %1055 = vst [vmem:[#allocation2 + $0x130] sm:$0xff] %v959
        %1056 = vst [vmem:[#allocation2 + $0x138] sm:$0xff] %v960
        %1057 = vst [vmem:[#allocation2 + $0x140] sm:$0xff] %v961
        %1058 = vst [vmem:[#allocation2 + $0x148] sm:$0xff] %v962
        %1059 = vst [vmem:[#allocation2 + $0x150] sm:$0xff] %v963
        %1060 = vst [vmem:[#allocation2 + $0x158] sm:$0xff] %v964
        %1061 = vst [vmem:[#allocation2 + $0x160] sm:$0xff] %v965
        %1062 = vst [vmem:[#allocation2 + $0x168] sm:$0xff] %v966
        %1063 = vst [vmem:[#allocation2 + $0x170] sm:$0xff] %v967
        %1064 = vst [vmem:[#allocation2 + $0x178] sm:$0xff] %v968
        %s1065 = smul.u32 0, 2
        %s1066 = smul.addr %s1065, 4
        %s1067 = scalar_lea.vmem [#allocation2], %s1066
        %v1068 = vld [vmem:[%s1067] sm:$0xff]
        %v1069 = vld [vmem:[%s1067 + $0x8] sm:$0xff]
        %v1070 = vld [vmem:[%s1067 + $0x10] sm:$0xff]
        %v1071 = vld [vmem:[%s1067 + $0x18] sm:$0xff]
        %s1072 = smul.u32 16, 2
        %s1073 = smul.addr %s1072, 4
        %s1074 = scalar_lea.vmem [#allocation2], %s1073
        %v1075 = vld [vmem:[%s1074] sm:$0xff]
        %v1076 = vld [vmem:[%s1074 + $0x8] sm:$0xff]
        %v1077 = vld [vmem:[%s1074 + $0x10] sm:$0xff]
        %v1078 = vld [vmem:[%s1074 + $0x18] sm:$0xff]
        %s1079 = smul.u32 32, 2
        %s1080 = smul.addr %s1079, 4
        %s1081 = scalar_lea.vmem [#allocation2], %s1080
        %v1082 = vld [vmem:[%s1081] sm:$0xff]
        %v1083 = vld [vmem:[%s1081 + $0x8] sm:$0xff]
        %v1084 = vld [vmem:[%s1081 + $0x10] sm:$0xff]
        %v1085 = vld [vmem:[%s1081 + $0x18] sm:$0xff]
        %v1090 = vunpack.c.l.b16 %v1075
        %v1091 = vunpack.c.h.b16 %v1075
        %v1092 = vunpack.c.l.b16 %v1076
        %v1093 = vunpack.c.h.b16 %v1076
        %v1094 = vunpack.c.l.b16 %v1077
        %v1095 = vunpack.c.h.b16 %v1077
        %v1096 = vunpack.c.l.b16 %v1078
        %v1097 = vunpack.c.h.b16 %v1078
        %v1098 = vpack.c.b16 %v1092, %v1090
        %v1099 = vpack.c.b16 %v1093, %v1091
        %v1100 = vpack.c.b16 %v1096, %v1094
        %v1101 = vpack.c.b16 %v1097, %v1095
        %1106 = vxpose.xlu0.c.b16.start [1/8] %v1098, 128
        %1107 = vxpose.xlu0.c.b16.cont [2/8] %v1100, 128
        %1108 = vxpose.xlu0.c.b16.cont [3/8] 0, 128
        %1109 = vxpose.xlu0.c.b16.cont [4/8] 0, 128
        %1110 = vxpose.xlu0.c.b16.cont [5/8] 0, 128
        %1111 = vxpose.xlu0.c.b16.cont [6/8] 0, 128
        %1112 = vxpose.xlu0.c.b16.cont [7/8] 0, 128
        %1113 = vxpose.xlu0.c.b16.end [8/8] 0, 128
        %v1114 = vpop.trf.xlu0
        %v1115 = vpop.trf.xlu0
        %v1116 = vpop.trf.xlu0
        %v1117 = vpop.trf.xlu0
        %v1118 = vpop.trf.xlu0
        %v1119 = vpop.trf.xlu0
        %v1120 = vpop.trf.xlu0
        %v1121 = vpop.trf.xlu0
        %1122 = vxpose.xlu0.c.b16.start [1/8] %v1099, 128
        %1123 = vxpose.xlu0.c.b16.cont [2/8] %v1101, 128
        %1124 = vxpose.xlu0.c.b16.cont [3/8] 0, 128
        %1125 = vxpose.xlu0.c.b16.cont [4/8] 0, 128
        %1126 = vxpose.xlu0.c.b16.cont [5/8] 0, 128
        %1127 = vxpose.xlu0.c.b16.cont [6/8] 0, 128
        %1128 = vxpose.xlu0.c.b16.cont [7/8] 0, 128
        %1129 = vxpose.xlu0.c.b16.end [8/8] 0, 128
        %v1130 = vpop.trf.xlu0
        %v1131 = vpop.trf.xlu0
        %v1132 = vpop.trf.xlu0
        %v1133 = vpop.trf.xlu0
        %v1134 = vpop.trf.xlu0
        %v1135 = vpop.trf.xlu0
        %v1136 = vpop.trf.xlu0
        %v1137 = vpop.trf.xlu0
        %v1142 = vunpack.c.l.b16 %v1068
        %v1143 = vunpack.c.h.b16 %v1068
        %v1144 = vunpack.c.l.b16 %v1069
        %v1145 = vunpack.c.h.b16 %v1069
        %v1146 = vunpack.c.l.b16 %v1070
        %v1147 = vunpack.c.h.b16 %v1070
        %v1148 = vunpack.c.l.b16 %v1071
        %v1149 = vunpack.c.h.b16 %v1071
        %v1150 = vpack.c.b16 %v1144, %v1142
        %v1151 = vpack.c.b16 %v1145, %v1143
        %v1152 = vpack.c.b16 %v1148, %v1146
        %v1153 = vpack.c.b16 %v1149, %v1147
        %vm1158 = vcmask 261120
        %v1160 = vsel %vm1158, %v1114, 0
        %v1163 = vsel %vm1158, %v1115, 0
        %v1166 = vsel %vm1158, %v1116, 0
        %v1169 = vsel %vm1158, %v1117, 0
        %v1172 = vsel %vm1158, %v1118, 0
        %v1175 = vsel %vm1158, %v1119, 0
        %v1178 = vsel %vm1158, %v1120, 0
        %v1181 = vsel %vm1158, %v1121, 0
        %v1184 = vsel %vm1158, %v1130, 0
        %v1187 = vsel %vm1158, %v1131, 0
        %v1190 = vsel %vm1158, %v1132, 0
        %v1193 = vsel %vm1158, %v1133, 0
        %v1196 = vsel %vm1158, %v1134, 0
        %v1199 = vsel %vm1158, %v1135, 0
        %v1202 = vsel %vm1158, %v1136, 0
        %v1205 = vsel %vm1158, %v1137, 0
        %1207 = vmatprep.subr.bf16.mxu0 0
        %1208 = vmatpush1.bf16.msra.mxu0 0
        %1209 = vmatprep.subr.bf16.mxu0 0
        %1210 = vmatpush1.bf16.msra.mxu0 0
        %1211 = vmatprep.subr.bf16.mxu0 0
        %1212 = vmatpush1.bf16.msra.mxu0 0
        %1213 = vmatprep.subr.bf16.mxu0 0
        %1214 = vmatpush1.bf16.msra.mxu0 0
        %1215 = vmatprep.subr.bf16.mxu0 0
        %1216 = vmatpush1.bf16.msra.mxu0 0
        %1217 = vmatprep.subr.bf16.mxu0 0
        %1218 = vmatpush1.bf16.msra.mxu0 0
        %1219 = vmatprep.subr.bf16.mxu0 %v1153
        %1220 = vmatpush1.bf16.msra.mxu0 %v1152
        %1221 = vmatprep.subr.bf16.mxu0 %v1151
        %1222 = vmatpush1.bf16.msra.mxu0 %v1150
        %1223 = vmatprep.subr.bf16.mxu0 0
        %1224 = vmatpush2.bf16.msra.mxu0 0
        %1225 = vmatprep.subr.bf16.mxu0 0
        %1226 = vmatpush2.bf16.msra.mxu0 0
        %1227 = vmatprep.subr.bf16.mxu0 0
        %1228 = vmatpush2.bf16.msra.mxu0 0
        %1229 = vmatprep.subr.bf16.mxu0 0
        %1230 = vmatpush2.bf16.msra.mxu0 0
        %1231 = vmatprep.subr.bf16.mxu0 0
        %1232 = vmatpush2.bf16.msra.mxu0 0
        %1233 = vmatprep.subr.bf16.mxu0 0
        %1234 = vmatpush2.bf16.msra.mxu0 0
        %1235 = vmatprep.subr.bf16.mxu0 0
        %1236 = vmatpush2.bf16.msra.mxu0 0
        %1237 = vmatprep.subr.bf16.mxu0 0
        %1238 = vmatpush2.bf16.msra.mxu0 0
        %1239 = vmatprep.mubr.bf16.mxu0 0
        %1240 = vmatmul.mubr.bf16.gmra.mxu0 %v1160
        %v1241 = vpop.f32.mrf.mxu0
        %v1242 = vadd.f32 0.0, %v1241
        %v1243 = vpop.f32.mrf.mxu0
        %v1244 = vadd.f32 0.0, %v1243
        %v1245 = vpop.f32.mrf.mxu0
        %v1246 = vadd.f32 0.0, %v1245
        %v1247 = vpop.f32.mrf.mxu0
        %v1248 = vadd.f32 0.0, %v1247
        %1249 = vmatprep.mubr.bf16.mxu0 0
        %1250 = vmatmul.mubr.bf16.gmra.mxu0 %v1163
        %v1251 = vpop.f32.mrf.mxu0
        %v1252 = vadd.f32 0.0, %v1251
        %v1253 = vpop.f32.mrf.mxu0
        %v1254 = vadd.f32 0.0, %v1253
        %v1255 = vpop.f32.mrf.mxu0
        %v1256 = vadd.f32 0.0, %v1255
        %v1257 = vpop.f32.mrf.mxu0
        %v1258 = vadd.f32 0.0, %v1257
        %1259 = vmatprep.mubr.bf16.mxu0 0
        %1260 = vmatmul.mubr.bf16.gmra.mxu0 %v1166
        %v1261 = vpop.f32.mrf.mxu0
        %v1262 = vadd.f32 0.0, %v1261
        %v1263 = vpop.f32.mrf.mxu0
        %v1264 = vadd.f32 0.0, %v1263
        %v1265 = vpop.f32.mrf.mxu0
        %v1266 = vadd.f32 0.0, %v1265
        %v1267 = vpop.f32.mrf.mxu0
        %v1268 = vadd.f32 0.0, %v1267
        %1269 = vmatprep.mubr.bf16.mxu0 0
        %1270 = vmatmul.mubr.bf16.gmra.mxu0 %v1169
        %v1271 = vpop.f32.mrf.mxu0
        %v1272 = vadd.f32 0.0, %v1271
        %v1273 = vpop.f32.mrf.mxu0
        %v1274 = vadd.f32 0.0, %v1273
        %v1275 = vpop.f32.mrf.mxu0
        %v1276 = vadd.f32 0.0, %v1275
        %v1277 = vpop.f32.mrf.mxu0
        %v1278 = vadd.f32 0.0, %v1277
        %1279 = vmatprep.mubr.bf16.mxu0 0
        %1280 = vmatmul.mubr.bf16.gmra.mxu0 %v1172
        %v1281 = vpop.f32.mrf.mxu0
        %v1282 = vadd.f32 0.0, %v1281
        %v1283 = vpop.f32.mrf.mxu0
        %v1284 = vadd.f32 0.0, %v1283
        %v1285 = vpop.f32.mrf.mxu0
        %v1286 = vadd.f32 0.0, %v1285
        %v1287 = vpop.f32.mrf.mxu0
        %v1288 = vadd.f32 0.0, %v1287
        %1289 = vmatprep.mubr.bf16.mxu0 0
        %1290 = vmatmul.mubr.bf16.gmra.mxu0 %v1175
        %v1291 = vpop.f32.mrf.mxu0
        %v1292 = vadd.f32 0.0, %v1291
        %v1293 = vpop.f32.mrf.mxu0
        %v1294 = vadd.f32 0.0, %v1293
        %v1295 = vpop.f32.mrf.mxu0
        %v1296 = vadd.f32 0.0, %v1295
        %v1297 = vpop.f32.mrf.mxu0
        %v1298 = vadd.f32 0.0, %v1297
        %1299 = vmatprep.mubr.bf16.mxu0 0
        %1300 = vmatmul.mubr.bf16.gmra.mxu0 %v1178
        %v1301 = vpop.f32.mrf.mxu0
        %v1302 = vadd.f32 0.0, %v1301
        %v1303 = vpop.f32.mrf.mxu0
        %v1304 = vadd.f32 0.0, %v1303
        %v1305 = vpop.f32.mrf.mxu0
        %v1306 = vadd.f32 0.0, %v1305
        %v1307 = vpop.f32.mrf.mxu0
        %v1308 = vadd.f32 0.0, %v1307
        %1309 = vmatprep.mubr.bf16.mxu0 0
        %1310 = vmatmul.mubr.bf16.gmra.mxu0 %v1181
        %v1311 = vpop.f32.mrf.mxu0
        %v1312 = vadd.f32 0.0, %v1311
        %v1313 = vpop.f32.mrf.mxu0
        %v1314 = vadd.f32 0.0, %v1313
        %v1315 = vpop.f32.mrf.mxu0
        %v1316 = vadd.f32 0.0, %v1315
        %v1317 = vpop.f32.mrf.mxu0
        %v1318 = vadd.f32 0.0, %v1317
        %1319 = vmatprep.mubr.bf16.mxu0 0
        %1320 = vmatmul.mubr.bf16.gmra.mxu0 %v1184
        %v1321 = vpop.f32.mrf.mxu0
        %v1322 = vadd.f32 0.0, %v1321
        %v1323 = vpop.f32.mrf.mxu0
        %v1324 = vadd.f32 0.0, %v1323
        %v1325 = vpop.f32.mrf.mxu0
        %v1326 = vadd.f32 0.0, %v1325
        %v1327 = vpop.f32.mrf.mxu0
        %v1328 = vadd.f32 0.0, %v1327
        %1329 = vmatprep.mubr.bf16.mxu0 0
        %1330 = vmatmul.mubr.bf16.gmra.mxu0 %v1187
        %v1331 = vpop.f32.mrf.mxu0
        %v1332 = vadd.f32 0.0, %v1331
        %v1333 = vpop.f32.mrf.mxu0
        %v1334 = vadd.f32 0.0, %v1333
        %v1335 = vpop.f32.mrf.mxu0
        %v1336 = vadd.f32 0.0, %v1335
        %v1337 = vpop.f32.mrf.mxu0
        %v1338 = vadd.f32 0.0, %v1337
        %1339 = vmatprep.mubr.bf16.mxu0 0
        %1340 = vmatmul.mubr.bf16.gmra.mxu0 %v1190
        %v1341 = vpop.f32.mrf.mxu0
        %v1342 = vadd.f32 0.0, %v1341
        %v1343 = vpop.f32.mrf.mxu0
        %v1344 = vadd.f32 0.0, %v1343
        %v1345 = vpop.f32.mrf.mxu0
        %v1346 = vadd.f32 0.0, %v1345
        %v1347 = vpop.f32.mrf.mxu0
        %v1348 = vadd.f32 0.0, %v1347
        %1349 = vmatprep.mubr.bf16.mxu0 0
        %1350 = vmatmul.mubr.bf16.gmra.mxu0 %v1193
        %v1351 = vpop.f32.mrf.mxu0
        %v1352 = vadd.f32 0.0, %v1351
        %v1353 = vpop.f32.mrf.mxu0
        %v1354 = vadd.f32 0.0, %v1353
        %v1355 = vpop.f32.mrf.mxu0
        %v1356 = vadd.f32 0.0, %v1355
        %v1357 = vpop.f32.mrf.mxu0
        %v1358 = vadd.f32 0.0, %v1357
        %1359 = vmatprep.mubr.bf16.mxu0 0
        %1360 = vmatmul.mubr.bf16.gmra.mxu0 %v1196
        %v1361 = vpop.f32.mrf.mxu0
        %v1362 = vadd.f32 0.0, %v1361
        %v1363 = vpop.f32.mrf.mxu0
        %v1364 = vadd.f32 0.0, %v1363
        %v1365 = vpop.f32.mrf.mxu0
        %v1366 = vadd.f32 0.0, %v1365
        %v1367 = vpop.f32.mrf.mxu0
        %v1368 = vadd.f32 0.0, %v1367
        %1369 = vmatprep.mubr.bf16.mxu0 0
        %1370 = vmatmul.mubr.bf16.gmra.mxu0 %v1199
        %v1371 = vpop.f32.mrf.mxu0
        %v1372 = vadd.f32 0.0, %v1371
        %v1373 = vpop.f32.mrf.mxu0
        %v1374 = vadd.f32 0.0, %v1373
        %v1375 = vpop.f32.mrf.mxu0
        %v1376 = vadd.f32 0.0, %v1375
        %v1377 = vpop.f32.mrf.mxu0
        %v1378 = vadd.f32 0.0, %v1377
        %1379 = vmatprep.mubr.bf16.mxu0 0
        %1380 = vmatmul.mubr.bf16.gmra.mxu0 %v1202
        %v1381 = vpop.f32.mrf.mxu0
        %v1382 = vadd.f32 0.0, %v1381
        %v1383 = vpop.f32.mrf.mxu0
        %v1384 = vadd.f32 0.0, %v1383
        %v1385 = vpop.f32.mrf.mxu0
        %v1386 = vadd.f32 0.0, %v1385
        %v1387 = vpop.f32.mrf.mxu0
        %v1388 = vadd.f32 0.0, %v1387
        %1389 = vmatprep.mubr.bf16.mxu0 0
        %1390 = vmatmul.mubr.bf16.gmra.mxu0 %v1205
        %v1391 = vpop.f32.mrf.mxu0
        %v1392 = vadd.f32 0.0, %v1391
        %v1393 = vpop.f32.mrf.mxu0
        %v1394 = vadd.f32 0.0, %v1393
        %v1395 = vpop.f32.mrf.mxu0
        %v1396 = vadd.f32 0.0, %v1395
        %v1397 = vpop.f32.mrf.mxu0
        %v1398 = vadd.f32 0.0, %v1397
        %1399 = vdwg.mxu0
        %v1400 = vmax.f32 %v1242, %v1252
        %v1401 = vmax.f32 %v1246, %v1256
        %v1402 = vmax.f32 %v1400, %v1262
        %v1403 = vmax.f32 %v1401, %v1266
        %v1404 = vmax.f32 %v1402, %v1272
        %v1405 = vmax.f32 %v1403, %v1276
        %v1406 = vmax.f32 %v1404, %v1282
        %v1407 = vmax.f32 %v1405, %v1286
        %v1408 = vmax.f32 %v1406, %v1292
        %v1409 = vmax.f32 %v1407, %v1296
        %v1410 = vmax.f32 %v1408, %v1302
        %v1411 = vmax.f32 %v1409, %v1306
        %v1412 = vmax.f32 %v1410, %v1312
        %v1413 = vmax.f32 %v1411, %v1316
        %v1414 = vmax.f32 %v1412, %v1322
        %v1415 = vmax.f32 %v1413, %v1326
        %v1416 = vmax.f32 %v1414, %v1332
        %v1417 = vmax.f32 %v1415, %v1336
        %v1418 = vmax.f32 %v1416, %v1342
        %v1419 = vmax.f32 %v1417, %v1346
        %v1420 = vmax.f32 %v1418, %v1352
        %v1421 = vmax.f32 %v1419, %v1356
        %v1422 = vmax.f32 %v1420, %v1362
        %v1423 = vmax.f32 %v1421, %v1366
        %v1424 = vmax.f32 %v1422, %v1372
        %v1425 = vmax.f32 %v1423, %v1376
        %v1426 = vmax.f32 %v1424, %v1382
        %v1427 = vmax.f32 %v1425, %v1386
        %v1428 = vmax.f32 %v1426, %v1392
        %v1429 = vmax.f32 %v1427, %v1396
        %v1430 = vmax.f32 %v1428, %v1429
        %v1431 = vrot.slane %v1430, 4
        %v1432 = vmax.f32 %v1430, %v1431
        %v1433 = vrot.slane %v1432, 2
        %v1434 = vmax.f32 %v1432, %v1433
        %v1435 = vrot.slane %v1434, 1
        %v1436 = vmax.f32 %v1434, %v1435
        %v1437 = vmax.f32 %v1244, %v1254
        %v1438 = vmax.f32 %v1248, %v1258
        %v1439 = vmax.f32 %v1437, %v1264
        %v1440 = vmax.f32 %v1438, %v1268
        %v1441 = vmax.f32 %v1439, %v1274
        %v1442 = vmax.f32 %v1440, %v1278
        %v1443 = vmax.f32 %v1441, %v1284
        %v1444 = vmax.f32 %v1442, %v1288
        %v1445 = vmax.f32 %v1443, %v1294
        %v1446 = vmax.f32 %v1444, %v1298
        %v1447 = vmax.f32 %v1445, %v1304
        %v1448 = vmax.f32 %v1446, %v1308
        %v1449 = vmax.f32 %v1447, %v1314
        %v1450 = vmax.f32 %v1448, %v1318
        %v1451 = vmax.f32 %v1449, %v1324
        %v1452 = vmax.f32 %v1450, %v1328
        %v1453 = vmax.f32 %v1451, %v1334
        %v1454 = vmax.f32 %v1452, %v1338
        %v1455 = vmax.f32 %v1453, %v1344
        %v1456 = vmax.f32 %v1454, %v1348
        %v1457 = vmax.f32 %v1455, %v1354
        %v1458 = vmax.f32 %v1456, %v1358
        %v1459 = vmax.f32 %v1457, %v1364
        %v1460 = vmax.f32 %v1458, %v1368
        %v1461 = vmax.f32 %v1459, %v1374
        %v1462 = vmax.f32 %v1460, %v1378
        %v1463 = vmax.f32 %v1461, %v1384
        %v1464 = vmax.f32 %v1462, %v1388
        %v1465 = vmax.f32 %v1463, %v1394
        %v1466 = vmax.f32 %v1464, %v1398
        %v1467 = vmax.f32 %v1465, %v1466
        %v1468 = vrot.slane %v1467, 4
        %v1469 = vmax.f32 %v1467, %v1468
        %v1470 = vrot.slane %v1469, 2
        %v1471 = vmax.f32 %v1469, %v1470
        %v1472 = vrot.slane %v1471, 1
        %v1473 = vmax.f32 %v1471, %v1472
        %v1474 = vsub.f32 %v1242, %v1436
        %v1475 = vsub.f32 %v1244, %v1473
        %v1476 = vsub.f32 %v1246, %v1436
        %v1477 = vsub.f32 %v1248, %v1473
        %v1478 = vsub.f32 %v1252, %v1436
        %v1479 = vsub.f32 %v1254, %v1473
        %v1480 = vsub.f32 %v1256, %v1436
        %v1481 = vsub.f32 %v1258, %v1473
        %v1482 = vsub.f32 %v1262, %v1436
        %v1483 = vsub.f32 %v1264, %v1473
        %v1484 = vsub.f32 %v1266, %v1436
        %v1485 = vsub.f32 %v1268, %v1473
        %v1486 = vsub.f32 %v1272, %v1436
        %v1487 = vsub.f32 %v1274, %v1473
        %v1488 = vsub.f32 %v1276, %v1436
        %v1489 = vsub.f32 %v1278, %v1473
        %v1490 = vsub.f32 %v1282, %v1436
        %v1491 = vsub.f32 %v1284, %v1473
        %v1492 = vsub.f32 %v1286, %v1436
        %v1493 = vsub.f32 %v1288, %v1473
        %v1494 = vsub.f32 %v1292, %v1436
        %v1495 = vsub.f32 %v1294, %v1473
        %v1496 = vsub.f32 %v1296, %v1436
        %v1497 = vsub.f32 %v1298, %v1473
        %v1498 = vsub.f32 %v1302, %v1436
        %v1499 = vsub.f32 %v1304, %v1473
        %v1500 = vsub.f32 %v1306, %v1436
        %v1501 = vsub.f32 %v1308, %v1473
        %v1502 = vsub.f32 %v1312, %v1436
        %v1503 = vsub.f32 %v1314, %v1473
        %v1504 = vsub.f32 %v1316, %v1436
        %v1505 = vsub.f32 %v1318, %v1473
        %v1506 = vsub.f32 %v1322, %v1436
        %v1507 = vsub.f32 %v1324, %v1473
        %v1508 = vsub.f32 %v1326, %v1436
        %v1509 = vsub.f32 %v1328, %v1473
        %v1510 = vsub.f32 %v1332, %v1436
        %v1511 = vsub.f32 %v1334, %v1473
        %v1512 = vsub.f32 %v1336, %v1436
        %v1513 = vsub.f32 %v1338, %v1473
        %v1514 = vsub.f32 %v1342, %v1436
        %v1515 = vsub.f32 %v1344, %v1473
        %v1516 = vsub.f32 %v1346, %v1436
        %v1517 = vsub.f32 %v1348, %v1473
        %v1518 = vsub.f32 %v1352, %v1436
        %v1519 = vsub.f32 %v1354, %v1473
        %v1520 = vsub.f32 %v1356, %v1436
        %v1521 = vsub.f32 %v1358, %v1473
        %v1522 = vsub.f32 %v1362, %v1436
        %v1523 = vsub.f32 %v1364, %v1473
        %v1524 = vsub.f32 %v1366, %v1436
        %v1525 = vsub.f32 %v1368, %v1473
        %v1526 = vsub.f32 %v1372, %v1436
        %v1527 = vsub.f32 %v1374, %v1473
        %v1528 = vsub.f32 %v1376, %v1436
        %v1529 = vsub.f32 %v1378, %v1473
        %v1530 = vsub.f32 %v1382, %v1436
        %v1531 = vsub.f32 %v1384, %v1473
        %v1532 = vsub.f32 %v1386, %v1436
        %v1533 = vsub.f32 %v1388, %v1473
        %v1534 = vsub.f32 %v1392, %v1436
        %v1535 = vsub.f32 %v1394, %v1473
        %v1536 = vsub.f32 %v1396, %v1436
        %v1537 = vsub.f32 %v1398, %v1473
        %v1538 = vpack.c.bf16 %v1476, %v1474
        %v1539 = vpack.c.bf16 %v1477, %v1475
        %v1540 = vpack.c.bf16 %v1480, %v1478
        %v1541 = vpack.c.bf16 %v1481, %v1479
        %v1542 = vpack.c.bf16 %v1484, %v1482
        %v1543 = vpack.c.bf16 %v1485, %v1483
        %v1544 = vpack.c.bf16 %v1488, %v1486
        %v1545 = vpack.c.bf16 %v1489, %v1487
        %v1546 = vpack.c.bf16 %v1492, %v1490
        %v1547 = vpack.c.bf16 %v1493, %v1491
        %v1548 = vpack.c.bf16 %v1496, %v1494
        %v1549 = vpack.c.bf16 %v1497, %v1495
        %v1550 = vpack.c.bf16 %v1500, %v1498
        %v1551 = vpack.c.bf16 %v1501, %v1499
        %v1552 = vpack.c.bf16 %v1504, %v1502
        %v1553 = vpack.c.bf16 %v1505, %v1503
        %v1554 = vpack.c.bf16 %v1508, %v1506
        %v1555 = vpack.c.bf16 %v1509, %v1507
        %v1556 = vpack.c.bf16 %v1512, %v1510
        %v1557 = vpack.c.bf16 %v1513, %v1511
        %v1558 = vpack.c.bf16 %v1516, %v1514
        %v1559 = vpack.c.bf16 %v1517, %v1515
        %v1560 = vpack.c.bf16 %v1520, %v1518
        %v1561 = vpack.c.bf16 %v1521, %v1519
        %v1562 = vpack.c.bf16 %v1524, %v1522
        %v1563 = vpack.c.bf16 %v1525, %v1523
        %v1564 = vpack.c.bf16 %v1528, %v1526
        %v1565 = vpack.c.bf16 %v1529, %v1527
        %v1566 = vpack.c.bf16 %v1532, %v1530
        %v1567 = vpack.c.bf16 %v1533, %v1531
        %v1568 = vpack.c.bf16 %v1536, %v1534
        %v1569 = vpack.c.bf16 %v1537, %v1535
        %v1570 = vpow.bf16.pop %v1538
        %v1571 = vpow.bf16.pop %v1539
        %v1572 = vpow.bf16.pop %v1540
        %v1573 = vpow.bf16.pop %v1541
        %v1574 = vpow.bf16.pop %v1542
        %v1575 = vpow.bf16.pop %v1543
        %v1576 = vpow.bf16.pop %v1544
        %v1577 = vpow.bf16.pop %v1545
        %v1578 = vpow.bf16.pop %v1546
        %v1579 = vpow.bf16.pop %v1547
        %v1580 = vpow.bf16.pop %v1548
        %v1581 = vpow.bf16.pop %v1549
        %v1582 = vpow.bf16.pop %v1550
        %v1583 = vpow.bf16.pop %v1551
        %v1584 = vpow.bf16.pop %v1552
        %v1585 = vpow.bf16.pop %v1553
        %v1586 = vpow.bf16.pop %v1554
        %v1587 = vpow.bf16.pop %v1555
        %v1588 = vpow.bf16.pop %v1556
        %v1589 = vpow.bf16.pop %v1557
        %v1590 = vpow.bf16.pop %v1558
        %v1591 = vpow.bf16.pop %v1559
        %v1592 = vpow.bf16.pop %v1560
        %v1593 = vpow.bf16.pop %v1561
        %v1594 = vpow.bf16.pop %v1562
        %v1595 = vpow.bf16.pop %v1563
        %v1596 = vpow.bf16.pop %v1564
        %v1597 = vpow.bf16.pop %v1565
        %v1598 = vpow.bf16.pop %v1566
        %v1599 = vpow.bf16.pop %v1567
        %v1600 = vpow.bf16.pop %v1568
        %v1601 = vpow.bf16.pop %v1569
        %1602 = vmatprep.subr.bf16.mxu0 %v1585
        %1603 = vmatpush1.bf16.msra.mxu0 %v1584
        %1604 = vmatprep.subr.bf16.mxu0 %v1583
        %1605 = vmatpush1.bf16.msra.mxu0 %v1582
        %1606 = vmatprep.subr.bf16.mxu0 %v1581
        %1607 = vmatpush1.bf16.msra.mxu0 %v1580
        %1608 = vmatprep.subr.bf16.mxu0 %v1579
        %1609 = vmatpush1.bf16.msra.mxu0 %v1578
        %1610 = vmatprep.subr.bf16.mxu0 %v1577
        %1611 = vmatpush1.bf16.msra.mxu0 %v1576
        %1612 = vmatprep.subr.bf16.mxu0 %v1575
        %1613 = vmatpush1.bf16.msra.mxu0 %v1574
        %1614 = vmatprep.subr.bf16.mxu0 %v1573
        %1615 = vmatpush1.bf16.msra.mxu0 %v1572
        %1616 = vmatprep.subr.bf16.mxu0 %v1571
        %1617 = vmatpush1.bf16.msra.mxu0 %v1570
        %1618 = vmatprep.subr.bf16.mxu0 %v1601
        %1619 = vmatpush2.bf16.msra.mxu0 %v1600
        %1620 = vmatprep.subr.bf16.mxu0 %v1599
        %1621 = vmatpush2.bf16.msra.mxu0 %v1598
        %1622 = vmatprep.subr.bf16.mxu0 %v1597
        %1623 = vmatpush2.bf16.msra.mxu0 %v1596
        %1624 = vmatprep.subr.bf16.mxu0 %v1595
        %1625 = vmatpush2.bf16.msra.mxu0 %v1594
        %1626 = vmatprep.subr.bf16.mxu0 %v1593
        %1627 = vmatpush2.bf16.msra.mxu0 %v1592
        %1628 = vmatprep.subr.bf16.mxu0 %v1591
        %1629 = vmatpush2.bf16.msra.mxu0 %v1590
        %1630 = vmatprep.subr.bf16.mxu0 %v1589
        %1631 = vmatpush2.bf16.msra.mxu0 %v1588
        %1632 = vmatprep.subr.bf16.mxu0 %v1587
        %1633 = vmatpush2.bf16.msra.mxu0 %v1586
        %1634 = vmatprep.mubr.bf16.mxu0 1065369472
        %1635 = vmatmul.mubr.bf16.gmra.mxu0 1065369472
        %v1636 = vpop.f32.mrf.mxu0
        %v1637 = vadd.f32 0.0, %v1636
        %v1638 = vpop.f32.mrf.mxu0
        %v1639 = vadd.f32 0.0, %v1638
        %v1640 = vpop.f32.mrf.mxu0
        %v1641 = vpop.f32.mrf.mxu0
        %1642 = vdwg.mxu0
        %v1647 = vunpack.c.l.b16 %v1082
        %v1648 = vunpack.c.h.b16 %v1082
        %v1649 = vunpack.c.l.b16 %v1083
        %v1650 = vunpack.c.h.b16 %v1083
        %v1651 = vunpack.c.l.b16 %v1084
        %v1652 = vunpack.c.h.b16 %v1084
        %v1653 = vunpack.c.l.b16 %v1085
        %v1654 = vunpack.c.h.b16 %v1085
        %v1655 = vpack.c.b16 %v1649, %v1647
        %v1656 = vpack.c.b16 %v1650, %v1648
        %v1657 = vpack.c.b16 %v1653, %v1651
        %v1658 = vpack.c.b16 %v1654, %v1652
        %1663 = vmatprep.subr.bf16.mxu0 %v1585
        %1664 = vmatpush1.bf16.msra.mxu0 %v1584
        %1665 = vmatprep.subr.bf16.mxu0 %v1583
        %1666 = vmatpush1.bf16.msra.mxu0 %v1582
        %1667 = vmatprep.subr.bf16.mxu0 %v1581
        %1668 = vmatpush1.bf16.msra.mxu0 %v1580
        %1669 = vmatprep.subr.bf16.mxu0 %v1579
        %1670 = vmatpush1.bf16.msra.mxu0 %v1578
        %1671 = vmatprep.subr.bf16.mxu0 %v1577
        %1672 = vmatpush1.bf16.msra.mxu0 %v1576
        %1673 = vmatprep.subr.bf16.mxu0 %v1575
        %1674 = vmatpush1.bf16.msra.mxu0 %v1574
        %1675 = vmatprep.subr.bf16.mxu0 %v1573
        %1676 = vmatpush1.bf16.msra.mxu0 %v1572
        %1677 = vmatprep.subr.bf16.mxu0 %v1571
        %1678 = vmatpush1.bf16.msra.mxu0 %v1570
        %1679 = vmatprep.subr.bf16.mxu0 %v1601
        %1680 = vmatpush2.bf16.msra.mxu0 %v1600
        %1681 = vmatprep.subr.bf16.mxu0 %v1599
        %1682 = vmatpush2.bf16.msra.mxu0 %v1598
        %1683 = vmatprep.subr.bf16.mxu0 %v1597
        %1684 = vmatpush2.bf16.msra.mxu0 %v1596
        %1685 = vmatprep.subr.bf16.mxu0 %v1595
        %1686 = vmatpush2.bf16.msra.mxu0 %v1594
        %1687 = vmatprep.subr.bf16.mxu0 %v1593
        %1688 = vmatpush2.bf16.msra.mxu0 %v1592
        %1689 = vmatprep.subr.bf16.mxu0 %v1591
        %1690 = vmatpush2.bf16.msra.mxu0 %v1590
        %1691 = vmatprep.subr.bf16.mxu0 %v1589
        %1692 = vmatpush2.bf16.msra.mxu0 %v1588
        %1693 = vmatprep.subr.bf16.mxu0 %v1587
        %1694 = vmatpush2.bf16.msra.mxu0 %v1586
        %1695 = vmatprep.mubr.bf16.mxu0 %v1656
        %1696 = vmatmul.mubr.bf16.gmra.mxu0 %v1655
        %v1697 = vpop.f32.mrf.mxu0
        %v1698 = vadd.f32 0.0, %v1697
        %v1699 = vpop.f32.mrf.mxu0
        %v1700 = vadd.f32 0.0, %v1699
        %v1701 = vpop.f32.mrf.mxu0
        %v1702 = vadd.f32 0.0, %v1701
        %v1703 = vpop.f32.mrf.mxu0
        %v1704 = vadd.f32 0.0, %v1703
        %1705 = vmatprep.mubr.bf16.mxu0 %v1658
        %1706 = vmatmul.mubr.bf16.gmra.mxu0 %v1657
        %v1707 = vpop.f32.mrf.mxu0
        %v1708 = vadd.f32 0.0, %v1707
        %v1709 = vpop.f32.mrf.mxu0
        %v1710 = vadd.f32 0.0, %v1709
        %v1711 = vpop.f32.mrf.mxu0
        %v1712 = vadd.f32 0.0, %v1711
        %v1713 = vpop.f32.mrf.mxu0
        %v1714 = vadd.f32 0.0, %v1713
        %1715 = vdwg.mxu0
        %v1716 = vrcp.pop %v1637
        %v1717 = vrcp.pop %v1639
        %v1718 = vlaneseq
        %v1719 = vshrl.u32 %v1718, 7
        %v1720 = vsub.s32 0, %v1719
        %v1721 = vrot.slane %v1716, %v1720
        %v1722 = vlaneseq
        %v1723 = vshrl.u32 %v1722, 7
        %v1724 = vsub.s32 0, %v1723
        %v1725 = vrot.slane %v1717, %v1724
        %v1726 = vmul.f32 %v1698, %v1721
        %v1727 = vmul.f32 %v1700, %v1725
        %v1728 = vmul.f32 %v1702, %v1721
        %v1729 = vmul.f32 %v1704, %v1725
        %v1730 = vmul.f32 %v1708, %v1721
        %v1731 = vmul.f32 %v1710, %v1725
        %v1732 = vmul.f32 %v1712, %v1721
        %v1733 = vmul.f32 %v1714, %v1725
        %v1734 = vpack.c.bf16 %v1728, %v1726
        %v1735 = vpack.c.bf16 %v1729, %v1727
        %v1736 = vpack.c.bf16 %v1732, %v1730
        %v1737 = vpack.c.bf16 %v1733, %v1731
        %v1742 = vunpack.c.l.b16 %v1734
        %v1743 = vunpack.c.l.b16 %v1735
        %v1744 = vunpack.c.h.b16 %v1734
        %v1745 = vunpack.c.h.b16 %v1735
        %v1746 = vunpack.c.l.b16 %v1736
        %v1747 = vunpack.c.l.b16 %v1737
        %v1748 = vunpack.c.h.b16 %v1736
        %v1749 = vunpack.c.h.b16 %v1737
        %v1750 = vpack.c.b16 %v1743, %v1742
        %v1751 = vpack.c.b16 %v1745, %v1744
        %v1752 = vpack.c.b16 %v1747, %v1746
        %v1753 = vpack.c.b16 %v1749, %v1748
        %s1758 = smul.addr %s1065, 4
        %s1759 = scalar_lea.vmem [#allocation3], %s1758
        %1760 = vst [vmem:[%s1759] sm:$0xff] %v1750
        %1761 = vst [vmem:[%s1759 + $0x8] sm:$0xff] %v1751
        %1762 = vst [vmem:[%s1759 + $0x10] sm:$0xff] %v1752
        %1763 = vst [vmem:[%s1759 + $0x18] sm:$0xff] %v1753
        %s1764 = smul.u32 4, 2
        %s1765 = smul.addr %s1764, 4
        %s1766 = scalar_lea.vmem [#allocation2], %s1765
        %v1767 = vld [vmem:[%s1766] sm:$0xff]
        %v1768 = vld [vmem:[%s1766 + $0x8] sm:$0xff]
        %v1769 = vld [vmem:[%s1766 + $0x10] sm:$0xff]
        %v1770 = vld [vmem:[%s1766 + $0x18] sm:$0xff]
        %s1771 = smul.u32 20, 2
        %s1772 = smul.addr %s1771, 4
        %s1773 = scalar_lea.vmem [#allocation2], %s1772
        %v1774 = vld [vmem:[%s1773] sm:$0xff]
        %v1775 = vld [vmem:[%s1773 + $0x8] sm:$0xff]
        %v1776 = vld [vmem:[%s1773 + $0x10] sm:$0xff]
        %v1777 = vld [vmem:[%s1773 + $0x18] sm:$0xff]
        %s1778 = smul.u32 36, 2
        %s1779 = smul.addr %s1778, 4
        %s1780 = scalar_lea.vmem [#allocation2], %s1779
        %v1781 = vld [vmem:[%s1780] sm:$0xff]
        %v1782 = vld [vmem:[%s1780 + $0x8] sm:$0xff]
        %v1783 = vld [vmem:[%s1780 + $0x10] sm:$0xff]
        %v1784 = vld [vmem:[%s1780 + $0x18] sm:$0xff]
        %v1789 = vunpack.c.l.b16 %v1774
        %v1790 = vunpack.c.h.b16 %v1774
        %v1791 = vunpack.c.l.b16 %v1775
        %v1792 = vunpack.c.h.b16 %v1775
        %v1793 = vunpack.c.l.b16 %v1776
        %v1794 = vunpack.c.h.b16 %v1776
        %v1795 = vunpack.c.l.b16 %v1777
        %v1796 = vunpack.c.h.b16 %v1777
        %v1797 = vpack.c.b16 %v1791, %v1789
        %v1798 = vpack.c.b16 %v1792, %v1790
        %v1799 = vpack.c.b16 %v1795, %v1793
        %v1800 = vpack.c.b16 %v1796, %v1794
        %1805 = vxpose.xlu0.c.b16.start [1/8] %v1797, 128
        %1806 = vxpose.xlu0.c.b16.cont [2/8] %v1799, 128
        %1807 = vxpose.xlu0.c.b16.cont [3/8] 0, 128
        %1808 = vxpose.xlu0.c.b16.cont [4/8] 0, 128
        %1809 = vxpose.xlu0.c.b16.cont [5/8] 0, 128
        %1810 = vxpose.xlu0.c.b16.cont [6/8] 0, 128
        %1811 = vxpose.xlu0.c.b16.cont [7/8] 0, 128
        %1812 = vxpose.xlu0.c.b16.end [8/8] 0, 128
        %v1813 = vpop.trf.xlu0
        %v1814 = vpop.trf.xlu0
        %v1815 = vpop.trf.xlu0
        %v1816 = vpop.trf.xlu0
        %v1817 = vpop.trf.xlu0
        %v1818 = vpop.trf.xlu0
        %v1819 = vpop.trf.xlu0
        %v1820 = vpop.trf.xlu0
        %1821 = vxpose.xlu0.c.b16.start [1/8] %v1798, 128
        %1822 = vxpose.xlu0.c.b16.cont [2/8] %v1800, 128
        %1823 = vxpose.xlu0.c.b16.cont [3/8] 0, 128
        %1824 = vxpose.xlu0.c.b16.cont [4/8] 0, 128
        %1825 = vxpose.xlu0.c.b16.cont [5/8] 0, 128
        %1826 = vxpose.xlu0.c.b16.cont [6/8] 0, 128
        %1827 = vxpose.xlu0.c.b16.cont [7/8] 0, 128
        %1828 = vxpose.xlu0.c.b16.end [8/8] 0, 128
        %v1829 = vpop.trf.xlu0
        %v1830 = vpop.trf.xlu0
        %v1831 = vpop.trf.xlu0
        %v1832 = vpop.trf.xlu0
        %v1833 = vpop.trf.xlu0
        %v1834 = vpop.trf.xlu0
        %v1835 = vpop.trf.xlu0
        %v1836 = vpop.trf.xlu0
        %v1841 = vunpack.c.l.b16 %v1767
        %v1842 = vunpack.c.h.b16 %v1767
        %v1843 = vunpack.c.l.b16 %v1768
        %v1844 = vunpack.c.h.b16 %v1768
        %v1845 = vunpack.c.l.b16 %v1769
        %v1846 = vunpack.c.h.b16 %v1769
        %v1847 = vunpack.c.l.b16 %v1770
        %v1848 = vunpack.c.h.b16 %v1770
        %v1849 = vpack.c.b16 %v1843, %v1841
        %v1850 = vpack.c.b16 %v1844, %v1842
        %v1851 = vpack.c.b16 %v1847, %v1845
        %v1852 = vpack.c.b16 %v1848, %v1846
        %v1858 = vsel %vm1158, %v1813, 0
        %v1861 = vsel %vm1158, %v1814, 0
        %v1864 = vsel %vm1158, %v1815, 0
        %v1867 = vsel %vm1158, %v1816, 0
        %v1870 = vsel %vm1158, %v1817, 0
        %v1873 = vsel %vm1158, %v1818, 0
        %v1876 = vsel %vm1158, %v1819, 0
        %v1879 = vsel %vm1158, %v1820, 0
        %v1882 = vsel %vm1158, %v1829, 0
        %v1885 = vsel %vm1158, %v1830, 0
        %v1888 = vsel %vm1158, %v1831, 0
        %v1891 = vsel %vm1158, %v1832, 0
        %v1894 = vsel %vm1158, %v1833, 0
        %v1897 = vsel %vm1158, %v1834, 0
        %v1900 = vsel %vm1158, %v1835, 0
        %v1903 = vsel %vm1158, %v1836, 0
        %1905 = vmatprep.subr.bf16.mxu0 0
        %1906 = vmatpush1.bf16.msra.mxu0 0
        %1907 = vmatprep.subr.bf16.mxu0 0
        %1908 = vmatpush1.bf16.msra.mxu0 0
        %1909 = vmatprep.subr.bf16.mxu0 0
        %1910 = vmatpush1.bf16.msra.mxu0 0
        %1911 = vmatprep.subr.bf16.mxu0 0
        %1912 = vmatpush1.bf16.msra.mxu0 0
        %1913 = vmatprep.subr.bf16.mxu0 0
        %1914 = vmatpush1.bf16.msra.mxu0 0
        %1915 = vmatprep.subr.bf16.mxu0 0
        %1916 = vmatpush1.bf16.msra.mxu0 0
        %1917 = vmatprep.subr.bf16.mxu0 %v1852
        %1918 = vmatpush1.bf16.msra.mxu0 %v1851
        %1919 = vmatprep.subr.bf16.mxu0 %v1850
        %1920 = vmatpush1.bf16.msra.mxu0 %v1849
        %1921 = vmatprep.subr.bf16.mxu0 0
        %1922 = vmatpush2.bf16.msra.mxu0 0
        %1923 = vmatprep.subr.bf16.mxu0 0
        %1924 = vmatpush2.bf16.msra.mxu0 0
        %1925 = vmatprep.subr.bf16.mxu0 0
        %1926 = vmatpush2.bf16.msra.mxu0 0
        %1927 = vmatprep.subr.bf16.mxu0 0
        %1928 = vmatpush2.bf16.msra.mxu0 0
        %1929 = vmatprep.subr.bf16.mxu0 0
        %1930 = vmatpush2.bf16.msra.mxu0 0
        %1931 = vmatprep.subr.bf16.mxu0 0
        %1932 = vmatpush2.bf16.msra.mxu0 0
        %1933 = vmatprep.subr.bf16.mxu0 0
        %1934 = vmatpush2.bf16.msra.mxu0 0
        %1935 = vmatprep.subr.bf16.mxu0 0
        %1936 = vmatpush2.bf16.msra.mxu0 0
        %1937 = vmatprep.mubr.bf16.mxu0 0
        %1938 = vmatmul.mubr.bf16.gmra.mxu0 %v1858
        %v1939 = vpop.f32.mrf.mxu0
        %v1940 = vadd.f32 0.0, %v1939
        %v1941 = vpop.f32.mrf.mxu0
        %v1942 = vadd.f32 0.0, %v1941
        %v1943 = vpop.f32.mrf.mxu0
        %v1944 = vadd.f32 0.0, %v1943
        %v1945 = vpop.f32.mrf.mxu0
        %v1946 = vadd.f32 0.0, %v1945
        %1947 = vmatprep.mubr.bf16.mxu0 0
        %1948 = vmatmul.mubr.bf16.gmra.mxu0 %v1861
        %v1949 = vpop.f32.mrf.mxu0
        %v1950 = vadd.f32 0.0, %v1949
        %v1951 = vpop.f32.mrf.mxu0
        %v1952 = vadd.f32 0.0, %v1951
        %v1953 = vpop.f32.mrf.mxu0
        %v1954 = vadd.f32 0.0, %v1953
        %v1955 = vpop.f32.mrf.mxu0
        %v1956 = vadd.f32 0.0, %v1955
        %1957 = vmatprep.mubr.bf16.mxu0 0
        %1958 = vmatmul.mubr.bf16.gmra.mxu0 %v1864
        %v1959 = vpop.f32.mrf.mxu0
        %v1960 = vadd.f32 0.0, %v1959
        %v1961 = vpop.f32.mrf.mxu0
        %v1962 = vadd.f32 0.0, %v1961
        %v1963 = vpop.f32.mrf.mxu0
        %v1964 = vadd.f32 0.0, %v1963
        %v1965 = vpop.f32.mrf.mxu0
        %v1966 = vadd.f32 0.0, %v1965
        %1967 = vmatprep.mubr.bf16.mxu0 0
        %1968 = vmatmul.mubr.bf16.gmra.mxu0 %v1867
        %v1969 = vpop.f32.mrf.mxu0
        %v1970 = vadd.f32 0.0, %v1969
        %v1971 = vpop.f32.mrf.mxu0
        %v1972 = vadd.f32 0.0, %v1971
        %v1973 = vpop.f32.mrf.mxu0
        %v1974 = vadd.f32 0.0, %v1973
        %v1975 = vpop.f32.mrf.mxu0
        %v1976 = vadd.f32 0.0, %v1975
        %1977 = vmatprep.mubr.bf16.mxu0 0
        %1978 = vmatmul.mubr.bf16.gmra.mxu0 %v1870
        %v1979 = vpop.f32.mrf.mxu0
        %v1980 = vadd.f32 0.0, %v1979
        %v1981 = vpop.f32.mrf.mxu0
        %v1982 = vadd.f32 0.0, %v1981
        %v1983 = vpop.f32.mrf.mxu0
        %v1984 = vadd.f32 0.0, %v1983
        %v1985 = vpop.f32.mrf.mxu0
        %v1986 = vadd.f32 0.0, %v1985
        %1987 = vmatprep.mubr.bf16.mxu0 0
        %1988 = vmatmul.mubr.bf16.gmra.mxu0 %v1873
        %v1989 = vpop.f32.mrf.mxu0
        %v1990 = vadd.f32 0.0, %v1989
        %v1991 = vpop.f32.mrf.mxu0
        %v1992 = vadd.f32 0.0, %v1991
        %v1993 = vpop.f32.mrf.mxu0
        %v1994 = vadd.f32 0.0, %v1993
        %v1995 = vpop.f32.mrf.mxu0
        %v1996 = vadd.f32 0.0, %v1995
        %1997 = vmatprep.mubr.bf16.mxu0 0
        %1998 = vmatmul.mubr.bf16.gmra.mxu0 %v1876
        %v1999 = vpop.f32.mrf.mxu0
        %v2000 = vadd.f32 0.0, %v1999
        %v2001 = vpop.f32.mrf.mxu0
        %v2002 = vadd.f32 0.0, %v2001
        %v2003 = vpop.f32.mrf.mxu0
        %v2004 = vadd.f32 0.0, %v2003
        %v2005 = vpop.f32.mrf.mxu0
        %v2006 = vadd.f32 0.0, %v2005
        %2007 = vmatprep.mubr.bf16.mxu0 0
        %2008 = vmatmul.mubr.bf16.gmra.mxu0 %v1879
        %v2009 = vpop.f32.mrf.mxu0
        %v2010 = vadd.f32 0.0, %v2009
        %v2011 = vpop.f32.mrf.mxu0
        %v2012 = vadd.f32 0.0, %v2011
        %v2013 = vpop.f32.mrf.mxu0
        %v2014 = vadd.f32 0.0, %v2013
        %v2015 = vpop.f32.mrf.mxu0
        %v2016 = vadd.f32 0.0, %v2015
        %2017 = vmatprep.mubr.bf16.mxu0 0
        %2018 = vmatmul.mubr.bf16.gmra.mxu0 %v1882
        %v2019 = vpop.f32.mrf.mxu0
        %v2020 = vadd.f32 0.0, %v2019
        %v2021 = vpop.f32.mrf.mxu0
        %v2022 = vadd.f32 0.0, %v2021
        %v2023 = vpop.f32.mrf.mxu0
        %v2024 = vadd.f32 0.0, %v2023
        %v2025 = vpop.f32.mrf.mxu0
        %v2026 = vadd.f32 0.0, %v2025
        %2027 = vmatprep.mubr.bf16.mxu0 0
        %2028 = vmatmul.mubr.bf16.gmra.mxu0 %v1885
        %v2029 = vpop.f32.mrf.mxu0
        %v2030 = vadd.f32 0.0, %v2029
        %v2031 = vpop.f32.mrf.mxu0
        %v2032 = vadd.f32 0.0, %v2031
        %v2033 = vpop.f32.mrf.mxu0
        %v2034 = vadd.f32 0.0, %v2033
        %v2035 = vpop.f32.mrf.mxu0
        %v2036 = vadd.f32 0.0, %v2035
        %2037 = vmatprep.mubr.bf16.mxu0 0
        %2038 = vmatmul.mubr.bf16.gmra.mxu0 %v1888
        %v2039 = vpop.f32.mrf.mxu0
        %v2040 = vadd.f32 0.0, %v2039
        %v2041 = vpop.f32.mrf.mxu0
        %v2042 = vadd.f32 0.0, %v2041
        %v2043 = vpop.f32.mrf.mxu0
        %v2044 = vadd.f32 0.0, %v2043
        %v2045 = vpop.f32.mrf.mxu0
        %v2046 = vadd.f32 0.0, %v2045
        %2047 = vmatprep.mubr.bf16.mxu0 0
        %2048 = vmatmul.mubr.bf16.gmra.mxu0 %v1891
        %v2049 = vpop.f32.mrf.mxu0
        %v2050 = vadd.f32 0.0, %v2049
        %v2051 = vpop.f32.mrf.mxu0
        %v2052 = vadd.f32 0.0, %v2051
        %v2053 = vpop.f32.mrf.mxu0
        %v2054 = vadd.f32 0.0, %v2053
        %v2055 = vpop.f32.mrf.mxu0
        %v2056 = vadd.f32 0.0, %v2055
        %2057 = vmatprep.mubr.bf16.mxu0 0
        %2058 = vmatmul.mubr.bf16.gmra.mxu0 %v1894
        %v2059 = vpop.f32.mrf.mxu0
        %v2060 = vadd.f32 0.0, %v2059
        %v2061 = vpop.f32.mrf.mxu0
        %v2062 = vadd.f32 0.0, %v2061
        %v2063 = vpop.f32.mrf.mxu0
        %v2064 = vadd.f32 0.0, %v2063
        %v2065 = vpop.f32.mrf.mxu0
        %v2066 = vadd.f32 0.0, %v2065
        %2067 = vmatprep.mubr.bf16.mxu0 0
        %2068 = vmatmul.mubr.bf16.gmra.mxu0 %v1897
        %v2069 = vpop.f32.mrf.mxu0
        %v2070 = vadd.f32 0.0, %v2069
        %v2071 = vpop.f32.mrf.mxu0
        %v2072 = vadd.f32 0.0, %v2071
        %v2073 = vpop.f32.mrf.mxu0
        %v2074 = vadd.f32 0.0, %v2073
        %v2075 = vpop.f32.mrf.mxu0
        %v2076 = vadd.f32 0.0, %v2075
        %2077 = vmatprep.mubr.bf16.mxu0 0
        %2078 = vmatmul.mubr.bf16.gmra.mxu0 %v1900
        %v2079 = vpop.f32.mrf.mxu0
        %v2080 = vadd.f32 0.0, %v2079
        %v2081 = vpop.f32.mrf.mxu0
        %v2082 = vadd.f32 0.0, %v2081
        %v2083 = vpop.f32.mrf.mxu0
        %v2084 = vadd.f32 0.0, %v2083
        %v2085 = vpop.f32.mrf.mxu0
        %v2086 = vadd.f32 0.0, %v2085
        %2087 = vmatprep.mubr.bf16.mxu0 0
        %2088 = vmatmul.mubr.bf16.gmra.mxu0 %v1903
        %v2089 = vpop.f32.mrf.mxu0
        %v2090 = vadd.f32 0.0, %v2089
        %v2091 = vpop.f32.mrf.mxu0
        %v2092 = vadd.f32 0.0, %v2091
        %v2093 = vpop.f32.mrf.mxu0
        %v2094 = vadd.f32 0.0, %v2093
        %v2095 = vpop.f32.mrf.mxu0
        %v2096 = vadd.f32 0.0, %v2095
        %2097 = vdwg.mxu0
        %v2098 = vmax.f32 %v1940, %v1950
        %v2099 = vmax.f32 %v1944, %v1954
        %v2100 = vmax.f32 %v2098, %v1960
        %v2101 = vmax.f32 %v2099, %v1964
        %v2102 = vmax.f32 %v2100, %v1970
        %v2103 = vmax.f32 %v2101, %v1974
        %v2104 = vmax.f32 %v2102, %v1980
        %v2105 = vmax.f32 %v2103, %v1984
        %v2106 = vmax.f32 %v2104, %v1990
        %v2107 = vmax.f32 %v2105, %v1994
        %v2108 = vmax.f32 %v2106, %v2000
        %v2109 = vmax.f32 %v2107, %v2004
        %v2110 = vmax.f32 %v2108, %v2010
        %v2111 = vmax.f32 %v2109, %v2014
        %v2112 = vmax.f32 %v2110, %v2020
        %v2113 = vmax.f32 %v2111, %v2024
        %v2114 = vmax.f32 %v2112, %v2030
        %v2115 = vmax.f32 %v2113, %v2034
        %v2116 = vmax.f32 %v2114, %v2040
        %v2117 = vmax.f32 %v2115, %v2044
        %v2118 = vmax.f32 %v2116, %v2050
        %v2119 = vmax.f32 %v2117, %v2054
        %v2120 = vmax.f32 %v2118, %v2060
        %v2121 = vmax.f32 %v2119, %v2064
        %v2122 = vmax.f32 %v2120, %v2070
        %v2123 = vmax.f32 %v2121, %v2074
        %v2124 = vmax.f32 %v2122, %v2080
        %v2125 = vmax.f32 %v2123, %v2084
        %v2126 = vmax.f32 %v2124, %v2090
        %v2127 = vmax.f32 %v2125, %v2094
        %v2128 = vmax.f32 %v2126, %v2127
        %v2129 = vrot.slane %v2128, 4
        %v2130 = vmax.f32 %v2128, %v2129
        %v2131 = vrot.slane %v2130, 2
        %v2132 = vmax.f32 %v2130, %v2131
        %v2133 = vrot.slane %v2132, 1
        %v2134 = vmax.f32 %v2132, %v2133
        %v2135 = vmax.f32 %v1942, %v1952
        %v2136 = vmax.f32 %v1946, %v1956
        %v2137 = vmax.f32 %v2135, %v1962
        %v2138 = vmax.f32 %v2136, %v1966
        %v2139 = vmax.f32 %v2137, %v1972
        %v2140 = vmax.f32 %v2138, %v1976
        %v2141 = vmax.f32 %v2139, %v1982
        %v2142 = vmax.f32 %v2140, %v1986
        %v2143 = vmax.f32 %v2141, %v1992
        %v2144 = vmax.f32 %v2142, %v1996
        %v2145 = vmax.f32 %v2143, %v2002
        %v2146 = vmax.f32 %v2144, %v2006
        %v2147 = vmax.f32 %v2145, %v2012
        %v2148 = vmax.f32 %v2146, %v2016
        %v2149 = vmax.f32 %v2147, %v2022
        %v2150 = vmax.f32 %v2148, %v2026
        %v2151 = vmax.f32 %v2149, %v2032
        %v2152 = vmax.f32 %v2150, %v2036
        %v2153 = vmax.f32 %v2151, %v2042
        %v2154 = vmax.f32 %v2152, %v2046
        %v2155 = vmax.f32 %v2153, %v2052
        %v2156 = vmax.f32 %v2154, %v2056
        %v2157 = vmax.f32 %v2155, %v2062
        %v2158 = vmax.f32 %v2156, %v2066
        %v2159 = vmax.f32 %v2157, %v2072
        %v2160 = vmax.f32 %v2158, %v2076
        %v2161 = vmax.f32 %v2159, %v2082
        %v2162 = vmax.f32 %v2160, %v2086
        %v2163 = vmax.f32 %v2161, %v2092
        %v2164 = vmax.f32 %v2162, %v2096
        %v2165 = vmax.f32 %v2163, %v2164
        %v2166 = vrot.slane %v2165, 4
        %v2167 = vmax.f32 %v2165, %v2166
        %v2168 = vrot.slane %v2167, 2
        %v2169 = vmax.f32 %v2167, %v2168
        %v2170 = vrot.slane %v2169, 1
        %v2171 = vmax.f32 %v2169, %v2170
        %v2172 = vsub.f32 %v1940, %v2134
        %v2173 = vsub.f32 %v1942, %v2171
        %v2174 = vsub.f32 %v1944, %v2134
        %v2175 = vsub.f32 %v1946, %v2171
        %v2176 = vsub.f32 %v1950, %v2134
        %v2177 = vsub.f32 %v1952, %v2171
        %v2178 = vsub.f32 %v1954, %v2134
        %v2179 = vsub.f32 %v1956, %v2171
        %v2180 = vsub.f32 %v1960, %v2134
        %v2181 = vsub.f32 %v1962, %v2171
        %v2182 = vsub.f32 %v1964, %v2134
        %v2183 = vsub.f32 %v1966, %v2171
        %v2184 = vsub.f32 %v1970, %v2134
        %v2185 = vsub.f32 %v1972, %v2171
        %v2186 = vsub.f32 %v1974, %v2134
        %v2187 = vsub.f32 %v1976, %v2171
        %v2188 = vsub.f32 %v1980, %v2134
        %v2189 = vsub.f32 %v1982, %v2171
        %v2190 = vsub.f32 %v1984, %v2134
        %v2191 = vsub.f32 %v1986, %v2171
        %v2192 = vsub.f32 %v1990, %v2134
        %v2193 = vsub.f32 %v1992, %v2171
        %v2194 = vsub.f32 %v1994, %v2134
        %v2195 = vsub.f32 %v1996, %v2171
        %v2196 = vsub.f32 %v2000, %v2134
        %v2197 = vsub.f32 %v2002, %v2171
        %v2198 = vsub.f32 %v2004, %v2134
        %v2199 = vsub.f32 %v2006, %v2171
        %v2200 = vsub.f32 %v2010, %v2134
        %v2201 = vsub.f32 %v2012, %v2171
        %v2202 = vsub.f32 %v2014, %v2134
        %v2203 = vsub.f32 %v2016, %v2171
        %v2204 = vsub.f32 %v2020, %v2134
        %v2205 = vsub.f32 %v2022, %v2171
        %v2206 = vsub.f32 %v2024, %v2134
        %v2207 = vsub.f32 %v2026, %v2171
        %v2208 = vsub.f32 %v2030, %v2134
        %v2209 = vsub.f32 %v2032, %v2171
        %v2210 = vsub.f32 %v2034, %v2134
        %v2211 = vsub.f32 %v2036, %v2171
        %v2212 = vsub.f32 %v2040, %v2134
        %v2213 = vsub.f32 %v2042, %v2171
        %v2214 = vsub.f32 %v2044, %v2134
        %v2215 = vsub.f32 %v2046, %v2171
        %v2216 = vsub.f32 %v2050, %v2134
        %v2217 = vsub.f32 %v2052, %v2171
        %v2218 = vsub.f32 %v2054, %v2134
        %v2219 = vsub.f32 %v2056, %v2171
        %v2220 = vsub.f32 %v2060, %v2134
        %v2221 = vsub.f32 %v2062, %v2171
        %v2222 = vsub.f32 %v2064, %v2134
        %v2223 = vsub.f32 %v2066, %v2171
        %v2224 = vsub.f32 %v2070, %v2134
        %v2225 = vsub.f32 %v2072, %v2171
        %v2226 = vsub.f32 %v2074, %v2134
        %v2227 = vsub.f32 %v2076, %v2171
        %v2228 = vsub.f32 %v2080, %v2134
        %v2229 = vsub.f32 %v2082, %v2171
        %v2230 = vsub.f32 %v2084, %v2134
        %v2231 = vsub.f32 %v2086, %v2171
        %v2232 = vsub.f32 %v2090, %v2134
        %v2233 = vsub.f32 %v2092, %v2171
        %v2234 = vsub.f32 %v2094, %v2134
        %v2235 = vsub.f32 %v2096, %v2171
        %v2236 = vpack.c.bf16 %v2174, %v2172
        %v2237 = vpack.c.bf16 %v2175, %v2173
        %v2238 = vpack.c.bf16 %v2178, %v2176
        %v2239 = vpack.c.bf16 %v2179, %v2177
        %v2240 = vpack.c.bf16 %v2182, %v2180
        %v2241 = vpack.c.bf16 %v2183, %v2181
        %v2242 = vpack.c.bf16 %v2186, %v2184
        %v2243 = vpack.c.bf16 %v2187, %v2185
        %v2244 = vpack.c.bf16 %v2190, %v2188
        %v2245 = vpack.c.bf16 %v2191, %v2189
        %v2246 = vpack.c.bf16 %v2194, %v2192
        %v2247 = vpack.c.bf16 %v2195, %v2193
        %v2248 = vpack.c.bf16 %v2198, %v2196
        %v2249 = vpack.c.bf16 %v2199, %v2197
        %v2250 = vpack.c.bf16 %v2202, %v2200
        %v2251 = vpack.c.bf16 %v2203, %v2201
        %v2252 = vpack.c.bf16 %v2206, %v2204
        %v2253 = vpack.c.bf16 %v2207, %v2205
        %v2254 = vpack.c.bf16 %v2210, %v2208
        %v2255 = vpack.c.bf16 %v2211, %v2209
        %v2256 = vpack.c.bf16 %v2214, %v2212
        %v2257 = vpack.c.bf16 %v2215, %v2213
        %v2258 = vpack.c.bf16 %v2218, %v2216
        %v2259 = vpack.c.bf16 %v2219, %v2217
        %v2260 = vpack.c.bf16 %v2222, %v2220
        %v2261 = vpack.c.bf16 %v2223, %v2221
        %v2262 = vpack.c.bf16 %v2226, %v2224
        %v2263 = vpack.c.bf16 %v2227, %v2225
        %v2264 = vpack.c.bf16 %v2230, %v2228
        %v2265 = vpack.c.bf16 %v2231, %v2229
        %v2266 = vpack.c.bf16 %v2234, %v2232
        %v2267 = vpack.c.bf16 %v2235, %v2233
        %v2268 = vpow.bf16.pop %v2236
        %v2269 = vpow.bf16.pop %v2237
        %v2270 = vpow.bf16.pop %v2238
        %v2271 = vpow.bf16.pop %v2239
        %v2272 = vpow.bf16.pop %v2240
        %v2273 = vpow.bf16.pop %v2241
        %v2274 = vpow.bf16.pop %v2242
        %v2275 = vpow.bf16.pop %v2243
        %v2276 = vpow.bf16.pop %v2244
        %v2277 = vpow.bf16.pop %v2245
        %v2278 = vpow.bf16.pop %v2246
        %v2279 = vpow.bf16.pop %v2247
        %v2280 = vpow.bf16.pop %v2248
        %v2281 = vpow.bf16.pop %v2249
        %v2282 = vpow.bf16.pop %v2250
        %v2283 = vpow.bf16.pop %v2251
        %v2284 = vpow.bf16.pop %v2252
        %v2285 = vpow.bf16.pop %v2253
        %v2286 = vpow.bf16.pop %v2254
        %v2287 = vpow.bf16.pop %v2255
        %v2288 = vpow.bf16.pop %v2256
        %v2289 = vpow.bf16.pop %v2257
        %v2290 = vpow.bf16.pop %v2258
        %v2291 = vpow.bf16.pop %v2259
        %v2292 = vpow.bf16.pop %v2260
        %v2293 = vpow.bf16.pop %v2261
        %v2294 = vpow.bf16.pop %v2262
        %v2295 = vpow.bf16.pop %v2263
        %v2296 = vpow.bf16.pop %v2264
        %v2297 = vpow.bf16.pop %v2265
        %v2298 = vpow.bf16.pop %v2266
        %v2299 = vpow.bf16.pop %v2267
        %2300 = vmatprep.subr.bf16.mxu0 %v2283
        %2301 = vmatpush1.bf16.msra.mxu0 %v2282
        %2302 = vmatprep.subr.bf16.mxu0 %v2281
        %2303 = vmatpush1.bf16.msra.mxu0 %v2280
        %2304 = vmatprep.subr.bf16.mxu0 %v2279
        %2305 = vmatpush1.bf16.msra.mxu0 %v2278
        %2306 = vmatprep.subr.bf16.mxu0 %v2277
        %2307 = vmatpush1.bf16.msra.mxu0 %v2276
        %2308 = vmatprep.subr.bf16.mxu0 %v2275
        %2309 = vmatpush1.bf16.msra.mxu0 %v2274
        %2310 = vmatprep.subr.bf16.mxu0 %v2273
        %2311 = vmatpush1.bf16.msra.mxu0 %v2272
        %2312 = vmatprep.subr.bf16.mxu0 %v2271
        %2313 = vmatpush1.bf16.msra.mxu0 %v2270
        %2314 = vmatprep.subr.bf16.mxu0 %v2269
        %2315 = vmatpush1.bf16.msra.mxu0 %v2268
        %2316 = vmatprep.subr.bf16.mxu0 %v2299
        %2317 = vmatpush2.bf16.msra.mxu0 %v2298
        %2318 = vmatprep.subr.bf16.mxu0 %v2297
        %2319 = vmatpush2.bf16.msra.mxu0 %v2296
        %2320 = vmatprep.subr.bf16.mxu0 %v2295
        %2321 = vmatpush2.bf16.msra.mxu0 %v2294
        %2322 = vmatprep.subr.bf16.mxu0 %v2293
        %2323 = vmatpush2.bf16.msra.mxu0 %v2292
        %2324 = vmatprep.subr.bf16.mxu0 %v2291
        %2325 = vmatpush2.bf16.msra.mxu0 %v2290
        %2326 = vmatprep.subr.bf16.mxu0 %v2289
        %2327 = vmatpush2.bf16.msra.mxu0 %v2288
        %2328 = vmatprep.subr.bf16.mxu0 %v2287
        %2329 = vmatpush2.bf16.msra.mxu0 %v2286
        %2330 = vmatprep.subr.bf16.mxu0 %v2285
        %2331 = vmatpush2.bf16.msra.mxu0 %v2284
        %2332 = vmatprep.mubr.bf16.mxu0 1065369472
        %2333 = vmatmul.mubr.bf16.gmra.mxu0 1065369472
        %v2334 = vpop.f32.mrf.mxu0
        %v2335 = vadd.f32 0.0, %v2334
        %v2336 = vpop.f32.mrf.mxu0
        %v2337 = vadd.f32 0.0, %v2336
        %v2338 = vpop.f32.mrf.mxu0
        %v2339 = vpop.f32.mrf.mxu0
        %2340 = vdwg.mxu0
        %v2345 = vunpack.c.l.b16 %v1781
        %v2346 = vunpack.c.h.b16 %v1781
        %v2347 = vunpack.c.l.b16 %v1782
        %v2348 = vunpack.c.h.b16 %v1782
        %v2349 = vunpack.c.l.b16 %v1783
        %v2350 = vunpack.c.h.b16 %v1783
        %v2351 = vunpack.c.l.b16 %v1784
        %v2352 = vunpack.c.h.b16 %v1784
        %v2353 = vpack.c.b16 %v2347, %v2345
        %v2354 = vpack.c.b16 %v2348, %v2346
        %v2355 = vpack.c.b16 %v2351, %v2349
        %v2356 = vpack.c.b16 %v2352, %v2350
        %2361 = vmatprep.subr.bf16.mxu0 %v2283
        %2362 = vmatpush1.bf16.msra.mxu0 %v2282
        %2363 = vmatprep.subr.bf16.mxu0 %v2281
        %2364 = vmatpush1.bf16.msra.mxu0 %v2280
        %2365 = vmatprep.subr.bf16.mxu0 %v2279
        %2366 = vmatpush1.bf16.msra.mxu0 %v2278
        %2367 = vmatprep.subr.bf16.mxu0 %v2277
        %2368 = vmatpush1.bf16.msra.mxu0 %v2276
        %2369 = vmatprep.subr.bf16.mxu0 %v2275
        %2370 = vmatpush1.bf16.msra.mxu0 %v2274
        %2371 = vmatprep.subr.bf16.mxu0 %v2273
        %2372 = vmatpush1.bf16.msra.mxu0 %v2272
        %2373 = vmatprep.subr.bf16.mxu0 %v2271
        %2374 = vmatpush1.bf16.msra.mxu0 %v2270
        %2375 = vmatprep.subr.bf16.mxu0 %v2269
        %2376 = vmatpush1.bf16.msra.mxu0 %v2268
        %2377 = vmatprep.subr.bf16.mxu0 %v2299
        %2378 = vmatpush2.bf16.msra.mxu0 %v2298
        %2379 = vmatprep.subr.bf16.mxu0 %v2297
        %2380 = vmatpush2.bf16.msra.mxu0 %v2296
        %2381 = vmatprep.subr.bf16.mxu0 %v2295
        %2382 = vmatpush2.bf16.msra.mxu0 %v2294
        %2383 = vmatprep.subr.bf16.mxu0 %v2293
        %2384 = vmatpush2.bf16.msra.mxu0 %v2292
        %2385 = vmatprep.subr.bf16.mxu0 %v2291
        %2386 = vmatpush2.bf16.msra.mxu0 %v2290
        %2387 = vmatprep.subr.bf16.mxu0 %v2289
        %2388 = vmatpush2.bf16.msra.mxu0 %v2288
        %2389 = vmatprep.subr.bf16.mxu0 %v2287
        %2390 = vmatpush2.bf16.msra.mxu0 %v2286
        %2391 = vmatprep.subr.bf16.mxu0 %v2285
        %2392 = vmatpush2.bf16.msra.mxu0 %v2284
        %2393 = vmatprep.mubr.bf16.mxu0 %v2354
        %2394 = vmatmul.mubr.bf16.gmra.mxu0 %v2353
        %v2395 = vpop.f32.mrf.mxu0
        %v2396 = vadd.f32 0.0, %v2395
        %v2397 = vpop.f32.mrf.mxu0
        %v2398 = vadd.f32 0.0, %v2397
        %v2399 = vpop.f32.mrf.mxu0
        %v2400 = vadd.f32 0.0, %v2399
        %v2401 = vpop.f32.mrf.mxu0
        %v2402 = vadd.f32 0.0, %v2401
        %2403 = vmatprep.mubr.bf16.mxu0 %v2356
        %2404 = vmatmul.mubr.bf16.gmra.mxu0 %v2355
        %v2405 = vpop.f32.mrf.mxu0
        %v2406 = vadd.f32 0.0, %v2405
        %v2407 = vpop.f32.mrf.mxu0
        %v2408 = vadd.f32 0.0, %v2407
        %v2409 = vpop.f32.mrf.mxu0
        %v2410 = vadd.f32 0.0, %v2409
        %v2411 = vpop.f32.mrf.mxu0
        %v2412 = vadd.f32 0.0, %v2411
        %2413 = vdwg.mxu0
        %v2414 = vrcp.pop %v2335
        %v2415 = vrcp.pop %v2337
        %v2416 = vlaneseq
        %v2417 = vshrl.u32 %v2416, 7
        %v2418 = vsub.s32 0, %v2417
        %v2419 = vrot.slane %v2414, %v2418
        %v2420 = vlaneseq
        %v2421 = vshrl.u32 %v2420, 7
        %v2422 = vsub.s32 0, %v2421
        %v2423 = vrot.slane %v2415, %v2422
        %v2424 = vmul.f32 %v2396, %v2419
        %v2425 = vmul.f32 %v2398, %v2423
        %v2426 = vmul.f32 %v2400, %v2419
        %v2427 = vmul.f32 %v2402, %v2423
        %v2428 = vmul.f32 %v2406, %v2419
        %v2429 = vmul.f32 %v2408, %v2423
        %v2430 = vmul.f32 %v2410, %v2419
        %v2431 = vmul.f32 %v2412, %v2423
        %v2432 = vpack.c.bf16 %v2426, %v2424
        %v2433 = vpack.c.bf16 %v2427, %v2425
        %v2434 = vpack.c.bf16 %v2430, %v2428
        %v2435 = vpack.c.bf16 %v2431, %v2429
        %v2440 = vunpack.c.l.b16 %v2432
        %v2441 = vunpack.c.l.b16 %v2433
        %v2442 = vunpack.c.h.b16 %v2432
        %v2443 = vunpack.c.h.b16 %v2433
        %v2444 = vunpack.c.l.b16 %v2434
        %v2445 = vunpack.c.l.b16 %v2435
        %v2446 = vunpack.c.h.b16 %v2434
        %v2447 = vunpack.c.h.b16 %v2435
        %v2448 = vpack.c.b16 %v2441, %v2440
        %v2449 = vpack.c.b16 %v2443, %v2442
        %v2450 = vpack.c.b16 %v2445, %v2444
        %v2451 = vpack.c.b16 %v2447, %v2446
        %s2456 = smul.addr %s1764, 4
        %s2457 = scalar_lea.vmem [#allocation3], %s2456
        %2458 = vst [vmem:[%s2457] sm:$0xff] %v2448
        %2459 = vst [vmem:[%s2457 + $0x8] sm:$0xff] %v2449
        %2460 = vst [vmem:[%s2457 + $0x10] sm:$0xff] %v2450
        %2461 = vst [vmem:[%s2457 + $0x18] sm:$0xff] %v2451
        %s2462 = smul.u32 8, 2
        %s2463 = smul.addr %s2462, 4
        %s2464 = scalar_lea.vmem [#allocation2], %s2463
        %v2465 = vld [vmem:[%s2464] sm:$0xff]
        %v2466 = vld [vmem:[%s2464 + $0x8] sm:$0xff]
        %v2467 = vld [vmem:[%s2464 + $0x10] sm:$0xff]
        %v2468 = vld [vmem:[%s2464 + $0x18] sm:$0xff]
        %s2469 = smul.u32 24, 2
        %s2470 = smul.addr %s2469, 4
        %s2471 = scalar_lea.vmem [#allocation2], %s2470
        %v2472 = vld [vmem:[%s2471] sm:$0xff]
        %v2473 = vld [vmem:[%s2471 + $0x8] sm:$0xff]
        %v2474 = vld [vmem:[%s2471 + $0x10] sm:$0xff]
        %v2475 = vld [vmem:[%s2471 + $0x18] sm:$0xff]
        %s2476 = smul.u32 40, 2
        %s2477 = smul.addr %s2476, 4
        %s2478 = scalar_lea.vmem [#allocation2], %s2477
        %v2479 = vld [vmem:[%s2478] sm:$0xff]
        %v2480 = vld [vmem:[%s2478 + $0x8] sm:$0xff]
        %v2481 = vld [vmem:[%s2478 + $0x10] sm:$0xff]
        %v2482 = vld [vmem:[%s2478 + $0x18] sm:$0xff]
        %v2487 = vunpack.c.l.b16 %v2472
        %v2488 = vunpack.c.h.b16 %v2472
        %v2489 = vunpack.c.l.b16 %v2473
        %v2490 = vunpack.c.h.b16 %v2473
        %v2491 = vunpack.c.l.b16 %v2474
        %v2492 = vunpack.c.h.b16 %v2474
        %v2493 = vunpack.c.l.b16 %v2475
        %v2494 = vunpack.c.h.b16 %v2475
        %v2495 = vpack.c.b16 %v2489, %v2487
        %v2496 = vpack.c.b16 %v2490, %v2488
        %v2497 = vpack.c.b16 %v2493, %v2491
        %v2498 = vpack.c.b16 %v2494, %v2492
        %2503 = vxpose.xlu0.c.b16.start [1/8] %v2495, 128
        %2504 = vxpose.xlu0.c.b16.cont [2/8] %v2497, 128
        %2505 = vxpose.xlu0.c.b16.cont [3/8] 0, 128
        %2506 = vxpose.xlu0.c.b16.cont [4/8] 0, 128
        %2507 = vxpose.xlu0.c.b16.cont [5/8] 0, 128
        %2508 = vxpose.xlu0.c.b16.cont [6/8] 0, 128
        %2509 = vxpose.xlu0.c.b16.cont [7/8] 0, 128
        %2510 = vxpose.xlu0.c.b16.end [8/8] 0, 128
        %v2511 = vpop.trf.xlu0
        %v2512 = vpop.trf.xlu0
        %v2513 = vpop.trf.xlu0
        %v2514 = vpop.trf.xlu0
        %v2515 = vpop.trf.xlu0
        %v2516 = vpop.trf.xlu0
        %v2517 = vpop.trf.xlu0
        %v2518 = vpop.trf.xlu0
        %2519 = vxpose.xlu0.c.b16.start [1/8] %v2496, 128
        %2520 = vxpose.xlu0.c.b16.cont [2/8] %v2498, 128
        %2521 = vxpose.xlu0.c.b16.cont [3/8] 0, 128
        %2522 = vxpose.xlu0.c.b16.cont [4/8] 0, 128
        %2523 = vxpose.xlu0.c.b16.cont [5/8] 0, 128
        %2524 = vxpose.xlu0.c.b16.cont [6/8] 0, 128
        %2525 = vxpose.xlu0.c.b16.cont [7/8] 0, 128
        %2526 = vxpose.xlu0.c.b16.end [8/8] 0, 128
        %v2527 = vpop.trf.xlu0
        %v2528 = vpop.trf.xlu0
        %v2529 = vpop.trf.xlu0
        %v2530 = vpop.trf.xlu0
        %v2531 = vpop.trf.xlu0
        %v2532 = vpop.trf.xlu0
        %v2533 = vpop.trf.xlu0
        %v2534 = vpop.trf.xlu0
        %v2539 = vunpack.c.l.b16 %v2465
        %v2540 = vunpack.c.h.b16 %v2465
        %v2541 = vunpack.c.l.b16 %v2466
        %v2542 = vunpack.c.h.b16 %v2466
        %v2543 = vunpack.c.l.b16 %v2467
        %v2544 = vunpack.c.h.b16 %v2467
        %v2545 = vunpack.c.l.b16 %v2468
        %v2546 = vunpack.c.h.b16 %v2468
        %v2547 = vpack.c.b16 %v2541, %v2539
        %v2548 = vpack.c.b16 %v2542, %v2540
        %v2549 = vpack.c.b16 %v2545, %v2543
        %v2550 = vpack.c.b16 %v2546, %v2544
        %v2556 = vsel %vm1158, %v2511, 0
        %v2559 = vsel %vm1158, %v2512, 0
        %v2562 = vsel %vm1158, %v2513, 0
        %v2565 = vsel %vm1158, %v2514, 0
        %v2568 = vsel %vm1158, %v2515, 0
        %v2571 = vsel %vm1158, %v2516, 0
        %v2574 = vsel %vm1158, %v2517, 0
        %v2577 = vsel %vm1158, %v2518, 0
        %v2580 = vsel %vm1158, %v2527, 0
        %v2583 = vsel %vm1158, %v2528, 0
        %v2586 = vsel %vm1158, %v2529, 0
        %v2589 = vsel %vm1158, %v2530, 0
        %v2592 = vsel %vm1158, %v2531, 0
        %v2595 = vsel %vm1158, %v2532, 0
        %v2598 = vsel %vm1158, %v2533, 0
        %v2601 = vsel %vm1158, %v2534, 0
        %2603 = vmatprep.subr.bf16.mxu0 0
        %2604 = vmatpush1.bf16.msra.mxu0 0
        %2605 = vmatprep.subr.bf16.mxu0 0
        %2606 = vmatpush1.bf16.msra.mxu0 0
        %2607 = vmatprep.subr.bf16.mxu0 0
        %2608 = vmatpush1.bf16.msra.mxu0 0
        %2609 = vmatprep.subr.bf16.mxu0 0
        %2610 = vmatpush1.bf16.msra.mxu0 0
        %2611 = vmatprep.subr.bf16.mxu0 0
        %2612 = vmatpush1.bf16.msra.mxu0 0
        %2613 = vmatprep.subr.bf16.mxu0 0
        %2614 = vmatpush1.bf16.msra.mxu0 0
        %2615 = vmatprep.subr.bf16.mxu0 %v2550
        %2616 = vmatpush1.bf16.msra.mxu0 %v2549
        %2617 = vmatprep.subr.bf16.mxu0 %v2548
        %2618 = vmatpush1.bf16.msra.mxu0 %v2547
        %2619 = vmatprep.subr.bf16.mxu0 0
        %2620 = vmatpush2.bf16.msra.mxu0 0
        %2621 = vmatprep.subr.bf16.mxu0 0
        %2622 = vmatpush2.bf16.msra.mxu0 0
        %2623 = vmatprep.subr.bf16.mxu0 0
        %2624 = vmatpush2.bf16.msra.mxu0 0
        %2625 = vmatprep.subr.bf16.mxu0 0
        %2626 = vmatpush2.bf16.msra.mxu0 0
        %2627 = vmatprep.subr.bf16.mxu0 0
        %2628 = vmatpush2.bf16.msra.mxu0 0
        %2629 = vmatprep.subr.bf16.mxu0 0
        %2630 = vmatpush2.bf16.msra.mxu0 0
        %2631 = vmatprep.subr.bf16.mxu0 0
        %2632 = vmatpush2.bf16.msra.mxu0 0
        %2633 = vmatprep.subr.bf16.mxu0 0
        %2634 = vmatpush2.bf16.msra.mxu0 0
        %2635 = vmatprep.mubr.bf16.mxu0 0
        %2636 = vmatmul.mubr.bf16.gmra.mxu0 %v2556
        %v2637 = vpop.f32.mrf.mxu0
        %v2638 = vadd.f32 0.0, %v2637
        %v2639 = vpop.f32.mrf.mxu0
        %v2640 = vadd.f32 0.0, %v2639
        %v2641 = vpop.f32.mrf.mxu0
        %v2642 = vadd.f32 0.0, %v2641
        %v2643 = vpop.f32.mrf.mxu0
        %v2644 = vadd.f32 0.0, %v2643
        %2645 = vmatprep.mubr.bf16.mxu0 0
        %2646 = vmatmul.mubr.bf16.gmra.mxu0 %v2559
        %v2647 = vpop.f32.mrf.mxu0
        %v2648 = vadd.f32 0.0, %v2647
        %v2649 = vpop.f32.mrf.mxu0
        %v2650 = vadd.f32 0.0, %v2649
        %v2651 = vpop.f32.mrf.mxu0
        %v2652 = vadd.f32 0.0, %v2651
        %v2653 = vpop.f32.mrf.mxu0
        %v2654 = vadd.f32 0.0, %v2653
        %2655 = vmatprep.mubr.bf16.mxu0 0
        %2656 = vmatmul.mubr.bf16.gmra.mxu0 %v2562
        %v2657 = vpop.f32.mrf.mxu0
        %v2658 = vadd.f32 0.0, %v2657
        %v2659 = vpop.f32.mrf.mxu0
        %v2660 = vadd.f32 0.0, %v2659
        %v2661 = vpop.f32.mrf.mxu0
        %v2662 = vadd.f32 0.0, %v2661
        %v2663 = vpop.f32.mrf.mxu0
        %v2664 = vadd.f32 0.0, %v2663
        %2665 = vmatprep.mubr.bf16.mxu0 0
        %2666 = vmatmul.mubr.bf16.gmra.mxu0 %v2565
        %v2667 = vpop.f32.mrf.mxu0
        %v2668 = vadd.f32 0.0, %v2667
        %v2669 = vpop.f32.mrf.mxu0
        %v2670 = vadd.f32 0.0, %v2669
        %v2671 = vpop.f32.mrf.mxu0
        %v2672 = vadd.f32 0.0, %v2671
        %v2673 = vpop.f32.mrf.mxu0
        %v2674 = vadd.f32 0.0, %v2673
        %2675 = vmatprep.mubr.bf16.mxu0 0
        %2676 = vmatmul.mubr.bf16.gmra.mxu0 %v2568
        %v2677 = vpop.f32.mrf.mxu0
        %v2678 = vadd.f32 0.0, %v2677
        %v2679 = vpop.f32.mrf.mxu0
        %v2680 = vadd.f32 0.0, %v2679
        %v2681 = vpop.f32.mrf.mxu0
        %v2682 = vadd.f32 0.0, %v2681
        %v2683 = vpop.f32.mrf.mxu0
        %v2684 = vadd.f32 0.0, %v2683
        %2685 = vmatprep.mubr.bf16.mxu0 0
        %2686 = vmatmul.mubr.bf16.gmra.mxu0 %v2571
        %v2687 = vpop.f32.mrf.mxu0
        %v2688 = vadd.f32 0.0, %v2687
        %v2689 = vpop.f32.mrf.mxu0
        %v2690 = vadd.f32 0.0, %v2689
        %v2691 = vpop.f32.mrf.mxu0
        %v2692 = vadd.f32 0.0, %v2691
        %v2693 = vpop.f32.mrf.mxu0
        %v2694 = vadd.f32 0.0, %v2693
        %2695 = vmatprep.mubr.bf16.mxu0 0
        %2696 = vmatmul.mubr.bf16.gmra.mxu0 %v2574
        %v2697 = vpop.f32.mrf.mxu0
        %v2698 = vadd.f32 0.0, %v2697
        %v2699 = vpop.f32.mrf.mxu0
        %v2700 = vadd.f32 0.0, %v2699
        %v2701 = vpop.f32.mrf.mxu0
        %v2702 = vadd.f32 0.0, %v2701
        %v2703 = vpop.f32.mrf.mxu0
        %v2704 = vadd.f32 0.0, %v2703
        %2705 = vmatprep.mubr.bf16.mxu0 0
        %2706 = vmatmul.mubr.bf16.gmra.mxu0 %v2577
        %v2707 = vpop.f32.mrf.mxu0
        %v2708 = vadd.f32 0.0, %v2707
        %v2709 = vpop.f32.mrf.mxu0
        %v2710 = vadd.f32 0.0, %v2709
        %v2711 = vpop.f32.mrf.mxu0
        %v2712 = vadd.f32 0.0, %v2711
        %v2713 = vpop.f32.mrf.mxu0
        %v2714 = vadd.f32 0.0, %v2713
        %2715 = vmatprep.mubr.bf16.mxu0 0
        %2716 = vmatmul.mubr.bf16.gmra.mxu0 %v2580
        %v2717 = vpop.f32.mrf.mxu0
        %v2718 = vadd.f32 0.0, %v2717
        %v2719 = vpop.f32.mrf.mxu0
        %v2720 = vadd.f32 0.0, %v2719
        %v2721 = vpop.f32.mrf.mxu0
        %v2722 = vadd.f32 0.0, %v2721
        %v2723 = vpop.f32.mrf.mxu0
        %v2724 = vadd.f32 0.0, %v2723
        %2725 = vmatprep.mubr.bf16.mxu0 0
        %2726 = vmatmul.mubr.bf16.gmra.mxu0 %v2583
        %v2727 = vpop.f32.mrf.mxu0
        %v2728 = vadd.f32 0.0, %v2727
        %v2729 = vpop.f32.mrf.mxu0
        %v2730 = vadd.f32 0.0, %v2729
        %v2731 = vpop.f32.mrf.mxu0
        %v2732 = vadd.f32 0.0, %v2731
        %v2733 = vpop.f32.mrf.mxu0
        %v2734 = vadd.f32 0.0, %v2733
        %2735 = vmatprep.mubr.bf16.mxu0 0
        %2736 = vmatmul.mubr.bf16.gmra.mxu0 %v2586
        %v2737 = vpop.f32.mrf.mxu0
        %v2738 = vadd.f32 0.0, %v2737
        %v2739 = vpop.f32.mrf.mxu0
        %v2740 = vadd.f32 0.0, %v2739
        %v2741 = vpop.f32.mrf.mxu0
        %v2742 = vadd.f32 0.0, %v2741
        %v2743 = vpop.f32.mrf.mxu0
        %v2744 = vadd.f32 0.0, %v2743
        %2745 = vmatprep.mubr.bf16.mxu0 0
        %2746 = vmatmul.mubr.bf16.gmra.mxu0 %v2589
        %v2747 = vpop.f32.mrf.mxu0
        %v2748 = vadd.f32 0.0, %v2747
        %v2749 = vpop.f32.mrf.mxu0
        %v2750 = vadd.f32 0.0, %v2749
        %v2751 = vpop.f32.mrf.mxu0
        %v2752 = vadd.f32 0.0, %v2751
        %v2753 = vpop.f32.mrf.mxu0
        %v2754 = vadd.f32 0.0, %v2753
        %2755 = vmatprep.mubr.bf16.mxu0 0
        %2756 = vmatmul.mubr.bf16.gmra.mxu0 %v2592
        %v2757 = vpop.f32.mrf.mxu0
        %v2758 = vadd.f32 0.0, %v2757
        %v2759 = vpop.f32.mrf.mxu0
        %v2760 = vadd.f32 0.0, %v2759
        %v2761 = vpop.f32.mrf.mxu0
        %v2762 = vadd.f32 0.0, %v2761
        %v2763 = vpop.f32.mrf.mxu0
        %v2764 = vadd.f32 0.0, %v2763
        %2765 = vmatprep.mubr.bf16.mxu0 0
        %2766 = vmatmul.mubr.bf16.gmra.mxu0 %v2595
        %v2767 = vpop.f32.mrf.mxu0
        %v2768 = vadd.f32 0.0, %v2767
        %v2769 = vpop.f32.mrf.mxu0
        %v2770 = vadd.f32 0.0, %v2769
        %v2771 = vpop.f32.mrf.mxu0
        %v2772 = vadd.f32 0.0, %v2771
        %v2773 = vpop.f32.mrf.mxu0
        %v2774 = vadd.f32 0.0, %v2773
        %2775 = vmatprep.mubr.bf16.mxu0 0
        %2776 = vmatmul.mubr.bf16.gmra.mxu0 %v2598
        %v2777 = vpop.f32.mrf.mxu0
        %v2778 = vadd.f32 0.0, %v2777
        %v2779 = vpop.f32.mrf.mxu0
        %v2780 = vadd.f32 0.0, %v2779
        %v2781 = vpop.f32.mrf.mxu0
        %v2782 = vadd.f32 0.0, %v2781
        %v2783 = vpop.f32.mrf.mxu0
        %v2784 = vadd.f32 0.0, %v2783
        %2785 = vmatprep.mubr.bf16.mxu0 0
        %2786 = vmatmul.mubr.bf16.gmra.mxu0 %v2601
        %v2787 = vpop.f32.mrf.mxu0
        %v2788 = vadd.f32 0.0, %v2787
        %v2789 = vpop.f32.mrf.mxu0
        %v2790 = vadd.f32 0.0, %v2789
        %v2791 = vpop.f32.mrf.mxu0
        %v2792 = vadd.f32 0.0, %v2791
        %v2793 = vpop.f32.mrf.mxu0
        %v2794 = vadd.f32 0.0, %v2793
        %2795 = vdwg.mxu0
        %v2796 = vmax.f32 %v2638, %v2648
        %v2797 = vmax.f32 %v2642, %v2652
        %v2798 = vmax.f32 %v2796, %v2658
        %v2799 = vmax.f32 %v2797, %v2662
        %v2800 = vmax.f32 %v2798, %v2668
        %v2801 = vmax.f32 %v2799, %v2672
        %v2802 = vmax.f32 %v2800, %v2678
        %v2803 = vmax.f32 %v2801, %v2682
        %v2804 = vmax.f32 %v2802, %v2688
        %v2805 = vmax.f32 %v2803, %v2692
        %v2806 = vmax.f32 %v2804, %v2698
        %v2807 = vmax.f32 %v2805, %v2702
        %v2808 = vmax.f32 %v2806, %v2708
        %v2809 = vmax.f32 %v2807, %v2712
        %v2810 = vmax.f32 %v2808, %v2718
        %v2811 = vmax.f32 %v2809, %v2722
        %v2812 = vmax.f32 %v2810, %v2728
        %v2813 = vmax.f32 %v2811, %v2732
        %v2814 = vmax.f32 %v2812, %v2738
        %v2815 = vmax.f32 %v2813, %v2742
        %v2816 = vmax.f32 %v2814, %v2748
        %v2817 = vmax.f32 %v2815, %v2752
        %v2818 = vmax.f32 %v2816, %v2758
        %v2819 = vmax.f32 %v2817, %v2762
        %v2820 = vmax.f32 %v2818, %v2768
        %v2821 = vmax.f32 %v2819, %v2772
        %v2822 = vmax.f32 %v2820, %v2778
        %v2823 = vmax.f32 %v2821, %v2782
        %v2824 = vmax.f32 %v2822, %v2788
        %v2825 = vmax.f32 %v2823, %v2792
        %v2826 = vmax.f32 %v2824, %v2825
        %v2827 = vrot.slane %v2826, 4
        %v2828 = vmax.f32 %v2826, %v2827
        %v2829 = vrot.slane %v2828, 2
        %v2830 = vmax.f32 %v2828, %v2829
        %v2831 = vrot.slane %v2830, 1
        %v2832 = vmax.f32 %v2830, %v2831
        %v2833 = vmax.f32 %v2640, %v2650
        %v2834 = vmax.f32 %v2644, %v2654
        %v2835 = vmax.f32 %v2833, %v2660
        %v2836 = vmax.f32 %v2834, %v2664
        %v2837 = vmax.f32 %v2835, %v2670
        %v2838 = vmax.f32 %v2836, %v2674
        %v2839 = vmax.f32 %v2837, %v2680
        %v2840 = vmax.f32 %v2838, %v2684
        %v2841 = vmax.f32 %v2839, %v2690
        %v2842 = vmax.f32 %v2840, %v2694
        %v2843 = vmax.f32 %v2841, %v2700
        %v2844 = vmax.f32 %v2842, %v2704
        %v2845 = vmax.f32 %v2843, %v2710
        %v2846 = vmax.f32 %v2844, %v2714
        %v2847 = vmax.f32 %v2845, %v2720
        %v2848 = vmax.f32 %v2846, %v2724
        %v2849 = vmax.f32 %v2847, %v2730
        %v2850 = vmax.f32 %v2848, %v2734
        %v2851 = vmax.f32 %v2849, %v2740
        %v2852 = vmax.f32 %v2850, %v2744
        %v2853 = vmax.f32 %v2851, %v2750
        %v2854 = vmax.f32 %v2852, %v2754
        %v2855 = vmax.f32 %v2853, %v2760
        %v2856 = vmax.f32 %v2854, %v2764
        %v2857 = vmax.f32 %v2855, %v2770
        %v2858 = vmax.f32 %v2856, %v2774
        %v2859 = vmax.f32 %v2857, %v2780
        %v2860 = vmax.f32 %v2858, %v2784
        %v2861 = vmax.f32 %v2859, %v2790
        %v2862 = vmax.f32 %v2860, %v2794
        %v2863 = vmax.f32 %v2861, %v2862
        %v2864 = vrot.slane %v2863, 4
        %v2865 = vmax.f32 %v2863, %v2864
        %v2866 = vrot.slane %v2865, 2
        %v2867 = vmax.f32 %v2865, %v2866
        %v2868 = vrot.slane %v2867, 1
        %v2869 = vmax.f32 %v2867, %v2868
        %v2870 = vsub.f32 %v2638, %v2832
        %v2871 = vsub.f32 %v2640, %v2869
        %v2872 = vsub.f32 %v2642, %v2832
        %v2873 = vsub.f32 %v2644, %v2869
        %v2874 = vsub.f32 %v2648, %v2832
        %v2875 = vsub.f32 %v2650, %v2869
        %v2876 = vsub.f32 %v2652, %v2832
        %v2877 = vsub.f32 %v2654, %v2869
        %v2878 = vsub.f32 %v2658, %v2832
        %v2879 = vsub.f32 %v2660, %v2869
        %v2880 = vsub.f32 %v2662, %v2832
        %v2881 = vsub.f32 %v2664, %v2869
        %v2882 = vsub.f32 %v2668, %v2832
        %v2883 = vsub.f32 %v2670, %v2869
        %v2884 = vsub.f32 %v2672, %v2832
        %v2885 = vsub.f32 %v2674, %v2869
        %v2886 = vsub.f32 %v2678, %v2832
        %v2887 = vsub.f32 %v2680, %v2869
        %v2888 = vsub.f32 %v2682, %v2832
        %v2889 = vsub.f32 %v2684, %v2869
        %v2890 = vsub.f32 %v2688, %v2832
        %v2891 = vsub.f32 %v2690, %v2869
        %v2892 = vsub.f32 %v2692, %v2832
        %v2893 = vsub.f32 %v2694, %v2869
        %v2894 = vsub.f32 %v2698, %v2832
        %v2895 = vsub.f32 %v2700, %v2869
        %v2896 = vsub.f32 %v2702, %v2832
        %v2897 = vsub.f32 %v2704, %v2869
        %v2898 = vsub.f32 %v2708, %v2832
        %v2899 = vsub.f32 %v2710, %v2869
        %v2900 = vsub.f32 %v2712, %v2832
        %v2901 = vsub.f32 %v2714, %v2869
        %v2902 = vsub.f32 %v2718, %v2832
        %v2903 = vsub.f32 %v2720, %v2869
        %v2904 = vsub.f32 %v2722, %v2832
        %v2905 = vsub.f32 %v2724, %v2869
        %v2906 = vsub.f32 %v2728, %v2832
        %v2907 = vsub.f32 %v2730, %v2869
        %v2908 = vsub.f32 %v2732, %v2832
        %v2909 = vsub.f32 %v2734, %v2869
        %v2910 = vsub.f32 %v2738, %v2832
        %v2911 = vsub.f32 %v2740, %v2869
        %v2912 = vsub.f32 %v2742, %v2832
        %v2913 = vsub.f32 %v2744, %v2869
        %v2914 = vsub.f32 %v2748, %v2832
        %v2915 = vsub.f32 %v2750, %v2869
        %v2916 = vsub.f32 %v2752, %v2832
        %v2917 = vsub.f32 %v2754, %v2869
        %v2918 = vsub.f32 %v2758, %v2832
        %v2919 = vsub.f32 %v2760, %v2869
        %v2920 = vsub.f32 %v2762, %v2832
        %v2921 = vsub.f32 %v2764, %v2869
        %v2922 = vsub.f32 %v2768, %v2832
        %v2923 = vsub.f32 %v2770, %v2869
        %v2924 = vsub.f32 %v2772, %v2832
        %v2925 = vsub.f32 %v2774, %v2869
        %v2926 = vsub.f32 %v2778, %v2832
        %v2927 = vsub.f32 %v2780, %v2869
        %v2928 = vsub.f32 %v2782, %v2832
        %v2929 = vsub.f32 %v2784, %v2869
        %v2930 = vsub.f32 %v2788, %v2832
        %v2931 = vsub.f32 %v2790, %v2869
        %v2932 = vsub.f32 %v2792, %v2832
        %v2933 = vsub.f32 %v2794, %v2869
        %v2934 = vpack.c.bf16 %v2872, %v2870
        %v2935 = vpack.c.bf16 %v2873, %v2871
        %v2936 = vpack.c.bf16 %v2876, %v2874
        %v2937 = vpack.c.bf16 %v2877, %v2875
        %v2938 = vpack.c.bf16 %v2880, %v2878
        %v2939 = vpack.c.bf16 %v2881, %v2879
        %v2940 = vpack.c.bf16 %v2884, %v2882
        %v2941 = vpack.c.bf16 %v2885, %v2883
        %v2942 = vpack.c.bf16 %v2888, %v2886
        %v2943 = vpack.c.bf16 %v2889, %v2887
        %v2944 = vpack.c.bf16 %v2892, %v2890
        %v2945 = vpack.c.bf16 %v2893, %v2891
        %v2946 = vpack.c.bf16 %v2896, %v2894
        %v2947 = vpack.c.bf16 %v2897, %v2895
        %v2948 = vpack.c.bf16 %v2900, %v2898
        %v2949 = vpack.c.bf16 %v2901, %v2899
        %v2950 = vpack.c.bf16 %v2904, %v2902
        %v2951 = vpack.c.bf16 %v2905, %v2903
        %v2952 = vpack.c.bf16 %v2908, %v2906
        %v2953 = vpack.c.bf16 %v2909, %v2907
        %v2954 = vpack.c.bf16 %v2912, %v2910
        %v2955 = vpack.c.bf16 %v2913, %v2911
        %v2956 = vpack.c.bf16 %v2916, %v2914
        %v2957 = vpack.c.bf16 %v2917, %v2915
        %v2958 = vpack.c.bf16 %v2920, %v2918
        %v2959 = vpack.c.bf16 %v2921, %v2919
        %v2960 = vpack.c.bf16 %v2924, %v2922
        %v2961 = vpack.c.bf16 %v2925, %v2923
        %v2962 = vpack.c.bf16 %v2928, %v2926
        %v2963 = vpack.c.bf16 %v2929, %v2927
        %v2964 = vpack.c.bf16 %v2932, %v2930
        %v2965 = vpack.c.bf16 %v2933, %v2931
        %v2966 = vpow.bf16.pop %v2934
        %v2967 = vpow.bf16.pop %v2935
        %v2968 = vpow.bf16.pop %v2936
        %v2969 = vpow.bf16.pop %v2937
        %v2970 = vpow.bf16.pop %v2938
        %v2971 = vpow.bf16.pop %v2939
        %v2972 = vpow.bf16.pop %v2940
        %v2973 = vpow.bf16.pop %v2941
        %v2974 = vpow.bf16.pop %v2942
        %v2975 = vpow.bf16.pop %v2943
        %v2976 = vpow.bf16.pop %v2944
        %v2977 = vpow.bf16.pop %v2945
        %v2978 = vpow.bf16.pop %v2946
        %v2979 = vpow.bf16.pop %v2947
        %v2980 = vpow.bf16.pop %v2948
        %v2981 = vpow.bf16.pop %v2949
        %v2982 = vpow.bf16.pop %v2950
        %v2983 = vpow.bf16.pop %v2951
        %v2984 = vpow.bf16.pop %v2952
        %v2985 = vpow.bf16.pop %v2953
        %v2986 = vpow.bf16.pop %v2954
        %v2987 = vpow.bf16.pop %v2955
        %v2988 = vpow.bf16.pop %v2956
        %v2989 = vpow.bf16.pop %v2957
        %v2990 = vpow.bf16.pop %v2958
        %v2991 = vpow.bf16.pop %v2959
        %v2992 = vpow.bf16.pop %v2960
        %v2993 = vpow.bf16.pop %v2961
        %v2994 = vpow.bf16.pop %v2962
        %v2995 = vpow.bf16.pop %v2963
        %v2996 = vpow.bf16.pop %v2964
        %v2997 = vpow.bf16.pop %v2965
        %2998 = vmatprep.subr.bf16.mxu0 %v2981
        %2999 = vmatpush1.bf16.msra.mxu0 %v2980
        %3000 = vmatprep.subr.bf16.mxu0 %v2979
        %3001 = vmatpush1.bf16.msra.mxu0 %v2978
        %3002 = vmatprep.subr.bf16.mxu0 %v2977
        %3003 = vmatpush1.bf16.msra.mxu0 %v2976
        %3004 = vmatprep.subr.bf16.mxu0 %v2975
        %3005 = vmatpush1.bf16.msra.mxu0 %v2974
        %3006 = vmatprep.subr.bf16.mxu0 %v2973
        %3007 = vmatpush1.bf16.msra.mxu0 %v2972
        %3008 = vmatprep.subr.bf16.mxu0 %v2971
        %3009 = vmatpush1.bf16.msra.mxu0 %v2970
        %3010 = vmatprep.subr.bf16.mxu0 %v2969
        %3011 = vmatpush1.bf16.msra.mxu0 %v2968
        %3012 = vmatprep.subr.bf16.mxu0 %v2967
        %3013 = vmatpush1.bf16.msra.mxu0 %v2966
        %3014 = vmatprep.subr.bf16.mxu0 %v2997
        %3015 = vmatpush2.bf16.msra.mxu0 %v2996
        %3016 = vmatprep.subr.bf16.mxu0 %v2995
        %3017 = vmatpush2.bf16.msra.mxu0 %v2994
        %3018 = vmatprep.subr.bf16.mxu0 %v2993
        %3019 = vmatpush2.bf16.msra.mxu0 %v2992
        %3020 = vmatprep.subr.bf16.mxu0 %v2991
        %3021 = vmatpush2.bf16.msra.mxu0 %v2990
        %3022 = vmatprep.subr.bf16.mxu0 %v2989
        %3023 = vmatpush2.bf16.msra.mxu0 %v2988
        %3024 = vmatprep.subr.bf16.mxu0 %v2987
        %3025 = vmatpush2.bf16.msra.mxu0 %v2986
        %3026 = vmatprep.subr.bf16.mxu0 %v2985
        %3027 = vmatpush2.bf16.msra.mxu0 %v2984
        %3028 = vmatprep.subr.bf16.mxu0 %v2983
        %3029 = vmatpush2.bf16.msra.mxu0 %v2982
        %3030 = vmatprep.mubr.bf16.mxu0 1065369472
        %3031 = vmatmul.mubr.bf16.gmra.mxu0 1065369472
        %v3032 = vpop.f32.mrf.mxu0
        %v3033 = vadd.f32 0.0, %v3032
        %v3034 = vpop.f32.mrf.mxu0
        %v3035 = vadd.f32 0.0, %v3034
        %v3036 = vpop.f32.mrf.mxu0
        %v3037 = vpop.f32.mrf.mxu0
        %3038 = vdwg.mxu0
        %v3043 = vunpack.c.l.b16 %v2479
        %v3044 = vunpack.c.h.b16 %v2479
        %v3045 = vunpack.c.l.b16 %v2480
        %v3046 = vunpack.c.h.b16 %v2480
        %v3047 = vunpack.c.l.b16 %v2481
        %v3048 = vunpack.c.h.b16 %v2481
        %v3049 = vunpack.c.l.b16 %v2482
        %v3050 = vunpack.c.h.b16 %v2482
        %v3051 = vpack.c.b16 %v3045, %v3043
        %v3052 = vpack.c.b16 %v3046, %v3044
        %v3053 = vpack.c.b16 %v3049, %v3047
        %v3054 = vpack.c.b16 %v3050, %v3048
        %3059 = vmatprep.subr.bf16.mxu0 %v2981
        %3060 = vmatpush1.bf16.msra.mxu0 %v2980
        %3061 = vmatprep.subr.bf16.mxu0 %v2979
        %3062 = vmatpush1.bf16.msra.mxu0 %v2978
        %3063 = vmatprep.subr.bf16.mxu0 %v2977
        %3064 = vmatpush1.bf16.msra.mxu0 %v2976
        %3065 = vmatprep.subr.bf16.mxu0 %v2975
        %3066 = vmatpush1.bf16.msra.mxu0 %v2974
        %3067 = vmatprep.subr.bf16.mxu0 %v2973
        %3068 = vmatpush1.bf16.msra.mxu0 %v2972
        %3069 = vmatprep.subr.bf16.mxu0 %v2971
        %3070 = vmatpush1.bf16.msra.mxu0 %v2970
        %3071 = vmatprep.subr.bf16.mxu0 %v2969
        %3072 = vmatpush1.bf16.msra.mxu0 %v2968
        %3073 = vmatprep.subr.bf16.mxu0 %v2967
        %3074 = vmatpush1.bf16.msra.mxu0 %v2966
        %3075 = vmatprep.subr.bf16.mxu0 %v2997
        %3076 = vmatpush2.bf16.msra.mxu0 %v2996
        %3077 = vmatprep.subr.bf16.mxu0 %v2995
        %3078 = vmatpush2.bf16.msra.mxu0 %v2994
        %3079 = vmatprep.subr.bf16.mxu0 %v2993
        %3080 = vmatpush2.bf16.msra.mxu0 %v2992
        %3081 = vmatprep.subr.bf16.mxu0 %v2991
        %3082 = vmatpush2.bf16.msra.mxu0 %v2990
        %3083 = vmatprep.subr.bf16.mxu0 %v2989
        %3084 = vmatpush2.bf16.msra.mxu0 %v2988
        %3085 = vmatprep.subr.bf16.mxu0 %v2987
        %3086 = vmatpush2.bf16.msra.mxu0 %v2986
        %3087 = vmatprep.subr.bf16.mxu0 %v2985
        %3088 = vmatpush2.bf16.msra.mxu0 %v2984
        %3089 = vmatprep.subr.bf16.mxu0 %v2983
        %3090 = vmatpush2.bf16.msra.mxu0 %v2982
        %3091 = vmatprep.mubr.bf16.mxu0 %v3052
        %3092 = vmatmul.mubr.bf16.gmra.mxu0 %v3051
        %v3093 = vpop.f32.mrf.mxu0
        %v3094 = vadd.f32 0.0, %v3093
        %v3095 = vpop.f32.mrf.mxu0
        %v3096 = vadd.f32 0.0, %v3095
        %v3097 = vpop.f32.mrf.mxu0
        %v3098 = vadd.f32 0.0, %v3097
        %v3099 = vpop.f32.mrf.mxu0
        %v3100 = vadd.f32 0.0, %v3099
        %3101 = vmatprep.mubr.bf16.mxu0 %v3054
        %3102 = vmatmul.mubr.bf16.gmra.mxu0 %v3053
        %v3103 = vpop.f32.mrf.mxu0
        %v3104 = vadd.f32 0.0, %v3103
        %v3105 = vpop.f32.mrf.mxu0
        %v3106 = vadd.f32 0.0, %v3105
        %v3107 = vpop.f32.mrf.mxu0
        %v3108 = vadd.f32 0.0, %v3107
        %v3109 = vpop.f32.mrf.mxu0
        %v3110 = vadd.f32 0.0, %v3109
        %3111 = vdwg.mxu0
        %v3112 = vrcp.pop %v3033
        %v3113 = vrcp.pop %v3035
        %v3114 = vlaneseq
        %v3115 = vshrl.u32 %v3114, 7
        %v3116 = vsub.s32 0, %v3115
        %v3117 = vrot.slane %v3112, %v3116
        %v3118 = vlaneseq
        %v3119 = vshrl.u32 %v3118, 7
        %v3120 = vsub.s32 0, %v3119
        %v3121 = vrot.slane %v3113, %v3120
        %v3122 = vmul.f32 %v3094, %v3117
        %v3123 = vmul.f32 %v3096, %v3121
        %v3124 = vmul.f32 %v3098, %v3117
        %v3125 = vmul.f32 %v3100, %v3121
        %v3126 = vmul.f32 %v3104, %v3117
        %v3127 = vmul.f32 %v3106, %v3121
        %v3128 = vmul.f32 %v3108, %v3117
        %v3129 = vmul.f32 %v3110, %v3121
        %v3130 = vpack.c.bf16 %v3124, %v3122
        %v3131 = vpack.c.bf16 %v3125, %v3123
        %v3132 = vpack.c.bf16 %v3128, %v3126
        %v3133 = vpack.c.bf16 %v3129, %v3127
        %v3138 = vunpack.c.l.b16 %v3130
        %v3139 = vunpack.c.l.b16 %v3131
        %v3140 = vunpack.c.h.b16 %v3130
        %v3141 = vunpack.c.h.b16 %v3131
        %v3142 = vunpack.c.l.b16 %v3132
        %v3143 = vunpack.c.l.b16 %v3133
        %v3144 = vunpack.c.h.b16 %v3132
        %v3145 = vunpack.c.h.b16 %v3133
        %v3146 = vpack.c.b16 %v3139, %v3138
        %v3147 = vpack.c.b16 %v3141, %v3140
        %v3148 = vpack.c.b16 %v3143, %v3142
        %v3149 = vpack.c.b16 %v3145, %v3144
        %s3154 = smul.addr %s2462, 4
        %s3155 = scalar_lea.vmem [#allocation3], %s3154
        %3156 = vst [vmem:[%s3155] sm:$0xff] %v3146
        %3157 = vst [vmem:[%s3155 + $0x8] sm:$0xff] %v3147
        %3158 = vst [vmem:[%s3155 + $0x10] sm:$0xff] %v3148
        %3159 = vst [vmem:[%s3155 + $0x18] sm:$0xff] %v3149
        %s3160 = smul.u32 12, 2
        %s3161 = smul.addr %s3160, 4
        %s3162 = scalar_lea.vmem [#allocation2], %s3161
        %v3163 = vld [vmem:[%s3162] sm:$0xff]
        %v3164 = vld [vmem:[%s3162 + $0x8] sm:$0xff]
        %v3165 = vld [vmem:[%s3162 + $0x10] sm:$0xff]
        %v3166 = vld [vmem:[%s3162 + $0x18] sm:$0xff]
        %s3167 = smul.u32 28, 2
        %s3168 = smul.addr %s3167, 4
        %s3169 = scalar_lea.vmem [#allocation2], %s3168
        %v3170 = vld [vmem:[%s3169] sm:$0xff]
        %v3171 = vld [vmem:[%s3169 + $0x8] sm:$0xff]
        %v3172 = vld [vmem:[%s3169 + $0x10] sm:$0xff]
        %v3173 = vld [vmem:[%s3169 + $0x18] sm:$0xff]
        %s3174 = smul.u32 44, 2
        %s3175 = smul.addr %s3174, 4
        %s3176 = scalar_lea.vmem [#allocation2], %s3175
        %v3177 = vld [vmem:[%s3176] sm:$0xff]
        %v3178 = vld [vmem:[%s3176 + $0x8] sm:$0xff]
        %v3179 = vld [vmem:[%s3176 + $0x10] sm:$0xff]
        %v3180 = vld [vmem:[%s3176 + $0x18] sm:$0xff]
        %v3185 = vunpack.c.l.b16 %v3170
        %v3186 = vunpack.c.h.b16 %v3170
        %v3187 = vunpack.c.l.b16 %v3171
        %v3188 = vunpack.c.h.b16 %v3171
        %v3189 = vunpack.c.l.b16 %v3172
        %v3190 = vunpack.c.h.b16 %v3172
        %v3191 = vunpack.c.l.b16 %v3173
        %v3192 = vunpack.c.h.b16 %v3173
        %v3193 = vpack.c.b16 %v3187, %v3185
        %v3194 = vpack.c.b16 %v3188, %v3186
        %v3195 = vpack.c.b16 %v3191, %v3189
        %v3196 = vpack.c.b16 %v3192, %v3190
        %3201 = vxpose.xlu0.c.b16.start [1/8] %v3193, 128
        %3202 = vxpose.xlu0.c.b16.cont [2/8] %v3195, 128
        %3203 = vxpose.xlu0.c.b16.cont [3/8] 0, 128
        %3204 = vxpose.xlu0.c.b16.cont [4/8] 0, 128
        %3205 = vxpose.xlu0.c.b16.cont [5/8] 0, 128
        %3206 = vxpose.xlu0.c.b16.cont [6/8] 0, 128
        %3207 = vxpose.xlu0.c.b16.cont [7/8] 0, 128
        %3208 = vxpose.xlu0.c.b16.end [8/8] 0, 128
        %v3209 = vpop.trf.xlu0
        %v3210 = vpop.trf.xlu0
        %v3211 = vpop.trf.xlu0
        %v3212 = vpop.trf.xlu0
        %v3213 = vpop.trf.xlu0
        %v3214 = vpop.trf.xlu0
        %v3215 = vpop.trf.xlu0
        %v3216 = vpop.trf.xlu0
        %3217 = vxpose.xlu0.c.b16.start [1/8] %v3194, 128
        %3218 = vxpose.xlu0.c.b16.cont [2/8] %v3196, 128
        %3219 = vxpose.xlu0.c.b16.cont [3/8] 0, 128
        %3220 = vxpose.xlu0.c.b16.cont [4/8] 0, 128
        %3221 = vxpose.xlu0.c.b16.cont [5/8] 0, 128
        %3222 = vxpose.xlu0.c.b16.cont [6/8] 0, 128
        %3223 = vxpose.xlu0.c.b16.cont [7/8] 0, 128
        %3224 = vxpose.xlu0.c.b16.end [8/8] 0, 128
        %v3225 = vpop.trf.xlu0
        %v3226 = vpop.trf.xlu0
        %v3227 = vpop.trf.xlu0
        %v3228 = vpop.trf.xlu0
        %v3229 = vpop.trf.xlu0
        %v3230 = vpop.trf.xlu0
        %v3231 = vpop.trf.xlu0
        %v3232 = vpop.trf.xlu0
        %v3237 = vunpack.c.l.b16 %v3163
        %v3238 = vunpack.c.h.b16 %v3163
        %v3239 = vunpack.c.l.b16 %v3164
        %v3240 = vunpack.c.h.b16 %v3164
        %v3241 = vunpack.c.l.b16 %v3165
        %v3242 = vunpack.c.h.b16 %v3165
        %v3243 = vunpack.c.l.b16 %v3166
        %v3244 = vunpack.c.h.b16 %v3166
        %v3245 = vpack.c.b16 %v3239, %v3237
        %v3246 = vpack.c.b16 %v3240, %v3238
        %v3247 = vpack.c.b16 %v3243, %v3241
        %v3248 = vpack.c.b16 %v3244, %v3242
        %v3254 = vsel %vm1158, %v3209, 0
        %v3257 = vsel %vm1158, %v3210, 0
        %v3260 = vsel %vm1158, %v3211, 0
        %v3263 = vsel %vm1158, %v3212, 0
        %v3266 = vsel %vm1158, %v3213, 0
        %v3269 = vsel %vm1158, %v3214, 0
        %v3272 = vsel %vm1158, %v3215, 0
        %v3275 = vsel %vm1158, %v3216, 0
        %v3278 = vsel %vm1158, %v3225, 0
        %v3281 = vsel %vm1158, %v3226, 0
        %v3284 = vsel %vm1158, %v3227, 0
        %v3287 = vsel %vm1158, %v3228, 0
        %v3290 = vsel %vm1158, %v3229, 0
        %v3293 = vsel %vm1158, %v3230, 0
        %v3296 = vsel %vm1158, %v3231, 0
        %v3299 = vsel %vm1158, %v3232, 0
        %3301 = vmatprep.subr.bf16.mxu0 0
        %3302 = vmatpush1.bf16.msra.mxu0 0
        %3303 = vmatprep.subr.bf16.mxu0 0
        %3304 = vmatpush1.bf16.msra.mxu0 0
        %3305 = vmatprep.subr.bf16.mxu0 0
        %3306 = vmatpush1.bf16.msra.mxu0 0
        %3307 = vmatprep.subr.bf16.mxu0 0
        %3308 = vmatpush1.bf16.msra.mxu0 0
        %3309 = vmatprep.subr.bf16.mxu0 0
        %3310 = vmatpush1.bf16.msra.mxu0 0
        %3311 = vmatprep.subr.bf16.mxu0 0
        %3312 = vmatpush1.bf16.msra.mxu0 0
        %3313 = vmatprep.subr.bf16.mxu0 %v3248
        %3314 = vmatpush1.bf16.msra.mxu0 %v3247
        %3315 = vmatprep.subr.bf16.mxu0 %v3246
        %3316 = vmatpush1.bf16.msra.mxu0 %v3245
        %3317 = vmatprep.subr.bf16.mxu0 0
        %3318 = vmatpush2.bf16.msra.mxu0 0
        %3319 = vmatprep.subr.bf16.mxu0 0
        %3320 = vmatpush2.bf16.msra.mxu0 0
        %3321 = vmatprep.subr.bf16.mxu0 0
        %3322 = vmatpush2.bf16.msra.mxu0 0
        %3323 = vmatprep.subr.bf16.mxu0 0
        %3324 = vmatpush2.bf16.msra.mxu0 0
        %3325 = vmatprep.subr.bf16.mxu0 0
        %3326 = vmatpush2.bf16.msra.mxu0 0
        %3327 = vmatprep.subr.bf16.mxu0 0
        %3328 = vmatpush2.bf16.msra.mxu0 0
        %3329 = vmatprep.subr.bf16.mxu0 0
        %3330 = vmatpush2.bf16.msra.mxu0 0
        %3331 = vmatprep.subr.bf16.mxu0 0
        %3332 = vmatpush2.bf16.msra.mxu0 0
        %3333 = vmatprep.mubr.bf16.mxu0 0
        %3334 = vmatmul.mubr.bf16.gmra.mxu0 %v3254
        %v3335 = vpop.f32.mrf.mxu0
        %v3336 = vadd.f32 0.0, %v3335
        %v3337 = vpop.f32.mrf.mxu0
        %v3338 = vadd.f32 0.0, %v3337
        %v3339 = vpop.f32.mrf.mxu0
        %v3340 = vadd.f32 0.0, %v3339
        %v3341 = vpop.f32.mrf.mxu0
        %v3342 = vadd.f32 0.0, %v3341
        %3343 = vmatprep.mubr.bf16.mxu0 0
        %3344 = vmatmul.mubr.bf16.gmra.mxu0 %v3257
        %v3345 = vpop.f32.mrf.mxu0
        %v3346 = vadd.f32 0.0, %v3345
        %v3347 = vpop.f32.mrf.mxu0
        %v3348 = vadd.f32 0.0, %v3347
        %v3349 = vpop.f32.mrf.mxu0
        %v3350 = vadd.f32 0.0, %v3349
        %v3351 = vpop.f32.mrf.mxu0
        %v3352 = vadd.f32 0.0, %v3351
        %3353 = vmatprep.mubr.bf16.mxu0 0
        %3354 = vmatmul.mubr.bf16.gmra.mxu0 %v3260
        %v3355 = vpop.f32.mrf.mxu0
        %v3356 = vadd.f32 0.0, %v3355
        %v3357 = vpop.f32.mrf.mxu0
        %v3358 = vadd.f32 0.0, %v3357
        %v3359 = vpop.f32.mrf.mxu0
        %v3360 = vadd.f32 0.0, %v3359
        %v3361 = vpop.f32.mrf.mxu0
        %v3362 = vadd.f32 0.0, %v3361
        %3363 = vmatprep.mubr.bf16.mxu0 0
        %3364 = vmatmul.mubr.bf16.gmra.mxu0 %v3263
        %v3365 = vpop.f32.mrf.mxu0
        %v3366 = vadd.f32 0.0, %v3365
        %v3367 = vpop.f32.mrf.mxu0
        %v3368 = vadd.f32 0.0, %v3367
        %v3369 = vpop.f32.mrf.mxu0
        %v3370 = vadd.f32 0.0, %v3369
        %v3371 = vpop.f32.mrf.mxu0
        %v3372 = vadd.f32 0.0, %v3371
        %3373 = vmatprep.mubr.bf16.mxu0 0
        %3374 = vmatmul.mubr.bf16.gmra.mxu0 %v3266
        %v3375 = vpop.f32.mrf.mxu0
        %v3376 = vadd.f32 0.0, %v3375
        %v3377 = vpop.f32.mrf.mxu0
        %v3378 = vadd.f32 0.0, %v3377
        %v3379 = vpop.f32.mrf.mxu0
        %v3380 = vadd.f32 0.0, %v3379
        %v3381 = vpop.f32.mrf.mxu0
        %v3382 = vadd.f32 0.0, %v3381
        %3383 = vmatprep.mubr.bf16.mxu0 0
        %3384 = vmatmul.mubr.bf16.gmra.mxu0 %v3269
        %v3385 = vpop.f32.mrf.mxu0
        %v3386 = vadd.f32 0.0, %v3385
        %v3387 = vpop.f32.mrf.mxu0
        %v3388 = vadd.f32 0.0, %v3387
        %v3389 = vpop.f32.mrf.mxu0
        %v3390 = vadd.f32 0.0, %v3389
        %v3391 = vpop.f32.mrf.mxu0
        %v3392 = vadd.f32 0.0, %v3391
        %3393 = vmatprep.mubr.bf16.mxu0 0
        %3394 = vmatmul.mubr.bf16.gmra.mxu0 %v3272
        %v3395 = vpop.f32.mrf.mxu0
        %v3396 = vadd.f32 0.0, %v3395
        %v3397 = vpop.f32.mrf.mxu0
        %v3398 = vadd.f32 0.0, %v3397
        %v3399 = vpop.f32.mrf.mxu0
        %v3400 = vadd.f32 0.0, %v3399
        %v3401 = vpop.f32.mrf.mxu0
        %v3402 = vadd.f32 0.0, %v3401
        %3403 = vmatprep.mubr.bf16.mxu0 0
        %3404 = vmatmul.mubr.bf16.gmra.mxu0 %v3275
        %v3405 = vpop.f32.mrf.mxu0
        %v3406 = vadd.f32 0.0, %v3405
        %v3407 = vpop.f32.mrf.mxu0
        %v3408 = vadd.f32 0.0, %v3407
        %v3409 = vpop.f32.mrf.mxu0
        %v3410 = vadd.f32 0.0, %v3409
        %v3411 = vpop.f32.mrf.mxu0
        %v3412 = vadd.f32 0.0, %v3411
        %3413 = vmatprep.mubr.bf16.mxu0 0
        %3414 = vmatmul.mubr.bf16.gmra.mxu0 %v3278
        %v3415 = vpop.f32.mrf.mxu0
        %v3416 = vadd.f32 0.0, %v3415
        %v3417 = vpop.f32.mrf.mxu0
        %v3418 = vadd.f32 0.0, %v3417
        %v3419 = vpop.f32.mrf.mxu0
        %v3420 = vadd.f32 0.0, %v3419
        %v3421 = vpop.f32.mrf.mxu0
        %v3422 = vadd.f32 0.0, %v3421
        %3423 = vmatprep.mubr.bf16.mxu0 0
        %3424 = vmatmul.mubr.bf16.gmra.mxu0 %v3281
        %v3425 = vpop.f32.mrf.mxu0
        %v3426 = vadd.f32 0.0, %v3425
        %v3427 = vpop.f32.mrf.mxu0
        %v3428 = vadd.f32 0.0, %v3427
        %v3429 = vpop.f32.mrf.mxu0
        %v3430 = vadd.f32 0.0, %v3429
        %v3431 = vpop.f32.mrf.mxu0
        %v3432 = vadd.f32 0.0, %v3431
        %3433 = vmatprep.mubr.bf16.mxu0 0
        %3434 = vmatmul.mubr.bf16.gmra.mxu0 %v3284
        %v3435 = vpop.f32.mrf.mxu0
        %v3436 = vadd.f32 0.0, %v3435
        %v3437 = vpop.f32.mrf.mxu0
        %v3438 = vadd.f32 0.0, %v3437
        %v3439 = vpop.f32.mrf.mxu0
        %v3440 = vadd.f32 0.0, %v3439
        %v3441 = vpop.f32.mrf.mxu0
        %v3442 = vadd.f32 0.0, %v3441
        %3443 = vmatprep.mubr.bf16.mxu0 0
        %3444 = vmatmul.mubr.bf16.gmra.mxu0 %v3287
        %v3445 = vpop.f32.mrf.mxu0
        %v3446 = vadd.f32 0.0, %v3445
        %v3447 = vpop.f32.mrf.mxu0
        %v3448 = vadd.f32 0.0, %v3447
        %v3449 = vpop.f32.mrf.mxu0
        %v3450 = vadd.f32 0.0, %v3449
        %v3451 = vpop.f32.mrf.mxu0
        %v3452 = vadd.f32 0.0, %v3451
        %3453 = vmatprep.mubr.bf16.mxu0 0
        %3454 = vmatmul.mubr.bf16.gmra.mxu0 %v3290
        %v3455 = vpop.f32.mrf.mxu0
        %v3456 = vadd.f32 0.0, %v3455
        %v3457 = vpop.f32.mrf.mxu0
        %v3458 = vadd.f32 0.0, %v3457
        %v3459 = vpop.f32.mrf.mxu0
        %v3460 = vadd.f32 0.0, %v3459
        %v3461 = vpop.f32.mrf.mxu0
        %v3462 = vadd.f32 0.0, %v3461
        %3463 = vmatprep.mubr.bf16.mxu0 0
        %3464 = vmatmul.mubr.bf16.gmra.mxu0 %v3293
        %v3465 = vpop.f32.mrf.mxu0
        %v3466 = vadd.f32 0.0, %v3465
        %v3467 = vpop.f32.mrf.mxu0
        %v3468 = vadd.f32 0.0, %v3467
        %v3469 = vpop.f32.mrf.mxu0
        %v3470 = vadd.f32 0.0, %v3469
        %v3471 = vpop.f32.mrf.mxu0
        %v3472 = vadd.f32 0.0, %v3471
        %3473 = vmatprep.mubr.bf16.mxu0 0
        %3474 = vmatmul.mubr.bf16.gmra.mxu0 %v3296
        %v3475 = vpop.f32.mrf.mxu0
        %v3476 = vadd.f32 0.0, %v3475
        %v3477 = vpop.f32.mrf.mxu0
        %v3478 = vadd.f32 0.0, %v3477
        %v3479 = vpop.f32.mrf.mxu0
        %v3480 = vadd.f32 0.0, %v3479
        %v3481 = vpop.f32.mrf.mxu0
        %v3482 = vadd.f32 0.0, %v3481
        %3483 = vmatprep.mubr.bf16.mxu0 0
        %3484 = vmatmul.mubr.bf16.gmra.mxu0 %v3299
        %v3485 = vpop.f32.mrf.mxu0
        %v3486 = vadd.f32 0.0, %v3485
        %v3487 = vpop.f32.mrf.mxu0
        %v3488 = vadd.f32 0.0, %v3487
        %v3489 = vpop.f32.mrf.mxu0
        %v3490 = vadd.f32 0.0, %v3489
        %v3491 = vpop.f32.mrf.mxu0
        %v3492 = vadd.f32 0.0, %v3491
        %3493 = vdwg.mxu0
        %v3494 = vmax.f32 %v3336, %v3346
        %v3495 = vmax.f32 %v3340, %v3350
        %v3496 = vmax.f32 %v3494, %v3356
        %v3497 = vmax.f32 %v3495, %v3360
        %v3498 = vmax.f32 %v3496, %v3366
        %v3499 = vmax.f32 %v3497, %v3370
        %v3500 = vmax.f32 %v3498, %v3376
        %v3501 = vmax.f32 %v3499, %v3380
        %v3502 = vmax.f32 %v3500, %v3386
        %v3503 = vmax.f32 %v3501, %v3390
        %v3504 = vmax.f32 %v3502, %v3396
        %v3505 = vmax.f32 %v3503, %v3400
        %v3506 = vmax.f32 %v3504, %v3406
        %v3507 = vmax.f32 %v3505, %v3410
        %v3508 = vmax.f32 %v3506, %v3416
        %v3509 = vmax.f32 %v3507, %v3420
        %v3510 = vmax.f32 %v3508, %v3426
        %v3511 = vmax.f32 %v3509, %v3430
        %v3512 = vmax.f32 %v3510, %v3436
        %v3513 = vmax.f32 %v3511, %v3440
        %v3514 = vmax.f32 %v3512, %v3446
        %v3515 = vmax.f32 %v3513, %v3450
        %v3516 = vmax.f32 %v3514, %v3456
        %v3517 = vmax.f32 %v3515, %v3460
        %v3518 = vmax.f32 %v3516, %v3466
        %v3519 = vmax.f32 %v3517, %v3470
        %v3520 = vmax.f32 %v3518, %v3476
        %v3521 = vmax.f32 %v3519, %v3480
        %v3522 = vmax.f32 %v3520, %v3486
        %v3523 = vmax.f32 %v3521, %v3490
        %v3524 = vmax.f32 %v3522, %v3523
        %v3525 = vrot.slane %v3524, 4
        %v3526 = vmax.f32 %v3524, %v3525
        %v3527 = vrot.slane %v3526, 2
        %v3528 = vmax.f32 %v3526, %v3527
        %v3529 = vrot.slane %v3528, 1
        %v3530 = vmax.f32 %v3528, %v3529
        %v3531 = vmax.f32 %v3338, %v3348
        %v3532 = vmax.f32 %v3342, %v3352
        %v3533 = vmax.f32 %v3531, %v3358
        %v3534 = vmax.f32 %v3532, %v3362
        %v3535 = vmax.f32 %v3533, %v3368
        %v3536 = vmax.f32 %v3534, %v3372
        %v3537 = vmax.f32 %v3535, %v3378
        %v3538 = vmax.f32 %v3536, %v3382
        %v3539 = vmax.f32 %v3537, %v3388
        %v3540 = vmax.f32 %v3538, %v3392
        %v3541 = vmax.f32 %v3539, %v3398
        %v3542 = vmax.f32 %v3540, %v3402
        %v3543 = vmax.f32 %v3541, %v3408
        %v3544 = vmax.f32 %v3542, %v3412
        %v3545 = vmax.f32 %v3543, %v3418
        %v3546 = vmax.f32 %v3544, %v3422
        %v3547 = vmax.f32 %v3545, %v3428
        %v3548 = vmax.f32 %v3546, %v3432
        %v3549 = vmax.f32 %v3547, %v3438
        %v3550 = vmax.f32 %v3548, %v3442
        %v3551 = vmax.f32 %v3549, %v3448
        %v3552 = vmax.f32 %v3550, %v3452
        %v3553 = vmax.f32 %v3551, %v3458
        %v3554 = vmax.f32 %v3552, %v3462
        %v3555 = vmax.f32 %v3553, %v3468
        %v3556 = vmax.f32 %v3554, %v3472
        %v3557 = vmax.f32 %v3555, %v3478
        %v3558 = vmax.f32 %v3556, %v3482
        %v3559 = vmax.f32 %v3557, %v3488
        %v3560 = vmax.f32 %v3558, %v3492
        %v3561 = vmax.f32 %v3559, %v3560
        %v3562 = vrot.slane %v3561, 4
        %v3563 = vmax.f32 %v3561, %v3562
        %v3564 = vrot.slane %v3563, 2
        %v3565 = vmax.f32 %v3563, %v3564
        %v3566 = vrot.slane %v3565, 1
        %v3567 = vmax.f32 %v3565, %v3566
        %v3568 = vsub.f32 %v3336, %v3530
        %v3569 = vsub.f32 %v3338, %v3567
        %v3570 = vsub.f32 %v3340, %v3530
        %v3571 = vsub.f32 %v3342, %v3567
        %v3572 = vsub.f32 %v3346, %v3530
        %v3573 = vsub.f32 %v3348, %v3567
        %v3574 = vsub.f32 %v3350, %v3530
        %v3575 = vsub.f32 %v3352, %v3567
        %v3576 = vsub.f32 %v3356, %v3530
        %v3577 = vsub.f32 %v3358, %v3567
        %v3578 = vsub.f32 %v3360, %v3530
        %v3579 = vsub.f32 %v3362, %v3567
        %v3580 = vsub.f32 %v3366, %v3530
        %v3581 = vsub.f32 %v3368, %v3567
        %v3582 = vsub.f32 %v3370, %v3530
        %v3583 = vsub.f32 %v3372, %v3567
        %v3584 = vsub.f32 %v3376, %v3530
        %v3585 = vsub.f32 %v3378, %v3567
        %v3586 = vsub.f32 %v3380, %v3530
        %v3587 = vsub.f32 %v3382, %v3567
        %v3588 = vsub.f32 %v3386, %v3530
        %v3589 = vsub.f32 %v3388, %v3567
        %v3590 = vsub.f32 %v3390, %v3530
        %v3591 = vsub.f32 %v3392, %v3567
        %v3592 = vsub.f32 %v3396, %v3530
        %v3593 = vsub.f32 %v3398, %v3567
        %v3594 = vsub.f32 %v3400, %v3530
        %v3595 = vsub.f32 %v3402, %v3567
        %v3596 = vsub.f32 %v3406, %v3530
        %v3597 = vsub.f32 %v3408, %v3567
        %v3598 = vsub.f32 %v3410, %v3530
        %v3599 = vsub.f32 %v3412, %v3567
        %v3600 = vsub.f32 %v3416, %v3530
        %v3601 = vsub.f32 %v3418, %v3567
        %v3602 = vsub.f32 %v3420, %v3530
        %v3603 = vsub.f32 %v3422, %v3567
        %v3604 = vsub.f32 %v3426, %v3530
        %v3605 = vsub.f32 %v3428, %v3567
        %v3606 = vsub.f32 %v3430, %v3530
        %v3607 = vsub.f32 %v3432, %v3567
        %v3608 = vsub.f32 %v3436, %v3530
        %v3609 = vsub.f32 %v3438, %v3567
        %v3610 = vsub.f32 %v3440, %v3530
        %v3611 = vsub.f32 %v3442, %v3567
        %v3612 = vsub.f32 %v3446, %v3530
        %v3613 = vsub.f32 %v3448, %v3567
        %v3614 = vsub.f32 %v3450, %v3530
        %v3615 = vsub.f32 %v3452, %v3567
        %v3616 = vsub.f32 %v3456, %v3530
        %v3617 = vsub.f32 %v3458, %v3567
        %v3618 = vsub.f32 %v3460, %v3530
        %v3619 = vsub.f32 %v3462, %v3567
        %v3620 = vsub.f32 %v3466, %v3530
        %v3621 = vsub.f32 %v3468, %v3567
        %v3622 = vsub.f32 %v3470, %v3530
        %v3623 = vsub.f32 %v3472, %v3567
        %v3624 = vsub.f32 %v3476, %v3530
        %v3625 = vsub.f32 %v3478, %v3567
        %v3626 = vsub.f32 %v3480, %v3530
        %v3627 = vsub.f32 %v3482, %v3567
        %v3628 = vsub.f32 %v3486, %v3530
        %v3629 = vsub.f32 %v3488, %v3567
        %v3630 = vsub.f32 %v3490, %v3530
        %v3631 = vsub.f32 %v3492, %v3567
        %v3632 = vpack.c.bf16 %v3570, %v3568
        %v3633 = vpack.c.bf16 %v3571, %v3569
        %v3634 = vpack.c.bf16 %v3574, %v3572
        %v3635 = vpack.c.bf16 %v3575, %v3573
        %v3636 = vpack.c.bf16 %v3578, %v3576
        %v3637 = vpack.c.bf16 %v3579, %v3577
        %v3638 = vpack.c.bf16 %v3582, %v3580
        %v3639 = vpack.c.bf16 %v3583, %v3581
        %v3640 = vpack.c.bf16 %v3586, %v3584
        %v3641 = vpack.c.bf16 %v3587, %v3585
        %v3642 = vpack.c.bf16 %v3590, %v3588
        %v3643 = vpack.c.bf16 %v3591, %v3589
        %v3644 = vpack.c.bf16 %v3594, %v3592
        %v3645 = vpack.c.bf16 %v3595, %v3593
        %v3646 = vpack.c.bf16 %v3598, %v3596
        %v3647 = vpack.c.bf16 %v3599, %v3597
        %v3648 = vpack.c.bf16 %v3602, %v3600
        %v3649 = vpack.c.bf16 %v3603, %v3601
        %v3650 = vpack.c.bf16 %v3606, %v3604
        %v3651 = vpack.c.bf16 %v3607, %v3605
        %v3652 = vpack.c.bf16 %v3610, %v3608
        %v3653 = vpack.c.bf16 %v3611, %v3609
        %v3654 = vpack.c.bf16 %v3614, %v3612
        %v3655 = vpack.c.bf16 %v3615, %v3613
        %v3656 = vpack.c.bf16 %v3618, %v3616
        %v3657 = vpack.c.bf16 %v3619, %v3617
        %v3658 = vpack.c.bf16 %v3622, %v3620
        %v3659 = vpack.c.bf16 %v3623, %v3621
        %v3660 = vpack.c.bf16 %v3626, %v3624
        %v3661 = vpack.c.bf16 %v3627, %v3625
        %v3662 = vpack.c.bf16 %v3630, %v3628
        %v3663 = vpack.c.bf16 %v3631, %v3629
        %v3664 = vpow.bf16.pop %v3632
        %v3665 = vpow.bf16.pop %v3633
        %v3666 = vpow.bf16.pop %v3634
        %v3667 = vpow.bf16.pop %v3635
        %v3668 = vpow.bf16.pop %v3636
        %v3669 = vpow.bf16.pop %v3637
        %v3670 = vpow.bf16.pop %v3638
        %v3671 = vpow.bf16.pop %v3639
        %v3672 = vpow.bf16.pop %v3640
        %v3673 = vpow.bf16.pop %v3641
        %v3674 = vpow.bf16.pop %v3642
        %v3675 = vpow.bf16.pop %v3643
        %v3676 = vpow.bf16.pop %v3644
        %v3677 = vpow.bf16.pop %v3645
        %v3678 = vpow.bf16.pop %v3646
        %v3679 = vpow.bf16.pop %v3647
        %v3680 = vpow.bf16.pop %v3648
        %v3681 = vpow.bf16.pop %v3649
        %v3682 = vpow.bf16.pop %v3650
        %v3683 = vpow.bf16.pop %v3651
        %v3684 = vpow.bf16.pop %v3652
        %v3685 = vpow.bf16.pop %v3653
        %v3686 = vpow.bf16.pop %v3654
        %v3687 = vpow.bf16.pop %v3655
        %v3688 = vpow.bf16.pop %v3656
        %v3689 = vpow.bf16.pop %v3657
        %v3690 = vpow.bf16.pop %v3658
        %v3691 = vpow.bf16.pop %v3659
        %v3692 = vpow.bf16.pop %v3660
        %v3693 = vpow.bf16.pop %v3661
        %v3694 = vpow.bf16.pop %v3662
        %v3695 = vpow.bf16.pop %v3663
        %3696 = vmatprep.subr.bf16.mxu0 %v3679
        %3697 = vmatpush1.bf16.msra.mxu0 %v3678
        %3698 = vmatprep.subr.bf16.mxu0 %v3677
        %3699 = vmatpush1.bf16.msra.mxu0 %v3676
        %3700 = vmatprep.subr.bf16.mxu0 %v3675
        %3701 = vmatpush1.bf16.msra.mxu0 %v3674
        %3702 = vmatprep.subr.bf16.mxu0 %v3673
        %3703 = vmatpush1.bf16.msra.mxu0 %v3672
        %3704 = vmatprep.subr.bf16.mxu0 %v3671
        %3705 = vmatpush1.bf16.msra.mxu0 %v3670
        %3706 = vmatprep.subr.bf16.mxu0 %v3669
        %3707 = vmatpush1.bf16.msra.mxu0 %v3668
        %3708 = vmatprep.subr.bf16.mxu0 %v3667
        %3709 = vmatpush1.bf16.msra.mxu0 %v3666
        %3710 = vmatprep.subr.bf16.mxu0 %v3665
        %3711 = vmatpush1.bf16.msra.mxu0 %v3664
        %3712 = vmatprep.subr.bf16.mxu0 %v3695
        %3713 = vmatpush2.bf16.msra.mxu0 %v3694
        %3714 = vmatprep.subr.bf16.mxu0 %v3693
        %3715 = vmatpush2.bf16.msra.mxu0 %v3692
        %3716 = vmatprep.subr.bf16.mxu0 %v3691
        %3717 = vmatpush2.bf16.msra.mxu0 %v3690
        %3718 = vmatprep.subr.bf16.mxu0 %v3689
        %3719 = vmatpush2.bf16.msra.mxu0 %v3688
        %3720 = vmatprep.subr.bf16.mxu0 %v3687
        %3721 = vmatpush2.bf16.msra.mxu0 %v3686
        %3722 = vmatprep.subr.bf16.mxu0 %v3685
        %3723 = vmatpush2.bf16.msra.mxu0 %v3684
        %3724 = vmatprep.subr.bf16.mxu0 %v3683
        %3725 = vmatpush2.bf16.msra.mxu0 %v3682
        %3726 = vmatprep.subr.bf16.mxu0 %v3681
        %3727 = vmatpush2.bf16.msra.mxu0 %v3680
        %3728 = vmatprep.mubr.bf16.mxu0 1065369472
        %3729 = vmatmul.mubr.bf16.gmra.mxu0 1065369472
        %v3730 = vpop.f32.mrf.mxu0
        %v3731 = vadd.f32 0.0, %v3730
        %v3732 = vpop.f32.mrf.mxu0
        %v3733 = vadd.f32 0.0, %v3732
        %v3734 = vpop.f32.mrf.mxu0
        %v3735 = vpop.f32.mrf.mxu0
        %3736 = vdwg.mxu0
        %v3741 = vunpack.c.l.b16 %v3177
        %v3742 = vunpack.c.h.b16 %v3177
        %v3743 = vunpack.c.l.b16 %v3178
        %v3744 = vunpack.c.h.b16 %v3178
        %v3745 = vunpack.c.l.b16 %v3179
        %v3746 = vunpack.c.h.b16 %v3179
        %v3747 = vunpack.c.l.b16 %v3180
        %v3748 = vunpack.c.h.b16 %v3180
        %v3749 = vpack.c.b16 %v3743, %v3741
        %v3750 = vpack.c.b16 %v3744, %v3742
        %v3751 = vpack.c.b16 %v3747, %v3745
        %v3752 = vpack.c.b16 %v3748, %v3746
        %3757 = vmatprep.subr.bf16.mxu0 %v3679
        %3758 = vmatpush1.bf16.msra.mxu0 %v3678
        %3759 = vmatprep.subr.bf16.mxu0 %v3677
        %3760 = vmatpush1.bf16.msra.mxu0 %v3676
        %3761 = vmatprep.subr.bf16.mxu0 %v3675
        %3762 = vmatpush1.bf16.msra.mxu0 %v3674
        %3763 = vmatprep.subr.bf16.mxu0 %v3673
        %3764 = vmatpush1.bf16.msra.mxu0 %v3672
        %3765 = vmatprep.subr.bf16.mxu0 %v3671
        %3766 = vmatpush1.bf16.msra.mxu0 %v3670
        %3767 = vmatprep.subr.bf16.mxu0 %v3669
        %3768 = vmatpush1.bf16.msra.mxu0 %v3668
        %3769 = vmatprep.subr.bf16.mxu0 %v3667
        %3770 = vmatpush1.bf16.msra.mxu0 %v3666
        %3771 = vmatprep.subr.bf16.mxu0 %v3665
        %3772 = vmatpush1.bf16.msra.mxu0 %v3664
        %3773 = vmatprep.subr.bf16.mxu0 %v3695
        %3774 = vmatpush2.bf16.msra.mxu0 %v3694
        %3775 = vmatprep.subr.bf16.mxu0 %v3693
        %3776 = vmatpush2.bf16.msra.mxu0 %v3692
        %3777 = vmatprep.subr.bf16.mxu0 %v3691
        %3778 = vmatpush2.bf16.msra.mxu0 %v3690
        %3779 = vmatprep.subr.bf16.mxu0 %v3689
        %3780 = vmatpush2.bf16.msra.mxu0 %v3688
        %3781 = vmatprep.subr.bf16.mxu0 %v3687
        %3782 = vmatpush2.bf16.msra.mxu0 %v3686
        %3783 = vmatprep.subr.bf16.mxu0 %v3685
        %3784 = vmatpush2.bf16.msra.mxu0 %v3684
        %3785 = vmatprep.subr.bf16.mxu0 %v3683
        %3786 = vmatpush2.bf16.msra.mxu0 %v3682
        %3787 = vmatprep.subr.bf16.mxu0 %v3681
        %3788 = vmatpush2.bf16.msra.mxu0 %v3680
        %3789 = vmatprep.mubr.bf16.mxu0 %v3750
        %3790 = vmatmul.mubr.bf16.gmra.mxu0 %v3749
        %v3791 = vpop.f32.mrf.mxu0
        %v3792 = vadd.f32 0.0, %v3791
        %v3793 = vpop.f32.mrf.mxu0
        %v3794 = vadd.f32 0.0, %v3793
        %v3795 = vpop.f32.mrf.mxu0
        %v3796 = vadd.f32 0.0, %v3795
        %v3797 = vpop.f32.mrf.mxu0
        %v3798 = vadd.f32 0.0, %v3797
        %3799 = vmatprep.mubr.bf16.mxu0 %v3752
        %3800 = vmatmul.mubr.bf16.gmra.mxu0 %v3751
        %v3801 = vpop.f32.mrf.mxu0
        %v3802 = vadd.f32 0.0, %v3801
        %v3803 = vpop.f32.mrf.mxu0
        %v3804 = vadd.f32 0.0, %v3803
        %v3805 = vpop.f32.mrf.mxu0
        %v3806 = vadd.f32 0.0, %v3805
        %v3807 = vpop.f32.mrf.mxu0
        %v3808 = vadd.f32 0.0, %v3807
        %3809 = vdwg.mxu0
        %v3810 = vrcp.pop %v3731
        %v3811 = vrcp.pop %v3733
        %v3812 = vlaneseq
        %v3813 = vshrl.u32 %v3812, 7
        %v3814 = vsub.s32 0, %v3813
        %v3815 = vrot.slane %v3810, %v3814
        %v3816 = vlaneseq
        %v3817 = vshrl.u32 %v3816, 7
        %v3818 = vsub.s32 0, %v3817
        %v3819 = vrot.slane %v3811, %v3818
        %v3820 = vmul.f32 %v3792, %v3815
        %v3821 = vmul.f32 %v3794, %v3819
        %v3822 = vmul.f32 %v3796, %v3815
        %v3823 = vmul.f32 %v3798, %v3819
        %v3824 = vmul.f32 %v3802, %v3815
        %v3825 = vmul.f32 %v3804, %v3819
        %v3826 = vmul.f32 %v3806, %v3815
        %v3827 = vmul.f32 %v3808, %v3819
        %v3828 = vpack.c.bf16 %v3822, %v3820
        %v3829 = vpack.c.bf16 %v3823, %v3821
        %v3830 = vpack.c.bf16 %v3826, %v3824
        %v3831 = vpack.c.bf16 %v3827, %v3825
        %v3836 = vunpack.c.l.b16 %v3828
        %v3837 = vunpack.c.l.b16 %v3829
        %v3838 = vunpack.c.h.b16 %v3828
        %v3839 = vunpack.c.h.b16 %v3829
        %v3840 = vunpack.c.l.b16 %v3830
        %v3841 = vunpack.c.l.b16 %v3831
        %v3842 = vunpack.c.h.b16 %v3830
        %v3843 = vunpack.c.h.b16 %v3831
        %v3844 = vpack.c.b16 %v3837, %v3836
        %v3845 = vpack.c.b16 %v3839, %v3838
        %v3846 = vpack.c.b16 %v3841, %v3840
        %v3847 = vpack.c.b16 %v3843, %v3842
        %s3852 = smul.addr %s3160, 4
        %s3853 = scalar_lea.vmem [#allocation3], %s3852
        %3854 = vst [vmem:[%s3853] sm:$0xff] %v3844
        %3855 = vst [vmem:[%s3853 + $0x8] sm:$0xff] %v3845
        %3856 = vst [vmem:[%s3853 + $0x10] sm:$0xff] %v3846
        %3857 = vst [vmem:[%s3853 + $0x18] sm:$0xff] %v3847
        %v3858 = vld [vmem:[%s2] sm:$0x3]
        %v3859 = vld [vmem:[#allocation3] sm:$0xff]
        %v3860 = vld [vmem:[#allocation3 + $0x8] sm:$0xff]
        %v3861 = vld [vmem:[#allocation3 + $0x10] sm:$0xff]
        %v3862 = vld [vmem:[#allocation3 + $0x18] sm:$0xff]
        %v3863 = vld [vmem:[#allocation3 + $0x20] sm:$0xff]
        %v3864 = vld [vmem:[#allocation3 + $0x28] sm:$0xff]
        %v3865 = vld [vmem:[#allocation3 + $0x30] sm:$0xff]
        %v3866 = vld [vmem:[#allocation3 + $0x38] sm:$0xff]
        %v3867 = vld [vmem:[#allocation3 + $0x40] sm:$0xff]
        %v3868 = vld [vmem:[#allocation3 + $0x48] sm:$0xff]
        %v3869 = vld [vmem:[#allocation3 + $0x50] sm:$0xff]
        %v3870 = vld [vmem:[#allocation3 + $0x58] sm:$0xff]
        %v3871 = vld [vmem:[#allocation3 + $0x60] sm:$0xff]
        %v3872 = vld [vmem:[#allocation3 + $0x68] sm:$0xff]
        %v3873 = vld [vmem:[#allocation3 + $0x70] sm:$0xff]
        %v3874 = vld [vmem:[#allocation3 + $0x78] sm:$0xff]
        %v3875 = vld [vmem:[%s3] sm:$0xf]
        %3877 = vset.pattern.permute.xlu0 0
        %3878 = vperm.xlu0 %3877, %v3875
        %v3879 = vpop.permute.xlu0 %3878
        %v3897 = vunpack.c.l.b16 %v3859
        %v3898 = vunpack.c.h.b16 %v3859
        %v3899 = vunpack.c.l.b16 %v3860
        %v3900 = vunpack.c.h.b16 %v3860
        %v3901 = vunpack.c.l.b16 %v3861
        %v3902 = vunpack.c.h.b16 %v3861
        %v3903 = vunpack.c.l.b16 %v3862
        %v3904 = vunpack.c.h.b16 %v3862
        %v3905 = vunpack.c.l.b16 %v3863
        %v3906 = vunpack.c.h.b16 %v3863
        %v3907 = vunpack.c.l.b16 %v3864
        %v3908 = vunpack.c.h.b16 %v3864
        %v3909 = vunpack.c.l.b16 %v3865
        %v3910 = vunpack.c.h.b16 %v3865
        %v3911 = vunpack.c.l.b16 %v3866
        %v3912 = vunpack.c.h.b16 %v3866
        %v3913 = vunpack.c.l.b16 %v3867
        %v3914 = vunpack.c.h.b16 %v3867
        %v3915 = vunpack.c.l.b16 %v3868
        %v3916 = vunpack.c.h.b16 %v3868
        %v3917 = vunpack.c.l.b16 %v3869
        %v3918 = vunpack.c.h.b16 %v3869
        %v3919 = vunpack.c.l.b16 %v3870
        %v3920 = vunpack.c.h.b16 %v3870
        %v3921 = vunpack.c.l.b16 %v3871
        %v3922 = vunpack.c.h.b16 %v3871
        %v3923 = vunpack.c.l.b16 %v3872
        %v3924 = vunpack.c.h.b16 %v3872
        %v3925 = vunpack.c.l.b16 %v3873
        %v3926 = vunpack.c.h.b16 %v3873
        %v3927 = vunpack.c.l.b16 %v3874
        %v3928 = vunpack.c.h.b16 %v3874
        %v3929 = vpack.c.b16 %v3899, %v3897
        %v3930 = vpack.c.b16 %v3900, %v3898
        %v3931 = vpack.c.b16 %v3903, %v3901
        %v3932 = vpack.c.b16 %v3904, %v3902
        %v3933 = vpack.c.b16 %v3907, %v3905
        %v3934 = vpack.c.b16 %v3908, %v3906
        %v3935 = vpack.c.b16 %v3911, %v3909
        %v3936 = vpack.c.b16 %v3912, %v3910
        %v3937 = vpack.c.b16 %v3915, %v3913
        %v3938 = vpack.c.b16 %v3916, %v3914
        %v3939 = vpack.c.b16 %v3919, %v3917
        %v3940 = vpack.c.b16 %v3920, %v3918
        %v3941 = vpack.c.b16 %v3923, %v3921
        %v3942 = vpack.c.b16 %v3924, %v3922
        %v3943 = vpack.c.b16 %v3927, %v3925
        %v3944 = vpack.c.b16 %v3928, %v3926
        %3961 = vmatprep.subr.bf16.mxu0 %v3944
        %3962 = vmatpush1.bf16.msra.mxu0 %v3943
        %3963 = vmatprep.subr.bf16.mxu0 %v3942
        %3964 = vmatpush1.bf16.msra.mxu0 %v3941
        %3965 = vmatprep.subr.bf16.mxu0 %v3940
        %3966 = vmatpush1.bf16.msra.mxu0 %v3939
        %3967 = vmatprep.subr.bf16.mxu0 %v3938
        %3968 = vmatpush1.bf16.msra.mxu0 %v3937
        %3969 = vmatprep.subr.bf16.mxu0 %v3936
        %3970 = vmatpush1.bf16.msra.mxu0 %v3935
        %3971 = vmatprep.subr.bf16.mxu0 %v3934
        %3972 = vmatpush1.bf16.msra.mxu0 %v3933
        %3973 = vmatprep.subr.bf16.mxu0 %v3932
        %3974 = vmatpush1.bf16.msra.mxu0 %v3931
        %3975 = vmatprep.subr.bf16.mxu0 %v3930
        %3976 = vmatpush1.bf16.msra.mxu0 %v3929
        %3977 = vmatprep.subr.bf16.mxu0 0
        %3978 = vmatpush2.bf16.msra.mxu0 0
        %3979 = vmatprep.subr.bf16.mxu0 0
        %3980 = vmatpush2.bf16.msra.mxu0 0
        %3981 = vmatprep.subr.bf16.mxu0 0
        %3982 = vmatpush2.bf16.msra.mxu0 0
        %3983 = vmatprep.subr.bf16.mxu0 0
        %3984 = vmatpush2.bf16.msra.mxu0 0
        %3985 = vmatprep.subr.bf16.mxu0 0
        %3986 = vmatpush2.bf16.msra.mxu0 0
        %3987 = vmatprep.subr.bf16.mxu0 0
        %3988 = vmatpush2.bf16.msra.mxu0 0
        %3989 = vmatprep.subr.bf16.mxu0 0
        %3990 = vmatpush2.bf16.msra.mxu0 0
        %3991 = vmatprep.subr.bf16.mxu0 0
        %3992 = vmatpush2.bf16.msra.mxu0 0
        %3993 = vmatprep.mubr.bf16.mxu0 0
        %3994 = vmatmul.mubr.bf16.gmra.mxu0 %v3858
        %v3995 = vpop.f32.mrf.mxu0
        %v3996 = vadd.f32 %v3879, %v3995
        %v3997 = vpop.f32.mrf.mxu0
        %v3998 = vadd.f32 %v3879, %v3997
        %v3999 = vpop.f32.mrf.mxu0
        %v4000 = vpop.f32.mrf.mxu0
        %4001 = vdwg.mxu0
        %v4004 = vcombine.low %v3996, %v3998
        %4006 = vst [vmem:[%s190] sm:$0xff] %v4004
        %s4007 = sand.u32 %s115, 1
        %s4008 = scalar_lea.sflag [#allocation5], %s4007
        %s4009 = sand.u32 %s115, 1
        %s4010 = smul.addr %s4009, 8
        %s4011 = scalar_lea.vmem [#allocation4], %s4010
        // Predicated region
        $region37: #{tpu_custom_call.1} parent=35 // pred_check
          %p4012 = pneg %p125
        $region38: #{tpu_custom_call.1} parent=35 // pred_check_branch
          %4014 = sbr.rel (%p4012) target = $region40
        $region39: #{tpu_custom_call.1} parent=35 // pred_region
          %s4016 = ssub.s32 128, 128
          %4017 = vsyncadd %s4008, %s4016
          %s4018 = smul.addr %s18, 2
          %s4019 = smul.addr %s4018, 64
          %s4020 = scalar_lea.hbm %s4, %s4019
          %s4022 = sshll.u32 %s4011, 4
          %s4023 = int_to_ptr.vmem [resolvable:$true] %s4022
          %4025 = dma.vmem_to_hbm [thread:$0]  %s4023, 128, %s4020, %s4008
        $region40: #{tpu_custom_call.1} parent=35 // pred_fallthru
          _
      $region36: #{tpu_custom_call.1} parent=5 // pred_fallthru
        _
      %p4026 = scmp.le.s32.totalorder 2, %s13
      // Predicated region
      $region41: #{tpu_custom_call.1} parent=5 // pred_check
        %p4027 = pneg %p4026
      $region42: #{tpu_custom_call.1} parent=5 // pred_check_branch
        %4029 = sbr.rel (%p4027) target = $region44
      $region43: #{tpu_custom_call.1} parent=5 // pred_region
        %s4030 = ssub.s32 %s13, 2
        // Predicated region
        $region45: #{tpu_custom_call.1} parent=43 // pred_check
          %p4031 = pneg %p131
        $region46: #{tpu_custom_call.1} parent=43 // pred_check_branch
          %4033 = sbr.rel (%p4031) target = $region48
        $region47: #{tpu_custom_call.1} parent=43 // pred_region
          %s4034 = sand.u32 %s116, 1
          %s4035 = scalar_lea.sflag [#allocation5], %s4034
          %s4036 = sand.u32 %s116, 1
          %s4037 = smul.addr %s4036, 8
          %s4038 = scalar_lea.vmem [#allocation4], %s4037
          %4039 = dma.done %s4035, 128
        $region48: #{tpu_custom_call.1} parent=43 // pred_fallthru
          _
      $region44: #{tpu_custom_call.1} parent=5 // pred_fallthru
        _
    $region6: #{tpu_custom_call.1} parent=1 // loop_footer
      %s17 = sadd.s32 1, %s13
    $region7: #{tpu_custom_call.1} parent=1 // loop_footer_branch
      %12 = sbr.rel target = $region3
    $region8: #{tpu_custom_call.1} parent=1 // loop_exit
      _
    %4040 = vsyncpa [#allocation5], 1
    %s4041 = scalar_lea.sflag [#allocation5], 1
    %4042 = vsyncpa %s4041, 1

</llo_original>
